<compile_context>
chip_gen: v7x
topology: tpu7x:2x2x1
jax: 0.10.0
libtpu: 0.0.40
codegen_flags: <defaults>
</compile_context>

<pallas_src>
import numpy as np
import jax
import jax.numpy as jnp
from jax.experimental import pallas as pl
from jax.experimental.pallas import tpu as pltpu

K = 9            # conv width (kernel_size=(1, 9))
PAD = K // 2     # padding (0, 4)
EPS = 1e-5       # BatchNorm2d default eps
LANE = 128       # TPU lane width
SUB_T = 16       # bf16 sublane pack; time tile kept a multiple of this


def _vmem_budget():
    """Return (tile budget bytes, vmem_limit cap bytes) for the current TPU generation."""
    cap = None
    try:
        cap = int(pltpu.get_tpu_info().vmem_capacity_bytes)
    except Exception:
        cap = None
    if cap is not None and cap > (64 << 20):
        return 48 << 20, 96 << 20     # v5e / v6e: 128 MiB physical VMEM
    # v7x (64 MiB physical) or unknown -> conservative sizing that fits everywhere.
    return 18 << 20, 44 << 20


def _choose_tile_rows(R, Wt, Cp, tile_rows, budget_bytes):
    """Largest row tile within the VMEM budget, keeping >= 4 grid steps for pipelining."""
    if tile_rows is not None:
        return int(tile_rows)
    Wpad = Wt + 2 * PAD
    per_row = (2 * Wt * Cp * 2        # input block (bf16), double-buffered
               + 2 * Wt * Cp * 4      # output block (f32), double-buffered
               + 2 * Wpad * Cp * 2    # two time-padded staging buffers (bf16)
               + 3 * Wt * Cp * 4)     # live f32 accumulator / BN intermediates
    max_tr = max(1, budget_bytes // per_row)
    tr = max(1, min(max_tr, pl.cdiv(R, 4)))   # >= 4 steps: v7x's 2 TCs each get >= 2 iters
    if tr > 8:
        tr = (tr // 8) * 8
    return min(tr, R)


def speech_basic_block(x, w1, w2, bn1, bn2, *, tile_rows=None):
    """x: (N, C, H, W) float32 (NCHW, like the PyTorch module). Returns (N, C, H, W) float32."""
    N, C, H, W = x.shape
    Cout = w1.shape[0]
    assert Cout == C, "residual path requires inplanes == planes when downsample is None"

    Cp = ((C + LANE - 1) // LANE) * LANE          # lane-dense channel padding
    Wt = ((W + SUB_T - 1) // SUB_T) * SUB_T       # sublane-aligned time tile
    Wpad = Wt + 2 * PAD
    R = N * H

    # ---- fold BN (eval / running-stats semantics) into per-channel scale/shift ----
    def fold(bn):
        gamma, beta, mean, var = bn
        scale = gamma / jnp.sqrt(var + EPS)
        shift = beta - mean * scale
        scale = jnp.pad(scale, (0, Cp - C)).reshape(1, Cp).astype(jnp.float32)
        shift = jnp.pad(shift, (0, Cp - C)).reshape(1, Cp).astype(jnp.float32)
        return scale, shift

    s1, b1 = fold(bn1)
    s2, b2 = fold(bn2)

    # ---- conv weights (Cout, Cin, 1, K) -> per-tap matrices (K, Cp, Cp), bf16 ----
    def prep_w(w):
        wk = jnp.transpose(w[:, :, 0, :], (2, 1, 0))                      # (K, Cin, Cout)
        wk = jnp.pad(wk, ((0, 0), (0, Cp - w.shape[1]), (0, Cp - w.shape[0])))
        return wk.astype(jnp.bfloat16)                                    # (K, Cp, Cp)

    w1_t = prep_w(w1)
    w2_t = prep_w(w2)

    budget, limit_cap = _vmem_budget()
    TR = _choose_tile_rows(R, Wt, Cp, tile_rows, budget)
    R_pad = pl.cdiv(R, TR) * TR

    # ---- activations: NCHW -> (R_pad, Wt, Cp) bf16 (rows/time/channels zero-padded) ----
    # TODO(synk): when stacking several of these blocks, keep activations in this
    # (R, Wt, Cp) bf16 layout between blocks instead of re-doing the NCHW transposes.
    x_rwc = jnp.transpose(x, (0, 2, 3, 1)).reshape(R, W, C)
    x_rwc = jnp.pad(x_rwc, ((0, R_pad - R), (0, Wt - W), (0, Cp - C))).astype(jnp.bfloat16)

    def kernel(x_ref, w1_ref, w2_ref, s1_ref, b1_ref, s2_ref, b2_ref,
               o_ref, xpad_buf, mid_buf):
        TRk, Wtk, Cpk = x_ref.shape
        zedge = jnp.zeros((TRk, PAD, Cpk), dtype=xpad_buf.dtype)

        # Stage the bf16 input into the time-padded buffer; zero the conv-padding edges
        # every step (cheap; stays correct when the parallel axis is split across TCs).
        xpad_buf[:, PAD:PAD + Wtk, :] = x_ref[...]
        xpad_buf[:, :PAD, :] = zedge
        xpad_buf[:, PAD + Wtk:, :] = zedge

        def conv_ktap(buf, w_ref):
            # K-tap accumulating matmul: one (TR*Wt, Cp) x (Cp, Cp) MXU dot per tap,
            # chained into a single f32 accumulator (no materialized im2col).
            acc = None
            for k in range(K):                                   # unrolled, K = 9 static
                tap = buf[:, k:k + Wtk, :].reshape(TRk * Wtk, Cpk)
                d = jnp.dot(tap, w_ref[k], preferred_element_type=jnp.float32)
                acc = d if acc is None else acc + d
            return acc

        # ---- conv1 -> bn1 (folded) -> relu, staged into the padded mid buffer ----
        acc1 = conv_ktap(xpad_buf, w1_ref)
        out1 = jnp.maximum(acc1 * s1_ref[...] + b1_ref[...], 0.0)
        mid_buf[:, PAD:PAD + Wtk, :] = out1.reshape(TRk, Wtk, Cpk).astype(mid_buf.dtype)
        # Zero conv-padding edges AND the wrapper's time-padding columns: bn1 shift + relu
        # makes conv1's output nonzero on padded time columns, which must not leak into conv2.
        mid_buf[:, :PAD, :] = zedge
        mid_buf[:, PAD + W:, :] = jnp.zeros((TRk, Wtk + PAD - W, Cpk), dtype=mid_buf.dtype)

        # ---- conv2 -> bn2 + residual add (downsample is None; no ReLU after the add) ----
        acc2 = conv_ktap(mid_buf, w2_ref)
        out2 = (acc2 * s2_ref[...] + b2_ref[...]).reshape(TRk, Wtk, Cpk)
        o_ref[...] = out2 + x_ref[...].astype(jnp.float32)   # residual from aligned x_ref

    # VMEM estimate: double-buffered in/out blocks + staging + f32 temporaries + weights/BN
    per_row = (2 * Wt * Cp * 2 + 2 * Wt * Cp * 4 + 2 * Wpad * Cp * 2 + 3 * Wt * Cp * 4)
    est = TR * per_row + 2 * 2 * K * Cp * Cp * 2 + 4 * 2 * Cp * 4
    vmem_limit = int(min(limit_cap, max(32 << 20, 2 * est)))

    cost = pl.CostEstimate(
        flops=4 * R_pad * Wt * K * Cp * Cp,                          # 2 convs x 2 flops/MAC
        transcendentals=0,
        bytes_accessed=R_pad * Wt * Cp * (2 + 4) + 2 * K * Cp * Cp * 2 + 4 * Cp * 4,
    )

    # NOTE: weight/BN inputs are grid-invariant; default double-buffering costs only ~0.6 MiB
    # (accounted for in `est`), so pipeline_mode tuning is intentionally left at the default.
    out = pl.pallas_call(
        kernel,
        out_shape=jax.ShapeDtypeStruct((R_pad, Wt, Cp), jnp.float32),
        grid_spec=pltpu.PrefetchScalarGridSpec(
            num_scalar_prefetch=0,
            grid=(R_pad // TR,),
            in_specs=[
                pl.BlockSpec((TR, Wt, Cp), lambda i: (i, 0, 0)),   # activations (single read)
                pl.BlockSpec((K, Cp, Cp), lambda i: (0, 0, 0)),    # conv1 per-tap weights
                pl.BlockSpec((K, Cp, Cp), lambda i: (0, 0, 0)),    # conv2 per-tap weights
                pl.BlockSpec((1, Cp), lambda i: (0, 0)),           # bn1 scale
                pl.BlockSpec((1, Cp), lambda i: (0, 0)),           # bn1 shift
                pl.BlockSpec((1, Cp), lambda i: (0, 0)),           # bn2 scale
                pl.BlockSpec((1, Cp), lambda i: (0, 0)),           # bn2 shift
            ],
            out_specs=pl.BlockSpec((TR, Wt, Cp), lambda i: (i, 0, 0)),
            scratch_shapes=[
                pltpu.VMEM((TR, Wpad, Cp), jnp.bfloat16),   # time-padded input staging
                pltpu.VMEM((TR, Wpad, Cp), jnp.bfloat16),   # time-padded bn1+relu output
            ],
        ),
        compiler_params=pltpu.CompilerParams(
            dimension_semantics=("parallel",),
            vmem_limit_bytes=vmem_limit,
        ),
        cost_estimate=cost,
    )(x_rwc, w1_t, w2_t, s1, b1, s2, b2)

    # (R_pad, Wt, Cp) -> drop row/time/channel padding -> (N, C, H, W)
    return jnp.transpose(out[:R, :W, :C].reshape(N, H, W, C), (0, 3, 1, 2))


def reference_block(x, w1, w2, bn1, bn2):
    """Pure-JAX f32 reference matching the PyTorch forward (eval-mode BN)."""
    def conv(z, w):
        return jax.lax.conv_general_dilated(
            z, w, window_strides=(1, 1), padding=((0, 0), (PAD, PAD)),
            dimension_numbers=('NCHW', 'OIHW', 'NCHW'))

    def bn(z, p):
        gamma, beta, mean, var = p
        inv = 1.0 / jnp.sqrt(var + EPS)
        return ((z - mean[None, :, None, None]) * inv[None, :, None, None]
                * gamma[None, :, None, None] + beta[None, :, None, None])

    out = jax.nn.relu(bn(conv(x, w1), bn1))
    out = bn(conv(out, w2), bn2)
    return out + x


if __name__ == "__main__":
    key = jax.random.PRNGKey(0)
    k1, k2, k3 = jax.random.split(key, 3)

    # small shapes consistent with the module: NCHW, inplanes == planes, stride=1
    N, C, H, W = 2, 4, 8, 16
    planes = C

    x = jax.random.normal(k1, (N, C, H, W), jnp.float32)
    w1 = jax.random.normal(k2, (planes, C, 1, K), jnp.float32) * 0.1       # conv1.weight
    w2 = jax.random.normal(k3, (planes, planes, 1, K), jnp.float32) * 0.1  # conv2.weight

    # deterministic, non-trivial BatchNorm params (gamma, beta, running_mean, running_var)
    def bn_params(c, off):
        gamma = 1.0 + 0.1 * jnp.arange(c, dtype=jnp.float32)
        beta = 0.05 * jnp.arange(c, dtype=jnp.float32) - off
        mean = 0.02 * jnp.arange(c, dtype=jnp.float32)
        var = 1.0 + 0.03 * jnp.arange(c, dtype=jnp.float32)
        return gamma, beta, mean, var

    bn1 = bn_params(planes, 0.1)
    bn2 = bn_params(planes, 0.2)

    out = speech_basic_block(x, w1, w2, bn1, bn2)
    out = jax.block_until_ready(out)

    ref = reference_block(x, w1, w2, bn1, bn2)
    # bf16 activations/weights with f32 accumulation -> slightly relaxed tolerance
    np.testing.assert_allclose(np.asarray(out), np.asarray(ref), rtol=2e-2, atol=3e-2)

    print("KERNEL_OK")
</pallas_src>

<mosaic_0001>
module attributes {stable_mosaic.version = 11 : i64} {
  func.func @kernel(%arg0: i32, %arg1: memref<4x16x128xbf16, #tpu.memory_space<vmem>>, %arg2: memref<9x128x128xbf16, #tpu.memory_space<vmem>>, %arg3: memref<9x128x128xbf16, #tpu.memory_space<vmem>>, %arg4: memref<1x128xf32, #tpu.memory_space<vmem>>, %arg5: memref<1x128xf32, #tpu.memory_space<vmem>>, %arg6: memref<1x128xf32, #tpu.memory_space<vmem>>, %arg7: memref<1x128xf32, #tpu.memory_space<vmem>>, %arg8: memref<4x16x128xf32, #tpu.memory_space<vmem>>, %arg9: memref<4x24x128xbf16, #tpu.memory_space<vmem>>, %arg10: memref<4x24x128xbf16, #tpu.memory_space<vmem>>) attributes {dimension_semantics = [#tpu.dimension_semantics<parallel>], iteration_bounds = array<i64: 4>, scalar_prefetch = 0 : i64, scratch_operands = 2 : i64, tpu.core_type = #tpu.core_type<tc>, window_params = [{transform_indices = @transform_0, window_bounds = array<i64: 4, 16, 128>}, {pipeline_mode = #tpu.pipeline_mode<synchronous>, transform_indices = @transform_1, window_bounds = array<i64: 9, 128, 128>}, {pipeline_mode = #tpu.pipeline_mode<synchronous>, transform_indices = @transform_2, window_bounds = array<i64: 9, 128, 128>}, {pipeline_mode = #tpu.pipeline_mode<synchronous>, transform_indices = @transform_3, window_bounds = array<i64: 1, 128>}, {pipeline_mode = #tpu.pipeline_mode<synchronous>, transform_indices = @transform_4, window_bounds = array<i64: 1, 128>}, {pipeline_mode = #tpu.pipeline_mode<synchronous>, transform_indices = @transform_5, window_bounds = array<i64: 1, 128>}, {pipeline_mode = #tpu.pipeline_mode<synchronous>, transform_indices = @transform_6, window_bounds = array<i64: 1, 128>}, {transform_indices = @transform_7, window_bounds = array<i64: 4, 16, 128>}]} {
    %cst = arith.constant 0.000000e+00 : bf16
    %0 = vector.broadcast %cst : bf16 to vector<4x4x128xbf16>
    %c0 = arith.constant 0 : index
    %c0_0 = arith.constant 0 : index
    %c0_1 = arith.constant 0 : index
    %1 = vector.load %arg1[%c0, %c0_0, %c0_1] : memref<4x16x128xbf16, #tpu.memory_space<vmem>>, vector<4x16x128xbf16>
    %c0_2 = arith.constant 0 : index
    %c4 = arith.constant 4 : index
    %c0_3 = arith.constant 0 : index
    %2 = vector.load %arg9[%c0_2, %c4, %c0_3] : memref<4x24x128xbf16, #tpu.memory_space<vmem>>, vector<4x16x128xbf16>
    tpu.vector_store %arg9[%c0_2, %c4, %c0_3], %1 {strides = array<i32>} : memref<4x24x128xbf16, #tpu.memory_space<vmem>>, vector<4x16x128xbf16>,
    %c0_4 = arith.constant 0 : index
    %c0_5 = arith.constant 0 : index
    %c0_6 = arith.constant 0 : index
    %3 = vector.load %arg9[%c0_4, %c0_5, %c0_6] : memref<4x24x128xbf16, #tpu.memory_space<vmem>>, vector<4x4x128xbf16>
    tpu.vector_store %arg9[%c0_4, %c0_5, %c0_6], %0 {strides = array<i32>} : memref<4x24x128xbf16, #tpu.memory_space<vmem>>, vector<4x4x128xbf16>,
    %c0_7 = arith.constant 0 : index
    %c20 = arith.constant 20 : index
    %c0_8 = arith.constant 0 : index
    %4 = vector.load %arg9[%c0_7, %c20, %c0_8] : memref<4x24x128xbf16, #tpu.memory_space<vmem>>, vector<4x4x128xbf16>
    tpu.vector_store %arg9[%c0_7, %c20, %c0_8], %0 {strides = array<i32>} : memref<4x24x128xbf16, #tpu.memory_space<vmem>>, vector<4x4x128xbf16>,
    %c0_9 = arith.constant 0 : index
    %c0_10 = arith.constant 0 : index
    %c0_11 = arith.constant 0 : index
    %5 = vector.load %arg9[%c0_9, %c0_10, %c0_11] : memref<4x24x128xbf16, #tpu.memory_space<vmem>>, vector<4x16x128xbf16>
    %6 = vector.shape_cast %5 : vector<4x16x128xbf16> to vector<64x128xbf16>
    %c0_12 = arith.constant 0 : index
    %c0_13 = arith.constant 0 : index
    %c0_14 = arith.constant 0 : index
    %7 = vector.load %arg2[%c0_12, %c0_13, %c0_14] : memref<9x128x128xbf16, #tpu.memory_space<vmem>>, vector<1x128x128xbf16>
    %8 = vector.shape_cast %7 : vector<1x128x128xbf16> to vector<128x128xbf16>
    %cst_15 = arith.constant dense<0.000000e+00> : vector<64x128xf32>
    %9 = tpu.matmul %6, %8, %cst_15 {dimension_numbers = #tpu.dot_dimension_numbers<[1], [0], [0], [1], [0, 0, 1, 1], [], []>} : vector<64x128xbf16>, vector<128x128xbf16>, vector<64x128xf32> -> vector<64x128xf32>
    %c0_16 = arith.constant 0 : index
    %c1 = arith.constant 1 : index
    %c0_17 = arith.constant 0 : index
    %10 = vector.load %arg9[%c0_16, %c1, %c0_17] : memref<4x24x128xbf16, #tpu.memory_space<vmem>>, vector<4x16x128xbf16>
    %11 = vector.shape_cast %10 : vector<4x16x128xbf16> to vector<64x128xbf16>
    %c1_18 = arith.constant 1 : index
    %c0_19 = arith.constant 0 : index
    %c0_20 = arith.constant 0 : index
    %12 = vector.load %arg2[%c1_18, %c0_19, %c0_20] : memref<9x128x128xbf16, #tpu.memory_space<vmem>>, vector<1x128x128xbf16>
    %13 = vector.shape_cast %12 : vector<1x128x128xbf16> to vector<128x128xbf16>
    %cst_21 = arith.constant dense<0.000000e+00> : vector<64x128xf32>
    %14 = tpu.matmul %11, %13, %cst_21 {dimension_numbers = #tpu.dot_dimension_numbers<[1], [0], [0], [1], [0, 0, 1, 1], [], []>} : vector<64x128xbf16>, vector<128x128xbf16>, vector<64x128xf32> -> vector<64x128xf32>
    %15 = arith.addf %9, %14 : vector<64x128xf32>
    %c0_22 = arith.constant 0 : index
    %c2 = arith.constant 2 : index
    %c0_23 = arith.constant 0 : index
    %16 = vector.load %arg9[%c0_22, %c2, %c0_23] : memref<4x24x128xbf16, #tpu.memory_space<vmem>>, vector<4x16x128xbf16>
    %17 = vector.shape_cast %16 : vector<4x16x128xbf16> to vector<64x128xbf16>
    %c2_24 = arith.constant 2 : index
    %c0_25 = arith.constant 0 : index
    %c0_26 = arith.constant 0 : index
    %18 = vector.load %arg2[%c2_24, %c0_25, %c0_26] : memref<9x128x128xbf16, #tpu.memory_space<vmem>>, vector<1x128x128xbf16>
    %19 = vector.shape_cast %18 : vector<1x128x128xbf16> to vector<128x128xbf16>
    %cst_27 = arith.constant dense<0.000000e+00> : vector<64x128xf32>
    %20 = tpu.matmul %17, %19, %cst_27 {dimension_numbers = #tpu.dot_dimension_numbers<[1], [0], [0], [1], [0, 0, 1, 1], [], []>} : vector<64x128xbf16>, vector<128x128xbf16>, vector<64x128xf32> -> vector<64x128xf32>
    %21 = arith.addf %15, %20 : vector<64x128xf32>
    %c0_28 = arith.constant 0 : index
    %c3 = arith.constant 3 : index
    %c0_29 = arith.constant 0 : index
    %22 = vector.load %arg9[%c0_28, %c3, %c0_29] : memref<4x24x128xbf16, #tpu.memory_space<vmem>>, vector<4x16x128xbf16>
    %23 = vector.shape_cast %22 : vector<4x16x128xbf16> to vector<64x128xbf16>
    %c3_30 = arith.constant 3 : index
    %c0_31 = arith.constant 0 : index
    %c0_32 = arith.constant 0 : index
    %24 = vector.load %arg2[%c3_30, %c0_31, %c0_32] : memref<9x128x128xbf16, #tpu.memory_space<vmem>>, vector<1x128x128xbf16>
    %25 = vector.shape_cast %24 : vector<1x128x128xbf16> to vector<128x128xbf16>
    %cst_33 = arith.constant dense<0.000000e+00> : vector<64x128xf32>
    %26 = tpu.matmul %23, %25, %cst_33 {dimension_numbers = #tpu.dot_dimension_numbers<[1], [0], [0], [1], [0, 0, 1, 1], [], []>} : vector<64x128xbf16>, vector<128x128xbf16>, vector<64x128xf32> -> vector<64x128xf32>
    %27 = arith.addf %21, %26 : vector<64x128xf32>
    %c0_34 = arith.constant 0 : index
    %c4_35 = arith.constant 4 : index
    %c0_36 = arith.constant 0 : index
    %28 = vector.load %arg9[%c0_34, %c4_35, %c0_36] : memref<4x24x128xbf16, #tpu.memory_space<vmem>>, vector<4x16x128xbf16>
    %29 = vector.shape_cast %28 : vector<4x16x128xbf16> to vector<64x128xbf16>
    %c4_37 = arith.constant 4 : index
    %c0_38 = arith.constant 0 : index
    %c0_39 = arith.constant 0 : index
    %30 = vector.load %arg2[%c4_37, %c0_38, %c0_39] : memref<9x128x128xbf16, #tpu.memory_space<vmem>>, vector<1x128x128xbf16>
    %31 = vector.shape_cast %30 : vector<1x128x128xbf16> to vector<128x128xbf16>
    %cst_40 = arith.constant dense<0.000000e+00> : vector<64x128xf32>
    %32 = tpu.matmul %29, %31, %cst_40 {dimension_numbers = #tpu.dot_dimension_numbers<[1], [0], [0], [1], [0, 0, 1, 1], [], []>} : vector<64x128xbf16>, vector<128x128xbf16>, vector<64x128xf32> -> vector<64x128xf32>
    %33 = arith.addf %27, %32 : vector<64x128xf32>
    %c0_41 = arith.constant 0 : index
    %c5 = arith.constant 5 : index
    %c0_42 = arith.constant 0 : index
    %34 = vector.load %arg9[%c0_41, %c5, %c0_42] : memref<4x24x128xbf16, #tpu.memory_space<vmem>>, vector<4x16x128xbf16>
    %35 = vector.shape_cast %34 : vector<4x16x128xbf16> to vector<64x128xbf16>
    %c5_43 = arith.constant 5 : index
    %c0_44 = arith.constant 0 : index
    %c0_45 = arith.constant 0 : index
    %36 = vector.load %arg2[%c5_43, %c0_44, %c0_45] : memref<9x128x128xbf16, #tpu.memory_space<vmem>>, vector<1x128x128xbf16>
    %37 = vector.shape_cast %36 : vector<1x128x128xbf16> to vector<128x128xbf16>
    %cst_46 = arith.constant dense<0.000000e+00> : vector<64x128xf32>
    %38 = tpu.matmul %35, %37, %cst_46 {dimension_numbers = #tpu.dot_dimension_numbers<[1], [0], [0], [1], [0, 0, 1, 1], [], []>} : vector<64x128xbf16>, vector<128x128xbf16>, vector<64x128xf32> -> vector<64x128xf32>
    %39 = arith.addf %33, %38 : vector<64x128xf32>
    %c0_47 = arith.constant 0 : index
    %c6 = arith.constant 6 : index
    %c0_48 = arith.constant 0 : index
    %40 = vector.load %arg9[%c0_47, %c6, %c0_48] : memref<4x24x128xbf16, #tpu.memory_space<vmem>>, vector<4x16x128xbf16>
    %41 = vector.shape_cast %40 : vector<4x16x128xbf16> to vector<64x128xbf16>
    %c6_49 = arith.constant 6 : index
    %c0_50 = arith.constant 0 : index
    %c0_51 = arith.constant 0 : index
    %42 = vector.load %arg2[%c6_49, %c0_50, %c0_51] : memref<9x128x128xbf16, #tpu.memory_space<vmem>>, vector<1x128x128xbf16>
    %43 = vector.shape_cast %42 : vector<1x128x128xbf16> to vector<128x128xbf16>
    %cst_52 = arith.constant dense<0.000000e+00> : vector<64x128xf32>
    %44 = tpu.matmul %41, %43, %cst_52 {dimension_numbers = #tpu.dot_dimension_numbers<[1], [0], [0], [1], [0, 0, 1, 1], [], []>} : vector<64x128xbf16>, vector<128x128xbf16>, vector<64x128xf32> -> vector<64x128xf32>
    %45 = arith.addf %39, %44 : vector<64x128xf32>
    %c0_53 = arith.constant 0 : index
    %c7 = arith.constant 7 : index
    %c0_54 = arith.constant 0 : index
    %46 = vector.load %arg9[%c0_53, %c7, %c0_54] : memref<4x24x128xbf16, #tpu.memory_space<vmem>>, vector<4x16x128xbf16>
    %47 = vector.shape_cast %46 : vector<4x16x128xbf16> to vector<64x128xbf16>
    %c7_55 = arith.constant 7 : index
    %c0_56 = arith.constant 0 : index
    %c0_57 = arith.constant 0 : index
    %48 = vector.load %arg2[%c7_55, %c0_56, %c0_57] : memref<9x128x128xbf16, #tpu.memory_space<vmem>>, vector<1x128x128xbf16>
    %49 = vector.shape_cast %48 : vector<1x128x128xbf16> to vector<128x128xbf16>
    %cst_58 = arith.constant dense<0.000000e+00> : vector<64x128xf32>
    %50 = tpu.matmul %47, %49, %cst_58 {dimension_numbers = #tpu.dot_dimension_numbers<[1], [0], [0], [1], [0, 0, 1, 1], [], []>} : vector<64x128xbf16>, vector<128x128xbf16>, vector<64x128xf32> -> vector<64x128xf32>
    %51 = arith.addf %45, %50 : vector<64x128xf32>
    %c0_59 = arith.constant 0 : index
    %c8 = arith.constant 8 : index
    %c0_60 = arith.constant 0 : index
    %52 = vector.load %arg9[%c0_59, %c8, %c0_60] : memref<4x24x128xbf16, #tpu.memory_space<vmem>>, vector<4x16x128xbf16>
    %53 = vector.shape_cast %52 : vector<4x16x128xbf16> to vector<64x128xbf16>
    %c8_61 = arith.constant 8 : index
    %c0_62 = arith.constant 0 : index
    %c0_63 = arith.constant 0 : index
    %54 = vector.load %arg2[%c8_61, %c0_62, %c0_63] : memref<9x128x128xbf16, #tpu.memory_space<vmem>>, vector<1x128x128xbf16>
    %55 = vector.shape_cast %54 : vector<1x128x128xbf16> to vector<128x128xbf16>
    %cst_64 = arith.constant dense<0.000000e+00> : vector<64x128xf32>
    %56 = tpu.matmul %53, %55, %cst_64 {dimension_numbers = #tpu.dot_dimension_numbers<[1], [0], [0], [1], [0, 0, 1, 1], [], []>} : vector<64x128xbf16>, vector<128x128xbf16>, vector<64x128xf32> -> vector<64x128xf32>
    %57 = arith.addf %51, %56 : vector<64x128xf32>
    %c0_65 = arith.constant 0 : index
    %c0_66 = arith.constant 0 : index
    %58 = vector.load %arg4[%c0_65, %c0_66] : memref<1x128xf32, #tpu.memory_space<vmem>>, vector<1x128xf32>
    %59 = vector.broadcast %58 : vector<1x128xf32> to vector<64x128xf32>
    %60 = arith.mulf %57, %59 : vector<64x128xf32>
    %c0_67 = arith.constant 0 : index
    %c0_68 = arith.constant 0 : index
    %61 = vector.load %arg5[%c0_67, %c0_68] : memref<1x128xf32, #tpu.memory_space<vmem>>, vector<1x128xf32>
    %62 = vector.broadcast %61 : vector<1x128xf32> to vector<64x128xf32>
    %63 = arith.addf %60, %62 : vector<64x128xf32>
    %cst_69 = arith.constant 0.000000e+00 : f32
    %64 = vector.broadcast %cst_69 : f32 to vector<64x128xf32>
    %65 = arith.maximumf %63, %64 : vector<64x128xf32>
    %66 = vector.shape_cast %65 : vector<64x128xf32> to vector<4x16x128xf32>
    %67 = arith.truncf %66 : vector<4x16x128xf32> to vector<4x16x128xbf16>
    %c0_70 = arith.constant 0 : index
    %c4_71 = arith.constant 4 : index
    %c0_72 = arith.constant 0 : index
    %68 = vector.load %arg10[%c0_70, %c4_71, %c0_72] : memref<4x24x128xbf16, #tpu.memory_space<vmem>>, vector<4x16x128xbf16>
    tpu.vector_store %arg10[%c0_70, %c4_71, %c0_72], %67 {strides = array<i32>} : memref<4x24x128xbf16, #tpu.memory_space<vmem>>, vector<4x16x128xbf16>,
    %c0_73 = arith.constant 0 : index
    %c0_74 = arith.constant 0 : index
    %c0_75 = arith.constant 0 : index
    %69 = vector.load %arg10[%c0_73, %c0_74, %c0_75] : memref<4x24x128xbf16, #tpu.memory_space<vmem>>, vector<4x4x128xbf16>
    tpu.vector_store %arg10[%c0_73, %c0_74, %c0_75], %0 {strides = array<i32>} : memref<4x24x128xbf16, #tpu.memory_space<vmem>>, vector<4x4x128xbf16>,
    %cst_76 = arith.constant 0.000000e+00 : bf16
    %70 = vector.broadcast %cst_76 : bf16 to vector<4x4x128xbf16>
    %c0_77 = arith.constant 0 : index
    %c20_78 = arith.constant 20 : index
    %c0_79 = arith.constant 0 : index
    %71 = vector.load %arg10[%c0_77, %c20_78, %c0_79] : memref<4x24x128xbf16, #tpu.memory_space<vmem>>, vector<4x4x128xbf16>
    tpu.vector_store %arg10[%c0_77, %c20_78, %c0_79], %70 {strides = array<i32>} : memref<4x24x128xbf16, #tpu.memory_space<vmem>>, vector<4x4x128xbf16>,
    %c0_80 = arith.constant 0 : index
    %c0_81 = arith.constant 0 : index
    %c0_82 = arith.constant 0 : index
    %72 = vector.load %arg10[%c0_80, %c0_81, %c0_82] : memref<4x24x128xbf16, #tpu.memory_space<vmem>>, vector<4x16x128xbf16>
    %73 = vector.shape_cast %72 : vector<4x16x128xbf16> to vector<64x128xbf16>
    %c0_83 = arith.constant 0 : index
    %c0_84 = arith.constant 0 : index
    %c0_85 = arith.constant 0 : index
    %74 = vector.load %arg3[%c0_83, %c0_84, %c0_85] : memref<9x128x128xbf16, #tpu.memory_space<vmem>>, vector<1x128x128xbf16>
    %75 = vector.shape_cast %74 : vector<1x128x128xbf16> to vector<128x128xbf16>
    %cst_86 = arith.constant dense<0.000000e+00> : vector<64x128xf32>
    %76 = tpu.matmul %73, %75, %cst_86 {dimension_numbers = #tpu.dot_dimension_numbers<[1], [0], [0], [1], [0, 0, 1, 1], [], []>} : vector<64x128xbf16>, vector<128x128xbf16>, vector<64x128xf32> -> vector<64x128xf32>
    %c0_87 = arith.constant 0 : index
    %c1_88 = arith.constant 1 : index
    %c0_89 = arith.constant 0 : index
    %77 = vector.load %arg10[%c0_87, %c1_88, %c0_89] : memref<4x24x128xbf16, #tpu.memory_space<vmem>>, vector<4x16x128xbf16>
    %78 = vector.shape_cast %77 : vector<4x16x128xbf16> to vector<64x128xbf16>
    %c1_90 = arith.constant 1 : index
    %c0_91 = arith.constant 0 : index
    %c0_92 = arith.constant 0 : index
    %79 = vector.load %arg3[%c1_90, %c0_91, %c0_92] : memref<9x128x128xbf16, #tpu.memory_space<vmem>>, vector<1x128x128xbf16>
    %80 = vector.shape_cast %79 : vector<1x128x128xbf16> to vector<128x128xbf16>
    %cst_93 = arith.constant dense<0.000000e+00> : vector<64x128xf32>
    %81 = tpu.matmul %78, %80, %cst_93 {dimension_numbers = #tpu.dot_dimension_numbers<[1], [0], [0], [1], [0, 0, 1, 1], [], []>} : vector<64x128xbf16>, vector<128x128xbf16>, vector<64x128xf32> -> vector<64x128xf32>
    %82 = arith.addf %76, %81 : vector<64x128xf32>
    %c0_94 = arith.constant 0 : index
    %c2_95 = arith.constant 2 : index
    %c0_96 = arith.constant 0 : index
    %83 = vector.load %arg10[%c0_94, %c2_95, %c0_96] : memref<4x24x128xbf16, #tpu.memory_space<vmem>>, vector<4x16x128xbf16>
    %84 = vector.shape_cast %83 : vector<4x16x128xbf16> to vector<64x128xbf16>
    %c2_97 = arith.constant 2 : index
    %c0_98 = arith.constant 0 : index
    %c0_99 = arith.constant 0 : index
    %85 = vector.load %arg3[%c2_97, %c0_98, %c0_99] : memref<9x128x128xbf16, #tpu.memory_space<vmem>>, vector<1x128x128xbf16>
    %86 = vector.shape_cast %85 : vector<1x128x128xbf16> to vector<128x128xbf16>
    %cst_100 = arith.constant dense<0.000000e+00> : vector<64x128xf32>
    %87 = tpu.matmul %84, %86, %cst_100 {dimension_numbers = #tpu.dot_dimension_numbers<[1], [0], [0], [1], [0, 0, 1, 1], [], []>} : vector<64x128xbf16>, vector<128x128xbf16>, vector<64x128xf32> -> vector<64x128xf32>
    %88 = arith.addf %82, %87 : vector<64x128xf32>
    %c0_101 = arith.constant 0 : index
    %c3_102 = arith.constant 3 : index
    %c0_103 = arith.constant 0 : index
    %89 = vector.load %arg10[%c0_101, %c3_102, %c0_103] : memref<4x24x128xbf16, #tpu.memory_space<vmem>>, vector<4x16x128xbf16>
    %90 = vector.shape_cast %89 : vector<4x16x128xbf16> to vector<64x128xbf16>
    %c3_104 = arith.constant 3 : index
    %c0_105 = arith.constant 0 : index
    %c0_106 = arith.constant 0 : index
    %91 = vector.load %arg3[%c3_104, %c0_105, %c0_106] : memref<9x128x128xbf16, #tpu.memory_space<vmem>>, vector<1x128x128xbf16>
    %92 = vector.shape_cast %91 : vector<1x128x128xbf16> to vector<128x128xbf16>
    %cst_107 = arith.constant dense<0.000000e+00> : vector<64x128xf32>
    %93 = tpu.matmul %90, %92, %cst_107 {dimension_numbers = #tpu.dot_dimension_numbers<[1], [0], [0], [1], [0, 0, 1, 1], [], []>} : vector<64x128xbf16>, vector<128x128xbf16>, vector<64x128xf32> -> vector<64x128xf32>
    %94 = arith.addf %88, %93 : vector<64x128xf32>
    %c0_108 = arith.constant 0 : index
    %c4_109 = arith.constant 4 : index
    %c0_110 = arith.constant 0 : index
    %95 = vector.load %arg10[%c0_108, %c4_109, %c0_110] : memref<4x24x128xbf16, #tpu.memory_space<vmem>>, vector<4x16x128xbf16>
    %96 = vector.shape_cast %95 : vector<4x16x128xbf16> to vector<64x128xbf16>
    %c4_111 = arith.constant 4 : index
    %c0_112 = arith.constant 0 : index
    %c0_113 = arith.constant 0 : index
    %97 = vector.load %arg3[%c4_111, %c0_112, %c0_113] : memref<9x128x128xbf16, #tpu.memory_space<vmem>>, vector<1x128x128xbf16>
    %98 = vector.shape_cast %97 : vector<1x128x128xbf16> to vector<128x128xbf16>
    %cst_114 = arith.constant dense<0.000000e+00> : vector<64x128xf32>
    %99 = tpu.matmul %96, %98, %cst_114 {dimension_numbers = #tpu.dot_dimension_numbers<[1], [0], [0], [1], [0, 0, 1, 1], [], []>} : vector<64x128xbf16>, vector<128x128xbf16>, vector<64x128xf32> -> vector<64x128xf32>
    %100 = arith.addf %94, %99 : vector<64x128xf32>
    %c0_115 = arith.constant 0 : index
    %c5_116 = arith.constant 5 : index
    %c0_117 = arith.constant 0 : index
    %101 = vector.load %arg10[%c0_115, %c5_116, %c0_117] : memref<4x24x128xbf16, #tpu.memory_space<vmem>>, vector<4x16x128xbf16>
    %102 = vector.shape_cast %101 : vector<4x16x128xbf16> to vector<64x128xbf16>
    %c5_118 = arith.constant 5 : index
    %c0_119 = arith.constant 0 : index
    %c0_120 = arith.constant 0 : index
    %103 = vector.load %arg3[%c5_118, %c0_119, %c0_120] : memref<9x128x128xbf16, #tpu.memory_space<vmem>>, vector<1x128x128xbf16>
    %104 = vector.shape_cast %103 : vector<1x128x128xbf16> to vector<128x128xbf16>
    %cst_121 = arith.constant dense<0.000000e+00> : vector<64x128xf32>
    %105 = tpu.matmul %102, %104, %cst_121 {dimension_numbers = #tpu.dot_dimension_numbers<[1], [0], [0], [1], [0, 0, 1, 1], [], []>} : vector<64x128xbf16>, vector<128x128xbf16>, vector<64x128xf32> -> vector<64x128xf32>
    %106 = arith.addf %100, %105 : vector<64x128xf32>
    %c0_122 = arith.constant 0 : index
    %c6_123 = arith.constant 6 : index
    %c0_124 = arith.constant 0 : index
    %107 = vector.load %arg10[%c0_122, %c6_123, %c0_124] : memref<4x24x128xbf16, #tpu.memory_space<vmem>>, vector<4x16x128xbf16>
    %108 = vector.shape_cast %107 : vector<4x16x128xbf16> to vector<64x128xbf16>
    %c6_125 = arith.constant 6 : index
    %c0_126 = arith.constant 0 : index
    %c0_127 = arith.constant 0 : index
    %109 = vector.load %arg3[%c6_125, %c0_126, %c0_127] : memref<9x128x128xbf16, #tpu.memory_space<vmem>>, vector<1x128x128xbf16>
    %110 = vector.shape_cast %109 : vector<1x128x128xbf16> to vector<128x128xbf16>
    %cst_128 = arith.constant dense<0.000000e+00> : vector<64x128xf32>
    %111 = tpu.matmul %108, %110, %cst_128 {dimension_numbers = #tpu.dot_dimension_numbers<[1], [0], [0], [1], [0, 0, 1, 1], [], []>} : vector<64x128xbf16>, vector<128x128xbf16>, vector<64x128xf32> -> vector<64x128xf32>
    %112 = arith.addf %106, %111 : vector<64x128xf32>
    %c0_129 = arith.constant 0 : index
    %c7_130 = arith.constant 7 : index
    %c0_131 = arith.constant 0 : index
    %113 = vector.load %arg10[%c0_129, %c7_130, %c0_131] : memref<4x24x128xbf16, #tpu.memory_space<vmem>>, vector<4x16x128xbf16>
    %114 = vector.shape_cast %113 : vector<4x16x128xbf16> to vector<64x128xbf16>
    %c7_132 = arith.constant 7 : index
    %c0_133 = arith.constant 0 : index
    %c0_134 = arith.constant 0 : index
    %115 = vector.load %arg3[%c7_132, %c0_133, %c0_134] : memref<9x128x128xbf16, #tpu.memory_space<vmem>>, vector<1x128x128xbf16>
    %116 = vector.shape_cast %115 : vector<1x128x128xbf16> to vector<128x128xbf16>
    %cst_135 = arith.constant dense<0.000000e+00> : vector<64x128xf32>
    %117 = tpu.matmul %114, %116, %cst_135 {dimension_numbers = #tpu.dot_dimension_numbers<[1], [0], [0], [1], [0, 0, 1, 1], [], []>} : vector<64x128xbf16>, vector<128x128xbf16>, vector<64x128xf32> -> vector<64x128xf32>
    %118 = arith.addf %112, %117 : vector<64x128xf32>
    %c0_136 = arith.constant 0 : index
    %c8_137 = arith.constant 8 : index
    %c0_138 = arith.constant 0 : index
    %119 = vector.load %arg10[%c0_136, %c8_137, %c0_138] : memref<4x24x128xbf16, #tpu.memory_space<vmem>>, vector<4x16x128xbf16>
    %120 = vector.shape_cast %119 : vector<4x16x128xbf16> to vector<64x128xbf16>
    %c8_139 = arith.constant 8 : index
    %c0_140 = arith.constant 0 : index
    %c0_141 = arith.constant 0 : index
    %121 = vector.load %arg3[%c8_139, %c0_140, %c0_141] : memref<9x128x128xbf16, #tpu.memory_space<vmem>>, vector<1x128x128xbf16>
    %122 = vector.shape_cast %121 : vector<1x128x128xbf16> to vector<128x128xbf16>
    %cst_142 = arith.constant dense<0.000000e+00> : vector<64x128xf32>
    %123 = tpu.matmul %120, %122, %cst_142 {dimension_numbers = #tpu.dot_dimension_numbers<[1], [0], [0], [1], [0, 0, 1, 1], [], []>} : vector<64x128xbf16>, vector<128x128xbf16>, vector<64x128xf32> -> vector<64x128xf32>
    %124 = arith.addf %118, %123 : vector<64x128xf32>
    %c0_143 = arith.constant 0 : index
    %c0_144 = arith.constant 0 : index
    %125 = vector.load %arg6[%c0_143, %c0_144] : memref<1x128xf32, #tpu.memory_space<vmem>>, vector<1x128xf32>
    %126 = vector.broadcast %125 : vector<1x128xf32> to vector<64x128xf32>
    %127 = arith.mulf %124, %126 : vector<64x128xf32>
    %c0_145 = arith.constant 0 : index
    %c0_146 = arith.constant 0 : index
    %128 = vector.load %arg7[%c0_145, %c0_146] : memref<1x128xf32, #tpu.memory_space<vmem>>, vector<1x128xf32>
    %129 = vector.broadcast %128 : vector<1x128xf32> to vector<64x128xf32>
    %130 = arith.addf %127, %129 : vector<64x128xf32>
    %131 = vector.shape_cast %130 : vector<64x128xf32> to vector<4x16x128xf32>
    %c0_147 = arith.constant 0 : index
    %c0_148 = arith.constant 0 : index
    %c0_149 = arith.constant 0 : index
    %132 = vector.load %arg1[%c0_147, %c0_148, %c0_149] : memref<4x16x128xbf16, #tpu.memory_space<vmem>>, vector<4x16x128xbf16>
    %133 = arith.extf %132 : vector<4x16x128xbf16> to vector<4x16x128xf32>
    %134 = arith.addf %131, %133 : vector<4x16x128xf32>
    %c0_150 = arith.constant 0 : index
    %c0_151 = arith.constant 0 : index
    %c0_152 = arith.constant 0 : index
    %135 = vector.load %arg8[%c0_150, %c0_151, %c0_152] : memref<4x16x128xf32, #tpu.memory_space<vmem>>, vector<4x16x128xf32>
    tpu.vector_store %arg8[%c0_150, %c0_151, %c0_152], %134 {strides = array<i32>} : memref<4x16x128xf32, #tpu.memory_space<vmem>>, vector<4x16x128xf32>,
    return
  }
  func.func @transform_0(%arg0: i32) -> (i32, i32, i32) {
    %c0_i32 = arith.constant 0 : i32
    %c0_i32_0 = arith.constant 0 : i32
    %c0_i32_1 = arith.constant 0 : i32
    return %arg0, %c0_i32, %c0_i32_0 : i32, i32, i32
  }
  func.func @transform_1(%arg0: i32) -> (i32, i32, i32) {
    %c0_i32 = arith.constant 0 : i32
    %c0_i32_0 = arith.constant 0 : i32
    %c0_i32_1 = arith.constant 0 : i32
    %c0_i32_2 = arith.constant 0 : i32
    return %c0_i32, %c0_i32_0, %c0_i32_1 : i32, i32, i32
  }
  func.func @transform_2(%arg0: i32) -> (i32, i32, i32) {
    %c0_i32 = arith.constant 0 : i32
    %c0_i32_0 = arith.constant 0 : i32
    %c0_i32_1 = arith.constant 0 : i32
    %c0_i32_2 = arith.constant 0 : i32
    return %c0_i32, %c0_i32_0, %c0_i32_1 : i32, i32, i32
  }
  func.func @transform_3(%arg0: i32) -> (i32, i32) {
    %c0_i32 = arith.constant 0 : i32
    %c0_i32_0 = arith.constant 0 : i32
    %c0_i32_1 = arith.constant 0 : i32
    return %c0_i32, %c0_i32_0 : i32, i32
  }
  func.func @transform_4(%arg0: i32) -> (i32, i32) {
    %c0_i32 = arith.constant 0 : i32
    %c0_i32_0 = arith.constant 0 : i32
    %c0_i32_1 = arith.constant 0 : i32
    return %c0_i32, %c0_i32_0 : i32, i32
  }
  func.func @transform_5(%arg0: i32) -> (i32, i32) {
    %c0_i32 = arith.constant 0 : i32
    %c0_i32_0 = arith.constant 0 : i32
    %c0_i32_1 = arith.constant 0 : i32
    return %c0_i32, %c0_i32_0 : i32, i32
  }
  func.func @transform_6(%arg0: i32) -> (i32, i32) {
    %c0_i32 = arith.constant 0 : i32
    %c0_i32_0 = arith.constant 0 : i32
    %c0_i32_1 = arith.constant 0 : i32
    return %c0_i32, %c0_i32_0 : i32, i32
  }
  func.func @transform_7(%arg0: i32) -> (i32, i32, i32) {
    %c0_i32 = arith.constant 0 : i32
    %c0_i32_0 = arith.constant 0 : i32
    %c0_i32_1 = arith.constant 0 : i32
    return %arg0, %c0_i32, %c0_i32_0 : i32, i32, i32
  }
}

</mosaic_0001>

<llo_original>
// kernel: tpu_custom_call.1
$region0: #{tpu_custom_call.1}
  #allocation0 [shape = 'u32[]', space=smem, size = 0x4, offset = 0x4, fixed_abs, tag = 'smem constant byte address 0x4 - core index']
  #allocation1 [shape = 'u32[144,128]{1,0:T(1,128)}', space=vmem, size = 0x12000, scoped, tag = 'internal scratch']
  #allocation2 [shape = 'bf16[4,24,128]{2,1,0:T(8,128)(2,1)}', space=vmem, size = 0x6000, scoped, tag = 'scratch operand']
  #allocation3 [shape = 'bf16[4,24,128]{2,1,0:T(8,128)(2,1)}', space=vmem, size = 0x6000, scoped, tag = 'scratch operand']
  %s0 = inlined_call_operand.hbm [shape: bf16[16,16,128], index: 0, kind: input, shape index: {}]
  %s1 = inlined_call_operand.hbm [shape: bf16[9,128,128], index: 1, kind: input, shape index: {}]
  %s2 = inlined_call_operand.hbm [shape: bf16[9,128,128], index: 2, kind: input, shape index: {}]
  %s3 = inlined_call_operand.vmem [shape: f32[1,128], index: 3, kind: input, shape index: {}]
  %s4 = inlined_call_operand.vmem [shape: f32[1,128], index: 4, kind: input, shape index: {}]
  %s5 = inlined_call_operand.vmem [shape: f32[1,128], index: 5, kind: input, shape index: {}]
  %s6 = inlined_call_operand.vmem [shape: f32[1,128], index: 6, kind: input, shape index: {}]
  %s7 = inlined_call_operand.hbm [shape: f32[16,16,128], index: 7, kind: output, shape index: {}]
  %s8 = sld [smem:[#allocation0]]
  $region73: #{tpu_custom_call.1} parent=0
    _
  %s10 = ssub.s32 1, %s8
  %s11 = scalar_select 0, %s10, %s8
  $region1: #{tpu_custom_call.1} parent=0
    #allocation4 [shape = 'u8[32768]{0}', space=vmem, size = 0x8000, scoped, tag = 'input window, operand 0']
    #allocation5 [shape = 's32[2]{0}', space=sflag, size = 0x8, scoped, tag = 'scoped memory for tpu_custom_call.1']
    #allocation6 [shape = 's32[2]{0}', space=sflag, size = 0x8, scoped, tag = 'scoped memory for tpu_custom_call.1']
    #allocation7 [shape = 'u8[294912]{0}', space=vmem, size = 0x48000, scoped, tag = 'input window, operand 1, single buffered']
    #allocation8 [shape = 's32[1]{0}', space=sflag, size = 0x4, scoped, tag = 'scoped memory for tpu_custom_call.1']
    #allocation9 [shape = 'u8[294912]{0}', space=vmem, size = 0x48000, scoped, tag = 'input window, operand 2, single buffered']
    #allocation10 [shape = 'u8[65536]{0}', space=vmem, size = 0x10000, scoped, tag = 'output window, operand 0']
    %12 = vsyncpa [#allocation5], 0
    %s13 = scalar_lea.sflag [#allocation5], 1
    %14 = vsyncpa %s13, 0
    %15 = vsyncpa [#allocation8], 0
    %16 = vsyncpa [#allocation6], 0
    %s17 = scalar_lea.sflag [#allocation6], 1
    %18 = vsyncpa %s17, 0
    loop: start=0, step=1, limit=6
    $region2: #{tpu_custom_call.1} parent=1 // loop_pre_header
      _
    $region3: #{tpu_custom_call.1} parent=1 // loop_header
      %s20 = sphi 0, %s24
      %p21 = scmp.ge.s32.totalorder %s20, 6
      %s30 = sphi 0, %s32
      %s33 = sphi 0, %s30
      %s34 = sphi 0, %s33
      %s50 = sphi 0, %s34
      %s54 = sphi 0, %s54
      %s56 = sphi 0, %s54
      %s57 = sphi 0, %s56
      %s71 = sphi 0, %s57
      %s75 = sphi 0, %s75
      %s77 = sphi 0, %s75
      %s78 = sphi 0, %s77
      %s92 = sphi 0, %s78
      %s96 = sphi 0, %s96
      %s98 = sphi 0, %s96
      %s99 = sphi 0, %s98
      %s113 = sphi 0, %s99
      %s117 = sphi 0, %s117
      %s119 = sphi 0, %s117
      %s120 = sphi 0, %s119
      %s134 = sphi 0, %s120
      %s138 = sphi 0, %s138
      %s140 = sphi 0, %s138
      %s141 = sphi 0, %s140
      %s155 = sphi 0, %s141
      %s159 = sphi 0, %s159
      %s161 = sphi 0, %s159
      %s162 = sphi 0, %s161
      %s176 = sphi 0, %s162
      %s182 = sphi 0, %s184
      %s185 = sphi 0, %s182
      %s186 = sphi 0, %s185
      %s202 = sphi 0, %s186
    $region4: #{tpu_custom_call.1} parent=1 // loop_header_branch
      %23 = sbr.rel (%p21) target = $region8
    $region5: #{tpu_custom_call.1} parent=1 // loop_body
      %s25 = ssub.s32 %s20, 1
      %s26 = ssub.s32 %s20, 2
      %s27 = sadd.s32 %s20, 1
      %s28 = ssub.s32 %s20, %s27
      %p29 = scmp.eq.s32.totalorder %s28, 0
      %s31 = sadd.s32 %s30, 1
      %s32 = scalar_select %p29, %s30, %s31
      %p35 = pneg %p29
      %p36 = scmp.eq.s32.totalorder %s20, 3
      %p37 = por %p35, %p36
      %p38 = scmp.ne.s32.totalorder %s30, %s33
      %p39 = scmp.eq.s32.totalorder %s20, 0
      %p40 = por %p38, %p39
      %p41 = scmp.ne.s32.totalorder %s30, %s33
      %p42 = scmp.eq.s32.totalorder %s25, 3
      %p43 = por %p41, %p42
      %p44 = scmp.ne.s32.totalorder %s33, %s34
      %p45 = scmp.eq.s32.totalorder %s25, 0
      %p46 = por %p44, %p45
      %p47 = scmp.ne.s32.totalorder %s33, %s34
      %p48 = scmp.eq.s32.totalorder %s26, 3
      %p49 = por %p47, %p48
      %p51 = scmp.ne.s32.totalorder %s34, %s50
      %p52 = scmp.eq.s32.totalorder %s26, 0
      %p53 = por %p51, %p52
      %s55 = sadd.s32 %s54, 1
      %p58 = scmp.eq.s32.totalorder %s20, 3
      %p59 = scmp.ne.s32.totalorder %s54, %s56
      %p60 = scmp.eq.s32.totalorder %s20, 0
      %p61 = por %p59, %p60
      %p62 = scmp.ne.s32.totalorder %s54, %s56
      %p63 = scmp.eq.s32.totalorder %s25, 3
      %p64 = por %p62, %p63
      %p65 = scmp.ne.s32.totalorder %s56, %s57
      %p66 = scmp.eq.s32.totalorder %s25, 0
      %p67 = por %p65, %p66
      %p68 = scmp.ne.s32.totalorder %s56, %s57
      %p69 = scmp.eq.s32.totalorder %s26, 3
      %p70 = por %p68, %p69
      %p72 = scmp.ne.s32.totalorder %s57, %s71
      %p73 = scmp.eq.s32.totalorder %s26, 0
      %p74 = por %p72, %p73
      %s76 = sadd.s32 %s75, 1
      %p79 = scmp.eq.s32.totalorder %s20, 3
      %p80 = scmp.ne.s32.totalorder %s75, %s77
      %p81 = scmp.eq.s32.totalorder %s20, 0
      %p82 = por %p80, %p81
      %p83 = scmp.ne.s32.totalorder %s75, %s77
      %p84 = scmp.eq.s32.totalorder %s25, 3
      %p85 = por %p83, %p84
      %p86 = scmp.ne.s32.totalorder %s77, %s78
      %p87 = scmp.eq.s32.totalorder %s25, 0
      %p88 = por %p86, %p87
      %p89 = scmp.ne.s32.totalorder %s77, %s78
      %p90 = scmp.eq.s32.totalorder %s26, 3
      %p91 = por %p89, %p90
      %p93 = scmp.ne.s32.totalorder %s78, %s92
      %p94 = scmp.eq.s32.totalorder %s26, 0
      %p95 = por %p93, %p94
      %s97 = sadd.s32 %s96, 1
      %p100 = scmp.eq.s32.totalorder %s20, 3
      %p101 = scmp.ne.s32.totalorder %s96, %s98
      %p102 = scmp.eq.s32.totalorder %s20, 0
      %p103 = por %p101, %p102
      %p104 = scmp.ne.s32.totalorder %s96, %s98
      %p105 = scmp.eq.s32.totalorder %s25, 3
      %p106 = por %p104, %p105
      %p107 = scmp.ne.s32.totalorder %s98, %s99
      %p108 = scmp.eq.s32.totalorder %s25, 0
      %p109 = por %p107, %p108
      %p110 = scmp.ne.s32.totalorder %s98, %s99
      %p111 = scmp.eq.s32.totalorder %s26, 3
      %p112 = por %p110, %p111
      %p114 = scmp.ne.s32.totalorder %s99, %s113
      %p115 = scmp.eq.s32.totalorder %s26, 0
      %p116 = por %p114, %p115
      %s118 = sadd.s32 %s117, 1
      %p121 = scmp.eq.s32.totalorder %s20, 3
      %p122 = scmp.ne.s32.totalorder %s117, %s119
      %p123 = scmp.eq.s32.totalorder %s20, 0
      %p124 = por %p122, %p123
      %p125 = scmp.ne.s32.totalorder %s117, %s119
      %p126 = scmp.eq.s32.totalorder %s25, 3
      %p127 = por %p125, %p126
      %p128 = scmp.ne.s32.totalorder %s119, %s120
      %p129 = scmp.eq.s32.totalorder %s25, 0
      %p130 = por %p128, %p129
      %p131 = scmp.ne.s32.totalorder %s119, %s120
      %p132 = scmp.eq.s32.totalorder %s26, 3
      %p133 = por %p131, %p132
      %p135 = scmp.ne.s32.totalorder %s120, %s134
      %p136 = scmp.eq.s32.totalorder %s26, 0
      %p137 = por %p135, %p136
      %s139 = sadd.s32 %s138, 1
      %p142 = scmp.eq.s32.totalorder %s20, 3
      %p143 = scmp.ne.s32.totalorder %s138, %s140
      %p144 = scmp.eq.s32.totalorder %s20, 0
      %p145 = por %p143, %p144
      %p146 = scmp.ne.s32.totalorder %s138, %s140
      %p147 = scmp.eq.s32.totalorder %s25, 3
      %p148 = por %p146, %p147
      %p149 = scmp.ne.s32.totalorder %s140, %s141
      %p150 = scmp.eq.s32.totalorder %s25, 0
      %p151 = por %p149, %p150
      %p152 = scmp.ne.s32.totalorder %s140, %s141
      %p153 = scmp.eq.s32.totalorder %s26, 3
      %p154 = por %p152, %p153
      %p156 = scmp.ne.s32.totalorder %s141, %s155
      %p157 = scmp.eq.s32.totalorder %s26, 0
      %p158 = por %p156, %p157
      %s160 = sadd.s32 %s159, 1
      %p163 = scmp.eq.s32.totalorder %s20, 3
      %p164 = scmp.ne.s32.totalorder %s159, %s161
      %p165 = scmp.eq.s32.totalorder %s20, 0
      %p166 = por %p164, %p165
      %p167 = scmp.ne.s32.totalorder %s159, %s161
      %p168 = scmp.eq.s32.totalorder %s25, 3
      %p169 = por %p167, %p168
      %p170 = scmp.ne.s32.totalorder %s161, %s162
      %p171 = scmp.eq.s32.totalorder %s25, 0
      %p172 = por %p170, %p171
      %p173 = scmp.ne.s32.totalorder %s161, %s162
      %p174 = scmp.eq.s32.totalorder %s26, 3
      %p175 = por %p173, %p174
      %p177 = scmp.ne.s32.totalorder %s162, %s176
      %p178 = scmp.eq.s32.totalorder %s26, 0
      %p179 = por %p177, %p178
      %s180 = ssub.s32 %s20, %s27
      %p181 = scmp.eq.s32.totalorder %s180, 0
      %s183 = sadd.s32 %s182, 1
      %s184 = scalar_select %p181, %s182, %s183
      %p187 = pneg %p181
      %p188 = scmp.eq.s32.totalorder %s20, 3
      %p189 = por %p187, %p188
      %p190 = scmp.ne.s32.totalorder %s182, %s185
      %p191 = scmp.eq.s32.totalorder %s20, 0
      %p192 = por %p190, %p191
      %p193 = scmp.ne.s32.totalorder %s182, %s185
      %p194 = scmp.eq.s32.totalorder %s25, 3
      %p195 = por %p193, %p194
      %p196 = scmp.ne.s32.totalorder %s185, %s186
      %p197 = scmp.eq.s32.totalorder %s25, 0
      %p198 = por %p196, %p197
      %p199 = scmp.ne.s32.totalorder %s185, %s186
      %p200 = scmp.eq.s32.totalorder %s26, 3
      %p201 = por %p199, %p200
      %p203 = scmp.ne.s32.totalorder %s186, %s202
      %p204 = scmp.eq.s32.totalorder %s26, 0
      %p205 = por %p203, %p204
      %p206 = scmp.le.s32.totalorder 1, %s20
      %p207 = scmp.lt.s32.totalorder %s20, 5
      %p208 = pnand %p206, %p207
      %p209 = pneg %p208
      // Predicated region
      $region9: #{tpu_custom_call.1} parent=5 // pred_check
        _
      $region10: #{tpu_custom_call.1} parent=5 // pred_check_branch
        %211 = sbr.rel (%p208) target = $region12
      $region11: #{tpu_custom_call.1} parent=5 // pred_region
        %s212 = ssub.s32 %s20, 1
        // Predicated region
        $region13: #{tpu_custom_call.1} parent=11 // pred_check
          %p213 = pneg %p67
        $region14: #{tpu_custom_call.1} parent=11 // pred_check_branch
          %215 = sbr.rel (%p213) target = $region16
        $region15: #{tpu_custom_call.1} parent=11 // pred_region
          %s217 = ssub.s32 9216, 9216
          %218 = vsyncadd [#allocation8], %s217
          %s219 = sshll.u32 [#allocation7], 4
          %s220 = int_to_ptr.vmem [resolvable:$true] %s219
          %225 = dma.hbm_to_vmem [thread:$0]  %s1, 9216, %s220, [#allocation8], 64, 64, 4
        $region16: #{tpu_custom_call.1} parent=11 // pred_fallthru
          _
        // Predicated region
        $region17: #{tpu_custom_call.1} parent=11 // pred_check
          %p226 = pneg %p88
        $region18: #{tpu_custom_call.1} parent=11 // pred_check_branch
          %228 = sbr.rel (%p226) target = $region20
        $region19: #{tpu_custom_call.1} parent=11 // pred_region
          %s230 = ssub.s32 9216, 9216
          %231 = vsyncadd [#allocation8], %s230
          %s232 = sshll.u32 [#allocation9], 4
          %s233 = int_to_ptr.vmem [resolvable:$true] %s232
          %238 = dma.hbm_to_vmem [thread:$0]  %s2, 9216, %s233, [#allocation8], 64, 64, 4
        $region20: #{tpu_custom_call.1} parent=11 // pred_fallthru
          _
        // Predicated region
        $region21: #{tpu_custom_call.1} parent=11 // pred_check
          %p239 = pneg %p109
        $region22: #{tpu_custom_call.1} parent=11 // pred_check_branch
          %241 = sbr.rel (%p239) target = $region24
        $region23: #{tpu_custom_call.1} parent=11 // pred_region
          _
        $region24: #{tpu_custom_call.1} parent=11 // pred_fallthru
          _
        // Predicated region
        $region25: #{tpu_custom_call.1} parent=11 // pred_check
          %p242 = pneg %p130
        $region26: #{tpu_custom_call.1} parent=11 // pred_check_branch
          %244 = sbr.rel (%p242) target = $region28
        $region27: #{tpu_custom_call.1} parent=11 // pred_region
          _
        $region28: #{tpu_custom_call.1} parent=11 // pred_fallthru
          _
        // Predicated region
        $region29: #{tpu_custom_call.1} parent=11 // pred_check
          %p245 = pneg %p151
        $region30: #{tpu_custom_call.1} parent=11 // pred_check_branch
          %247 = sbr.rel (%p245) target = $region32
        $region31: #{tpu_custom_call.1} parent=11 // pred_region
          _
        $region32: #{tpu_custom_call.1} parent=11 // pred_fallthru
          _
        // Predicated region
        $region33: #{tpu_custom_call.1} parent=11 // pred_check
          %p248 = pneg %p172
        $region34: #{tpu_custom_call.1} parent=11 // pred_check_branch
          %250 = sbr.rel (%p248) target = $region36
        $region35: #{tpu_custom_call.1} parent=11 // pred_region
          _
        $region36: #{tpu_custom_call.1} parent=11 // pred_fallthru
          _
      $region12: #{tpu_custom_call.1} parent=5 // pred_fallthru
        _
      %p251 = scmp.lt.s32.totalorder %s20, 4
      // Predicated region
      $region37: #{tpu_custom_call.1} parent=5 // pred_check
        %p252 = pneg %p251
      $region38: #{tpu_custom_call.1} parent=5 // pred_check_branch
        %254 = sbr.rel (%p252) target = $region40
      $region39: #{tpu_custom_call.1} parent=5 // pred_region
        // Predicated region
        $region41: #{tpu_custom_call.1} parent=39 // pred_check
          %p255 = pneg %p40
        $region42: #{tpu_custom_call.1} parent=39 // pred_check_branch
          %257 = sbr.rel (%p255) target = $region44
        $region43: #{tpu_custom_call.1} parent=39 // pred_region
          %s258 = sand.u32 %s30, 1
          %s259 = scalar_lea.sflag [#allocation5], %s258
          %s260 = sand.u32 %s30, 1
          %s261 = smul.addr %s260, 32
          %s262 = scalar_lea.vmem [#allocation4], %s261
          %s263 = smul.u32 4, %s20
          %s265 = ssub.s32 512, 512
          %266 = vsyncadd %s259, %s265
          %s267 = smul.addr %s263, 2
          %s268 = smul.addr %s267, 64
          %s269 = scalar_lea.hbm %s0, %s268
          %s270 = sshll.u32 %s262, 4
          %s271 = int_to_ptr.vmem [resolvable:$true] %s270
          %276 = dma.hbm_to_vmem [thread:$0]  %s269, 512, %s271, %s259, 64, 64, 4
        $region44: #{tpu_custom_call.1} parent=39 // pred_fallthru
          _
      $region40: #{tpu_custom_call.1} parent=5 // pred_fallthru
        _
      %p277 = scmp.le.s32.totalorder 1, %s20
      %p278 = scmp.lt.s32.totalorder %s20, 5
      %p279 = pnand %p277, %p278
      %p280 = pneg %p279
      // Predicated region
      $region45: #{tpu_custom_call.1} parent=5 // pred_check
        _
      $region46: #{tpu_custom_call.1} parent=5 // pred_check_branch
        %282 = sbr.rel (%p279) target = $region48
      $region47: #{tpu_custom_call.1} parent=5 // pred_region
        %s283 = ssub.s32 %s20, 1
        %s284 = sand.u32 %s33, 1
        %s285 = scalar_lea.sflag [#allocation5], %s284
        %s286 = sand.u32 %s33, 1
        %s287 = smul.addr %s286, 32
        %s288 = scalar_lea.vmem [#allocation4], %s287
        // Predicated region
        $region49: #{tpu_custom_call.1} parent=47 // pred_check
          %p289 = pneg %p46
        $region50: #{tpu_custom_call.1} parent=47 // pred_check_branch
          %291 = sbr.rel (%p289) target = $region52
        $region51: #{tpu_custom_call.1} parent=47 // pred_region
          %292 = dma.done %s285, 512
        $region52: #{tpu_custom_call.1} parent=47 // pred_fallthru
          _
        // Predicated region
        $region53: #{tpu_custom_call.1} parent=47 // pred_check
          %p293 = pneg %p67
        $region54: #{tpu_custom_call.1} parent=47 // pred_check_branch
          %295 = sbr.rel (%p293) target = $region56
        $region55: #{tpu_custom_call.1} parent=47 // pred_region
          %296 = dma.done [#allocation8], 9216
        $region56: #{tpu_custom_call.1} parent=47 // pred_fallthru
          _
        // Predicated region
        $region57: #{tpu_custom_call.1} parent=47 // pred_check
          %p297 = pneg %p88
        $region58: #{tpu_custom_call.1} parent=47 // pred_check_branch
          %299 = sbr.rel (%p297) target = $region60
        $region59: #{tpu_custom_call.1} parent=47 // pred_region
          %300 = dma.done [#allocation8], 9216
        $region60: #{tpu_custom_call.1} parent=47 // pred_fallthru
          _
        %s301 = sand.u32 %s33, 1
        %s302 = scalar_lea.sflag [#allocation5], %s301
        %s303 = sand.u32 %s33, 1
        %s304 = smul.addr %s303, 32
        %s305 = scalar_lea.vmem [#allocation4], %s304
        %p306 = pneg %p46
        %p307 = pneg %p43
        %p308 = pneg %p67
        %p309 = pneg %p64
        %p310 = pneg %p88
        %p311 = pneg %p85
        %p312 = pneg %p109
        %p313 = pneg %p106
        %p314 = pneg %p130
        %p315 = pneg %p127
        %p316 = pneg %p151
        %p317 = pneg %p148
        %p318 = pneg %p172
        %p319 = pneg %p169
        %p320 = pneg %p198
        %p321 = pneg %p195
        %s322 = sand.u32 %s185, 1
        %s323 = scalar_lea.sflag [#allocation6], %s322
        %s324 = sand.u32 %s185, 1
        %s325 = smul.addr %s324, 64
        %s326 = scalar_lea.vmem [#allocation10], %s325
        %s327 = smul.u32 4, %s25
        %s328 = smul.u32 4, %s25
        %v330 = vld [vmem:[%s288] sm:$0xf]
        %v331 = vld [vmem:[%s288 + $0x4] sm:$0xf]
        %v332 = vld [vmem:[%s288 + $0x8] sm:$0xf]
        %v333 = vld [vmem:[%s288 + $0xc] sm:$0xf]
        %v334 = vld [vmem:[%s288 + $0x10] sm:$0xf]
        %v335 = vld [vmem:[%s288 + $0x14] sm:$0xf]
        %v336 = vld [vmem:[%s288 + $0x18] sm:$0xf]
        %v337 = vld [vmem:[%s288 + $0x1c] sm:$0xf]
        %vm346 = vcmask 1041408
        %vm347 = vcmask 1045508
        %vm348 = vmor %vm346, %vm347
        %v349 = vrot.slane %v330, 6
        %v350 = vrot.slane %v349, 4
        %v351 = vrot.slane %v331, 6
        %v352 = vsel %vm348, %v350, %v351
        %v353 = vrot.slane %v351, 4
        %v354 = vrot.slane %v332, 6
        %v355 = vrot.slane %v354, 4
        %v356 = vrot.slane %v333, 6
        %v357 = vsel %vm348, %v355, %v356
        %v358 = vrot.slane %v356, 4
        %v359 = vrot.slane %v334, 6
        %v360 = vrot.slane %v359, 4
        %v361 = vrot.slane %v335, 6
        %v362 = vsel %vm348, %v360, %v361
        %v363 = vrot.slane %v361, 4
        %v364 = vrot.slane %v336, 6
        %v365 = vrot.slane %v364, 4
        %v366 = vrot.slane %v337, 6
        %v367 = vsel %vm348, %v365, %v366
        %v368 = vrot.slane %v366, 4
        %381 = vst [vmem:[#allocation2] sm:$0xc] %v349
        %382 = vst [vmem:[#allocation2 + $0x4] sm:$0xf] %v352
        %383 = vst [vmem:[#allocation2 + $0x8] sm:$0x3] %v353
        %384 = vst [vmem:[#allocation2 + $0xc] sm:$0xc] %v354
        %385 = vst [vmem:[#allocation2 + $0x10] sm:$0xf] %v357
        %386 = vst [vmem:[#allocation2 + $0x14] sm:$0x3] %v358
        %387 = vst [vmem:[#allocation2 + $0x18] sm:$0xc] %v359
        %388 = vst [vmem:[#allocation2 + $0x1c] sm:$0xf] %v362
        %389 = vst [vmem:[#allocation2 + $0x20] sm:$0x3] %v363
        %390 = vst [vmem:[#allocation2 + $0x24] sm:$0xc] %v364
        %391 = vst [vmem:[#allocation2 + $0x28] sm:$0xf] %v367
        %392 = vst [vmem:[#allocation2 + $0x2c] sm:$0x3] %v368
        %393 = vst [vmem:[#allocation2] sm:$0x3] 0
        %394 = vst [vmem:[#allocation2 + $0xc] sm:$0x3] 0
        %395 = vst [vmem:[#allocation2 + $0x18] sm:$0x3] 0
        %396 = vst [vmem:[#allocation2 + $0x24] sm:$0x3] 0
        %397 = vst [vmem:[#allocation2 + $0x8] sm:$0xc] 0
        %398 = vst [vmem:[#allocation2 + $0x14] sm:$0xc] 0
        %399 = vst [vmem:[#allocation2 + $0x20] sm:$0xc] 0
        %400 = vst [vmem:[#allocation2 + $0x2c] sm:$0xc] 0
        %v401 = vld [vmem:[#allocation2] sm:$0xf]
        %v402 = vld [vmem:[#allocation2 + $0x4] sm:$0xf]
        %v403 = vld [vmem:[#allocation2 + $0xc] sm:$0xf]
        %v404 = vld [vmem:[#allocation2 + $0x10] sm:$0xf]
        %v405 = vld [vmem:[#allocation2 + $0x18] sm:$0xf]
        %v406 = vld [vmem:[#allocation2 + $0x1c] sm:$0xf]
        %v407 = vld [vmem:[#allocation2 + $0x24] sm:$0xf]
        %v408 = vld [vmem:[#allocation2 + $0x28] sm:$0xf]
        %v409 = vld [vmem:[#allocation7] sm:$0xf]
        %v410 = vld [vmem:[#allocation7 + $0x4] sm:$0xf]
        %v411 = vld [vmem:[#allocation7 + $0x8] sm:$0xf]
        %v412 = vld [vmem:[#allocation7 + $0xc] sm:$0xf]
        %v413 = vld [vmem:[#allocation7 + $0x10] sm:$0xf]
        %v414 = vld [vmem:[#allocation7 + $0x14] sm:$0xf]
        %v415 = vld [vmem:[#allocation7 + $0x18] sm:$0xf]
        %v416 = vld [vmem:[#allocation7 + $0x1c] sm:$0xf]
        %v417 = vld [vmem:[#allocation7 + $0x20] sm:$0xf]
        %v418 = vld [vmem:[#allocation7 + $0x24] sm:$0xf]
        %v419 = vld [vmem:[#allocation7 + $0x28] sm:$0xf]
        %v420 = vld [vmem:[#allocation7 + $0x2c] sm:$0xf]
        %v421 = vld [vmem:[#allocation7 + $0x30] sm:$0xf]
        %v422 = vld [vmem:[#allocation7 + $0x34] sm:$0xf]
        %v423 = vld [vmem:[#allocation7 + $0x38] sm:$0xf]
        %v424 = vld [vmem:[#allocation7 + $0x3c] sm:$0xf]
        %v425 = vld [vmem:[#allocation2] sm:$0xf]
        %v426 = vld [vmem:[#allocation2 + $0x4] sm:$0xf]
        %v427 = vld [vmem:[#allocation2 + $0x8] sm:$0x1]
        %v428 = vld [vmem:[#allocation2 + $0xc] sm:$0xf]
        %v429 = vld [vmem:[#allocation2 + $0x10] sm:$0xf]
        %v430 = vld [vmem:[#allocation2 + $0x14] sm:$0x1]
        %v431 = vld [vmem:[#allocation2 + $0x18] sm:$0xf]
        %v432 = vld [vmem:[#allocation2 + $0x1c] sm:$0xf]
        %v433 = vld [vmem:[#allocation2 + $0x20] sm:$0x1]
        %v434 = vld [vmem:[#allocation2 + $0x24] sm:$0xf]
        %v435 = vld [vmem:[#allocation2 + $0x28] sm:$0xf]
        %v436 = vld [vmem:[#allocation2 + $0x2c] sm:$0x1]
        %vm437 = vsmask.f32 3328
        %vm438 = vsmask.f32 7440
        %vm439 = vmor %vm437, %vm438
        %v441 = vshrl.u32 %v425, 16
        %v443 = vrot.slane %v441, 4
        %v444 = vshll.u32 %v425, 16
        %v446 = vrot.slane %v444, 5
        %v447 = vor.u32 %v443, %v446
        %v448 = vrot.slane %v447, 4
        %v450 = vshll.u32 %v426, 16
        %v452 = vrot.slane %v450, 5
        %v453 = vsel %vm439, %v448, %v452
        %v454 = vshrl.u32 %v426, 16
        %v456 = vrot.slane %v454, 4
        %v457 = vor.u32 %v456, %v452
        %v458 = vrot.slane %v457, 4
        %v460 = vshll.u32 %v427, 16
        %v462 = vrot.slane %v460, 5
        %v463 = vsel %vm439, %v458, %v462
        %v465 = vshrl.u32 %v428, 16
        %v467 = vrot.slane %v465, 4
        %v468 = vshll.u32 %v428, 16
        %v470 = vrot.slane %v468, 5
        %v471 = vor.u32 %v467, %v470
        %v472 = vrot.slane %v471, 4
        %v474 = vshll.u32 %v429, 16
        %v476 = vrot.slane %v474, 5
        %v477 = vsel %vm439, %v472, %v476
        %v478 = vshrl.u32 %v429, 16
        %v480 = vrot.slane %v478, 4
        %v481 = vor.u32 %v480, %v476
        %v482 = vrot.slane %v481, 4
        %v484 = vshll.u32 %v430, 16
        %v486 = vrot.slane %v484, 5
        %v487 = vsel %vm439, %v482, %v486
        %v489 = vshrl.u32 %v431, 16
        %v491 = vrot.slane %v489, 4
        %v492 = vshll.u32 %v431, 16
        %v494 = vrot.slane %v492, 5
        %v495 = vor.u32 %v491, %v494
        %v496 = vrot.slane %v495, 4
        %v498 = vshll.u32 %v432, 16
        %v500 = vrot.slane %v498, 5
        %v501 = vsel %vm439, %v496, %v500
        %v502 = vshrl.u32 %v432, 16
        %v504 = vrot.slane %v502, 4
        %v505 = vor.u32 %v504, %v500
        %v506 = vrot.slane %v505, 4
        %v508 = vshll.u32 %v433, 16
        %v510 = vrot.slane %v508, 5
        %v511 = vsel %vm439, %v506, %v510
        %v513 = vshrl.u32 %v434, 16
        %v515 = vrot.slane %v513, 4
        %v516 = vshll.u32 %v434, 16
        %v518 = vrot.slane %v516, 5
        %v519 = vor.u32 %v515, %v518
        %v520 = vrot.slane %v519, 4
        %v522 = vshll.u32 %v435, 16
        %v524 = vrot.slane %v522, 5
        %v525 = vsel %vm439, %v520, %v524
        %v526 = vshrl.u32 %v435, 16
        %v528 = vrot.slane %v526, 4
        %v529 = vor.u32 %v528, %v524
        %v530 = vrot.slane %v529, 4
        %v532 = vshll.u32 %v436, 16
        %v534 = vrot.slane %v532, 5
        %v535 = vsel %vm439, %v530, %v534
        %s536 = scalar_lea.vmem [#allocation7], 64
        %v537 = vld [vmem:[%s536] sm:$0xf]
        %v538 = vld [vmem:[%s536 + $0x4] sm:$0xf]
        %v539 = vld [vmem:[%s536 + $0x8] sm:$0xf]
        %v540 = vld [vmem:[%s536 + $0xc] sm:$0xf]
        %v541 = vld [vmem:[%s536 + $0x10] sm:$0xf]
        %v542 = vld [vmem:[%s536 + $0x14] sm:$0xf]
        %v543 = vld [vmem:[%s536 + $0x18] sm:$0xf]
        %v544 = vld [vmem:[%s536 + $0x1c] sm:$0xf]
        %v545 = vld [vmem:[%s536 + $0x20] sm:$0xf]
        %v546 = vld [vmem:[%s536 + $0x24] sm:$0xf]
        %v547 = vld [vmem:[%s536 + $0x28] sm:$0xf]
        %v548 = vld [vmem:[%s536 + $0x2c] sm:$0xf]
        %v549 = vld [vmem:[%s536 + $0x30] sm:$0xf]
        %v550 = vld [vmem:[%s536 + $0x34] sm:$0xf]
        %v551 = vld [vmem:[%s536 + $0x38] sm:$0xf]
        %v552 = vld [vmem:[%s536 + $0x3c] sm:$0xf]
        %v553 = vunpack.c.l.b16 %v453
        %v554 = vunpack.c.l.b16 %v463
        %v555 = vunpack.c.l.b16 %v477
        %v556 = vunpack.c.l.b16 %v487
        %v557 = vunpack.c.l.b16 %v501
        %v558 = vunpack.c.l.b16 %v511
        %v559 = vunpack.c.l.b16 %v525
        %v560 = vunpack.c.l.b16 %v535
        %v561 = vpack.c.b16 %v554, %v553
        %v562 = vpack.c.b16 %v556, %v555
        %v563 = vpack.c.b16 %v558, %v557
        %v564 = vpack.c.b16 %v560, %v559
        %v585 = vunpack.c.l.b16 %v537
        %v586 = vunpack.c.l.b16 %v538
        %v587 = vunpack.c.l.b16 %v539
        %v588 = vunpack.c.l.b16 %v540
        %v589 = vunpack.c.l.b16 %v541
        %v590 = vunpack.c.l.b16 %v542
        %v591 = vunpack.c.l.b16 %v543
        %v592 = vunpack.c.l.b16 %v544
        %v593 = vunpack.c.l.b16 %v545
        %v594 = vunpack.c.l.b16 %v546
        %v595 = vunpack.c.l.b16 %v547
        %v596 = vunpack.c.l.b16 %v548
        %v597 = vunpack.c.l.b16 %v549
        %v598 = vunpack.c.l.b16 %v550
        %v599 = vunpack.c.l.b16 %v551
        %v600 = vunpack.c.l.b16 %v552
        %v601 = vpack.c.b16 %v586, %v585
        %v602 = vpack.c.b16 %v588, %v587
        %v603 = vpack.c.b16 %v590, %v589
        %v604 = vpack.c.b16 %v592, %v591
        %v605 = vpack.c.b16 %v594, %v593
        %v606 = vpack.c.b16 %v596, %v595
        %v607 = vpack.c.b16 %v598, %v597
        %v608 = vpack.c.b16 %v600, %v599
        %617 = vmatprep.subr.bf16.mxu0 0
        %618 = vmatpush1.bf16.msra.mxu0 %v601
        %619 = vmatprep.subr.bf16.mxu0 0
        %620 = vmatpush1.bf16.msra.mxu0 %v602
        %621 = vmatprep.subr.bf16.mxu0 0
        %622 = vmatpush1.bf16.msra.mxu0 %v603
        %623 = vmatprep.subr.bf16.mxu0 0
        %624 = vmatpush1.bf16.msra.mxu0 %v604
        %625 = vmatprep.subr.bf16.mxu0 0
        %626 = vmatpush1.bf16.msra.mxu0 %v605
        %627 = vmatprep.subr.bf16.mxu0 0
        %628 = vmatpush1.bf16.msra.mxu0 %v606
        %629 = vmatprep.subr.bf16.mxu0 0
        %630 = vmatpush1.bf16.msra.mxu0 %v607
        %631 = vmatprep.subr.bf16.mxu0 0
        %632 = vmatpush1.bf16.msra.mxu0 %v608
        %633 = vmatprep.subr.bf16.mxu0 0
        %634 = vmatpush1.bf16.msra.mxu0 0
        %635 = vmatprep.subr.bf16.mxu0 0
        %636 = vmatpush1.bf16.msra.mxu0 0
        %637 = vmatprep.subr.bf16.mxu0 0
        %638 = vmatpush1.bf16.msra.mxu0 0
        %639 = vmatprep.subr.bf16.mxu0 0
        %640 = vmatpush1.bf16.msra.mxu0 0
        %641 = vmatprep.subr.bf16.mxu0 0
        %642 = vmatpush1.bf16.msra.mxu0 0
        %643 = vmatprep.subr.bf16.mxu0 0
        %644 = vmatpush1.bf16.msra.mxu0 0
        %645 = vmatprep.subr.bf16.mxu0 0
        %646 = vmatpush1.bf16.msra.mxu0 0
        %647 = vmatprep.subr.bf16.mxu0 0
        %648 = vmatpush1.bf16.msra.mxu0 0
        %649 = vmatprep.mubr.bf16.mxu0 0
        %650 = vmatmul.mubr.bf16.gmra.mrb[0].mxu0 %v561
        %v651 = vpop.f32.mrb[0].mxu0
        %v652 = vadd.f32 0.0, %v651
        %v653 = vpop.f32.mrb[0].mxu0
        %v654 = vpop.f32.mrb[0].mxu0
        %v655 = vadd.f32 0.0, %v654
        %v656 = vpop.f32.mrb[0].mxu0
        %657 = vmatprep.mubr.bf16.mxu0 0
        %658 = vmatmul.mubr.bf16.gmra.mrb[0].mxu0 %v562
        %v659 = vpop.f32.mrb[0].mxu0
        %v660 = vadd.f32 0.0, %v659
        %v661 = vpop.f32.mrb[0].mxu0
        %v662 = vpop.f32.mrb[0].mxu0
        %v663 = vadd.f32 0.0, %v662
        %v664 = vpop.f32.mrb[0].mxu0
        %665 = vmatprep.mubr.bf16.mxu0 0
        %666 = vmatmul.mubr.bf16.gmra.mrb[0].mxu0 %v563
        %v667 = vpop.f32.mrb[0].mxu0
        %v668 = vadd.f32 0.0, %v667
        %v669 = vpop.f32.mrb[0].mxu0
        %v670 = vpop.f32.mrb[0].mxu0
        %v671 = vadd.f32 0.0, %v670
        %v672 = vpop.f32.mrb[0].mxu0
        %673 = vmatprep.mubr.bf16.mxu0 0
        %674 = vmatmul.mubr.bf16.gmra.mrb[0].mxu0 %v564
        %v675 = vpop.f32.mrb[0].mxu0
        %v676 = vadd.f32 0.0, %v675
        %v677 = vpop.f32.mrb[0].mxu0
        %v678 = vpop.f32.mrb[0].mxu0
        %v679 = vadd.f32 0.0, %v678
        %v680 = vpop.f32.mrb[0].mxu0
        %681 = vdwg.mxu0
        %v690 = vunpack.c.l.b16 %v401
        %v691 = vunpack.c.l.b16 %v402
        %v692 = vunpack.c.l.b16 %v403
        %v693 = vunpack.c.l.b16 %v404
        %v694 = vunpack.c.l.b16 %v405
        %v695 = vunpack.c.l.b16 %v406
        %v696 = vunpack.c.l.b16 %v407
        %v697 = vunpack.c.l.b16 %v408
        %v698 = vpack.c.b16 %v691, %v690
        %v699 = vpack.c.b16 %v693, %v692
        %v700 = vpack.c.b16 %v695, %v694
        %v701 = vpack.c.b16 %v697, %v696
        %v722 = vunpack.c.l.b16 %v409
        %v723 = vunpack.c.l.b16 %v410
        %v724 = vunpack.c.l.b16 %v411
        %v725 = vunpack.c.l.b16 %v412
        %v726 = vunpack.c.l.b16 %v413
        %v727 = vunpack.c.l.b16 %v414
        %v728 = vunpack.c.l.b16 %v415
        %v729 = vunpack.c.l.b16 %v416
        %v730 = vunpack.c.l.b16 %v417
        %v731 = vunpack.c.l.b16 %v418
        %v732 = vunpack.c.l.b16 %v419
        %v733 = vunpack.c.l.b16 %v420
        %v734 = vunpack.c.l.b16 %v421
        %v735 = vunpack.c.l.b16 %v422
        %v736 = vunpack.c.l.b16 %v423
        %v737 = vunpack.c.l.b16 %v424
        %v738 = vpack.c.b16 %v723, %v722
        %v739 = vpack.c.b16 %v725, %v724
        %v740 = vpack.c.b16 %v727, %v726
        %v741 = vpack.c.b16 %v729, %v728
        %v742 = vpack.c.b16 %v731, %v730
        %v743 = vpack.c.b16 %v733, %v732
        %v744 = vpack.c.b16 %v735, %v734
        %v745 = vpack.c.b16 %v737, %v736
        %754 = vmatprep.subr.bf16.mxu0 0
        %755 = vmatpush1.bf16.msra.mxu0 %v738
        %756 = vmatprep.subr.bf16.mxu0 0
        %757 = vmatpush1.bf16.msra.mxu0 %v739
        %758 = vmatprep.subr.bf16.mxu0 0
        %759 = vmatpush1.bf16.msra.mxu0 %v740
        %760 = vmatprep.subr.bf16.mxu0 0
        %761 = vmatpush1.bf16.msra.mxu0 %v741
        %762 = vmatprep.subr.bf16.mxu0 0
        %763 = vmatpush1.bf16.msra.mxu0 %v742
        %764 = vmatprep.subr.bf16.mxu0 0
        %765 = vmatpush1.bf16.msra.mxu0 %v743
        %766 = vmatprep.subr.bf16.mxu0 0
        %767 = vmatpush1.bf16.msra.mxu0 %v744
        %768 = vmatprep.subr.bf16.mxu0 0
        %769 = vmatpush1.bf16.msra.mxu0 %v745
        %770 = vmatprep.subr.bf16.mxu0 0
        %771 = vmatpush1.bf16.msra.mxu0 0
        %772 = vmatprep.subr.bf16.mxu0 0
        %773 = vmatpush1.bf16.msra.mxu0 0
        %774 = vmatprep.subr.bf16.mxu0 0
        %775 = vmatpush1.bf16.msra.mxu0 0
        %776 = vmatprep.subr.bf16.mxu0 0
        %777 = vmatpush1.bf16.msra.mxu0 0
        %778 = vmatprep.subr.bf16.mxu0 0
        %779 = vmatpush1.bf16.msra.mxu0 0
        %780 = vmatprep.subr.bf16.mxu0 0
        %781 = vmatpush1.bf16.msra.mxu0 0
        %782 = vmatprep.subr.bf16.mxu0 0
        %783 = vmatpush1.bf16.msra.mxu0 0
        %784 = vmatprep.subr.bf16.mxu0 0
        %785 = vmatpush1.bf16.msra.mxu0 0
        %786 = vmatprep.mubr.bf16.mxu0 0
        %787 = vmatmul.mubr.bf16.gmra.mrb[0].mxu0 %v698
        %v788 = vpop.f32.mrb[0].mxu0
        %v789 = vadd.f32 %v652, %v788
        %v790 = vpop.f32.mrb[0].mxu0
        %v791 = vpop.f32.mrb[0].mxu0
        %v792 = vadd.f32 %v655, %v791
        %v793 = vpop.f32.mrb[0].mxu0
        %794 = vmatprep.mubr.bf16.mxu0 0
        %795 = vmatmul.mubr.bf16.gmra.mrb[0].mxu0 %v699
        %v796 = vpop.f32.mrb[0].mxu0
        %v797 = vadd.f32 %v660, %v796
        %v798 = vpop.f32.mrb[0].mxu0
        %v799 = vpop.f32.mrb[0].mxu0
        %v800 = vadd.f32 %v663, %v799
        %v801 = vpop.f32.mrb[0].mxu0
        %802 = vmatprep.mubr.bf16.mxu0 0
        %803 = vmatmul.mubr.bf16.gmra.mrb[0].mxu0 %v700
        %v804 = vpop.f32.mrb[0].mxu0
        %v805 = vadd.f32 %v668, %v804
        %v806 = vpop.f32.mrb[0].mxu0
        %v807 = vpop.f32.mrb[0].mxu0
        %v808 = vadd.f32 %v671, %v807
        %v809 = vpop.f32.mrb[0].mxu0
        %810 = vmatprep.mubr.bf16.mxu0 0
        %811 = vmatmul.mubr.bf16.gmra.mrb[0].mxu0 %v701
        %v812 = vpop.f32.mrb[0].mxu0
        %v813 = vadd.f32 %v676, %v812
        %v814 = vpop.f32.mrb[0].mxu0
        %v815 = vpop.f32.mrb[0].mxu0
        %v816 = vadd.f32 %v679, %v815
        %v817 = vpop.f32.mrb[0].mxu0
        %818 = vdwg.mxu0
        %v819 = vld [vmem:[#allocation2] sm:$0xe]
        %v820 = vld [vmem:[#allocation2 + $0xc] sm:$0xe]
        %v821 = vld [vmem:[#allocation2 + $0x18] sm:$0xe]
        %v822 = vld [vmem:[#allocation2 + $0x24] sm:$0xe]
        %vm835 = vcmask 1042432
        %vm836 = vcmask 1046532
        %vm837 = vmor %vm835, %vm836
        %v838 = vrot.slane %v819, 5
        %v839 = vrot.slane %v838, 4
        %v840 = vrot.slane %v426, 5
        %v841 = vsel %vm837, %v839, %v840
        %v842 = vrot.slane %v840, 4
        %v843 = vrot.slane %v427, 5
        %v844 = vsel %vm837, %v842, %v843
        %v845 = vrot.slane %v820, 5
        %v846 = vrot.slane %v845, 4
        %v847 = vrot.slane %v429, 5
        %v848 = vsel %vm837, %v846, %v847
        %v849 = vrot.slane %v847, 4
        %v850 = vrot.slane %v430, 5
        %v851 = vsel %vm837, %v849, %v850
        %v852 = vrot.slane %v821, 5
        %v853 = vrot.slane %v852, 4
        %v854 = vrot.slane %v432, 5
        %v855 = vsel %vm837, %v853, %v854
        %v856 = vrot.slane %v854, 4
        %v857 = vrot.slane %v433, 5
        %v858 = vsel %vm837, %v856, %v857
        %v859 = vrot.slane %v822, 5
        %v860 = vrot.slane %v859, 4
        %v861 = vrot.slane %v435, 5
        %v862 = vsel %vm837, %v860, %v861
        %v863 = vrot.slane %v861, 4
        %v864 = vrot.slane %v436, 5
        %v865 = vsel %vm837, %v863, %v864
        %s866 = scalar_lea.vmem [#allocation7], 128
        %v867 = vld [vmem:[%s866] sm:$0xf]
        %v868 = vld [vmem:[%s866 + $0x4] sm:$0xf]
        %v869 = vld [vmem:[%s866 + $0x8] sm:$0xf]
        %v870 = vld [vmem:[%s866 + $0xc] sm:$0xf]
        %v871 = vld [vmem:[%s866 + $0x10] sm:$0xf]
        %v872 = vld [vmem:[%s866 + $0x14] sm:$0xf]
        %v873 = vld [vmem:[%s866 + $0x18] sm:$0xf]
        %v874 = vld [vmem:[%s866 + $0x1c] sm:$0xf]
        %v875 = vld [vmem:[%s866 + $0x20] sm:$0xf]
        %v876 = vld [vmem:[%s866 + $0x24] sm:$0xf]
        %v877 = vld [vmem:[%s866 + $0x28] sm:$0xf]
        %v878 = vld [vmem:[%s866 + $0x2c] sm:$0xf]
        %v879 = vld [vmem:[%s866 + $0x30] sm:$0xf]
        %v880 = vld [vmem:[%s866 + $0x34] sm:$0xf]
        %v881 = vld [vmem:[%s866 + $0x38] sm:$0xf]
        %v882 = vld [vmem:[%s866 + $0x3c] sm:$0xf]
        %v883 = vunpack.c.l.b16 %v841
        %v884 = vunpack.c.l.b16 %v844
        %v885 = vunpack.c.l.b16 %v848
        %v886 = vunpack.c.l.b16 %v851
        %v887 = vunpack.c.l.b16 %v855
        %v888 = vunpack.c.l.b16 %v858
        %v889 = vunpack.c.l.b16 %v862
        %v890 = vunpack.c.l.b16 %v865
        %v891 = vpack.c.b16 %v884, %v883
        %v892 = vpack.c.b16 %v886, %v885
        %v893 = vpack.c.b16 %v888, %v887
        %v894 = vpack.c.b16 %v890, %v889
        %v915 = vunpack.c.l.b16 %v867
        %v916 = vunpack.c.l.b16 %v868
        %v917 = vunpack.c.l.b16 %v869
        %v918 = vunpack.c.l.b16 %v870
        %v919 = vunpack.c.l.b16 %v871
        %v920 = vunpack.c.l.b16 %v872
        %v921 = vunpack.c.l.b16 %v873
        %v922 = vunpack.c.l.b16 %v874
        %v923 = vunpack.c.l.b16 %v875
        %v924 = vunpack.c.l.b16 %v876
        %v925 = vunpack.c.l.b16 %v877
        %v926 = vunpack.c.l.b16 %v878
        %v927 = vunpack.c.l.b16 %v879
        %v928 = vunpack.c.l.b16 %v880
        %v929 = vunpack.c.l.b16 %v881
        %v930 = vunpack.c.l.b16 %v882
        %v931 = vpack.c.b16 %v916, %v915
        %v932 = vpack.c.b16 %v918, %v917
        %v933 = vpack.c.b16 %v920, %v919
        %v934 = vpack.c.b16 %v922, %v921
        %v935 = vpack.c.b16 %v924, %v923
        %v936 = vpack.c.b16 %v926, %v925
        %v937 = vpack.c.b16 %v928, %v927
        %v938 = vpack.c.b16 %v930, %v929
        %947 = vmatprep.subr.bf16.mxu0 0
        %948 = vmatpush1.bf16.msra.mxu0 %v931
        %949 = vmatprep.subr.bf16.mxu0 0
        %950 = vmatpush1.bf16.msra.mxu0 %v932
        %951 = vmatprep.subr.bf16.mxu0 0
        %952 = vmatpush1.bf16.msra.mxu0 %v933
        %953 = vmatprep.subr.bf16.mxu0 0
        %954 = vmatpush1.bf16.msra.mxu0 %v934
        %955 = vmatprep.subr.bf16.mxu0 0
        %956 = vmatpush1.bf16.msra.mxu0 %v935
        %957 = vmatprep.subr.bf16.mxu0 0
        %958 = vmatpush1.bf16.msra.mxu0 %v936
        %959 = vmatprep.subr.bf16.mxu0 0
        %960 = vmatpush1.bf16.msra.mxu0 %v937
        %961 = vmatprep.subr.bf16.mxu0 0
        %962 = vmatpush1.bf16.msra.mxu0 %v938
        %963 = vmatprep.subr.bf16.mxu0 0
        %964 = vmatpush1.bf16.msra.mxu0 0
        %965 = vmatprep.subr.bf16.mxu0 0
        %966 = vmatpush1.bf16.msra.mxu0 0
        %967 = vmatprep.subr.bf16.mxu0 0
        %968 = vmatpush1.bf16.msra.mxu0 0
        %969 = vmatprep.subr.bf16.mxu0 0
        %970 = vmatpush1.bf16.msra.mxu0 0
        %971 = vmatprep.subr.bf16.mxu0 0
        %972 = vmatpush1.bf16.msra.mxu0 0
        %973 = vmatprep.subr.bf16.mxu0 0
        %974 = vmatpush1.bf16.msra.mxu0 0
        %975 = vmatprep.subr.bf16.mxu0 0
        %976 = vmatpush1.bf16.msra.mxu0 0
        %977 = vmatprep.subr.bf16.mxu0 0
        %978 = vmatpush1.bf16.msra.mxu0 0
        %979 = vmatprep.mubr.bf16.mxu0 0
        %980 = vmatmul.mubr.bf16.gmra.mrb[0].mxu0 %v891
        %v981 = vpop.f32.mrb[0].mxu0
        %v982 = vadd.f32 0.0, %v981
        %v983 = vpop.f32.mrb[0].mxu0
        %v984 = vpop.f32.mrb[0].mxu0
        %v985 = vadd.f32 0.0, %v984
        %v986 = vpop.f32.mrb[0].mxu0
        %987 = vmatprep.mubr.bf16.mxu0 0
        %988 = vmatmul.mubr.bf16.gmra.mrb[0].mxu0 %v892
        %v989 = vpop.f32.mrb[0].mxu0
        %v990 = vadd.f32 0.0, %v989
        %v991 = vpop.f32.mrb[0].mxu0
        %v992 = vpop.f32.mrb[0].mxu0
        %v993 = vadd.f32 0.0, %v992
        %v994 = vpop.f32.mrb[0].mxu0
        %995 = vmatprep.mubr.bf16.mxu0 0
        %996 = vmatmul.mubr.bf16.gmra.mrb[0].mxu0 %v893
        %v997 = vpop.f32.mrb[0].mxu0
        %v998 = vadd.f32 0.0, %v997
        %v999 = vpop.f32.mrb[0].mxu0
        %v1000 = vpop.f32.mrb[0].mxu0
        %v1001 = vadd.f32 0.0, %v1000
        %v1002 = vpop.f32.mrb[0].mxu0
        %1003 = vmatprep.mubr.bf16.mxu0 0
        %1004 = vmatmul.mubr.bf16.gmra.mrb[0].mxu0 %v894
        %v1005 = vpop.f32.mrb[0].mxu0
        %v1006 = vadd.f32 0.0, %v1005
        %v1007 = vpop.f32.mrb[0].mxu0
        %v1008 = vpop.f32.mrb[0].mxu0
        %v1009 = vadd.f32 0.0, %v1008
        %v1010 = vpop.f32.mrb[0].mxu0
        %1011 = vdwg.mxu0
        %v1012 = vadd.f32 %v789, %v982
        %v1013 = vadd.f32 %v792, %v985
        %v1014 = vadd.f32 %v797, %v990
        %v1015 = vadd.f32 %v800, %v993
        %v1016 = vadd.f32 %v805, %v998
        %v1017 = vadd.f32 %v808, %v1001
        %v1018 = vadd.f32 %v813, %v1006
        %v1019 = vadd.f32 %v816, %v1009
        %v1020 = vld [vmem:[#allocation2 + $0x8] sm:$0x3]
        %v1021 = vld [vmem:[#allocation2 + $0x14] sm:$0x3]
        %v1022 = vld [vmem:[#allocation2 + $0x20] sm:$0x3]
        %v1023 = vld [vmem:[#allocation2 + $0x2c] sm:$0x3]
        %vm1024 = vsmask.f32 2304
        %vm1025 = vsmask.f32 6416
        %vm1026 = vmor %vm1024, %vm1025
        %v1028 = vshrl.u32 %v819, 16
        %v1030 = vrot.slane %v1028, 5
        %v1031 = vshll.u32 %v819, 16
        %v1033 = vrot.slane %v1031, 6
        %v1034 = vor.u32 %v1030, %v1033
        %v1035 = vrot.slane %v1034, 4
        %v1036 = vrot.slane %v454, 5
        %v1037 = vrot.slane %v450, 6
        %v1038 = vor.u32 %v1036, %v1037
        %v1039 = vsel %vm1026, %v1035, %v1038
        %v1040 = vrot.slane %v1038, 4
        %v1042 = vshrl.u32 %v1020, 16
        %v1044 = vrot.slane %v1042, 5
        %v1045 = vshll.u32 %v1020, 16
        %v1047 = vrot.slane %v1045, 6
        %v1048 = vor.u32 %v1044, %v1047
        %v1049 = vsel %vm1026, %v1040, %v1048
        %v1051 = vshrl.u32 %v820, 16
        %v1053 = vrot.slane %v1051, 5
        %v1054 = vshll.u32 %v820, 16
        %v1056 = vrot.slane %v1054, 6
        %v1057 = vor.u32 %v1053, %v1056
        %v1058 = vrot.slane %v1057, 4
        %v1059 = vrot.slane %v478, 5
        %v1060 = vrot.slane %v474, 6
        %v1061 = vor.u32 %v1059, %v1060
        %v1062 = vsel %vm1026, %v1058, %v1061
        %v1063 = vrot.slane %v1061, 4
        %v1065 = vshrl.u32 %v1021, 16
        %v1067 = vrot.slane %v1065, 5
        %v1068 = vshll.u32 %v1021, 16
        %v1070 = vrot.slane %v1068, 6
        %v1071 = vor.u32 %v1067, %v1070
        %v1072 = vsel %vm1026, %v1063, %v1071
        %v1074 = vshrl.u32 %v821, 16
        %v1076 = vrot.slane %v1074, 5
        %v1077 = vshll.u32 %v821, 16
        %v1079 = vrot.slane %v1077, 6
        %v1080 = vor.u32 %v1076, %v1079
        %v1081 = vrot.slane %v1080, 4
        %v1082 = vrot.slane %v502, 5
        %v1083 = vrot.slane %v498, 6
        %v1084 = vor.u32 %v1082, %v1083
        %v1085 = vsel %vm1026, %v1081, %v1084
        %v1086 = vrot.slane %v1084, 4
        %v1088 = vshrl.u32 %v1022, 16
        %v1090 = vrot.slane %v1088, 5
        %v1091 = vshll.u32 %v1022, 16
        %v1093 = vrot.slane %v1091, 6
        %v1094 = vor.u32 %v1090, %v1093
        %v1095 = vsel %vm1026, %v1086, %v1094
        %v1097 = vshrl.u32 %v822, 16
        %v1099 = vrot.slane %v1097, 5
        %v1100 = vshll.u32 %v822, 16
        %v1102 = vrot.slane %v1100, 6
        %v1103 = vor.u32 %v1099, %v1102
        %v1104 = vrot.slane %v1103, 4
        %v1105 = vrot.slane %v526, 5
        %v1106 = vrot.slane %v522, 6
        %v1107 = vor.u32 %v1105, %v1106
        %v1108 = vsel %vm1026, %v1104, %v1107
        %v1109 = vrot.slane %v1107, 4
        %v1111 = vshrl.u32 %v1023, 16
        %v1113 = vrot.slane %v1111, 5
        %v1114 = vshll.u32 %v1023, 16
        %v1116 = vrot.slane %v1114, 6
        %v1117 = vor.u32 %v1113, %v1116
        %v1118 = vsel %vm1026, %v1109, %v1117
        %s1119 = scalar_lea.vmem [#allocation7], 192
        %v1120 = vld [vmem:[%s1119] sm:$0xf]
        %v1121 = vld [vmem:[%s1119 + $0x4] sm:$0xf]
        %v1122 = vld [vmem:[%s1119 + $0x8] sm:$0xf]
        %v1123 = vld [vmem:[%s1119 + $0xc] sm:$0xf]
        %v1124 = vld [vmem:[%s1119 + $0x10] sm:$0xf]
        %v1125 = vld [vmem:[%s1119 + $0x14] sm:$0xf]
        %v1126 = vld [vmem:[%s1119 + $0x18] sm:$0xf]
        %v1127 = vld [vmem:[%s1119 + $0x1c] sm:$0xf]
        %v1128 = vld [vmem:[%s1119 + $0x20] sm:$0xf]
        %v1129 = vld [vmem:[%s1119 + $0x24] sm:$0xf]
        %v1130 = vld [vmem:[%s1119 + $0x28] sm:$0xf]
        %v1131 = vld [vmem:[%s1119 + $0x2c] sm:$0xf]
        %v1132 = vld [vmem:[%s1119 + $0x30] sm:$0xf]
        %v1133 = vld [vmem:[%s1119 + $0x34] sm:$0xf]
        %v1134 = vld [vmem:[%s1119 + $0x38] sm:$0xf]
        %v1135 = vld [vmem:[%s1119 + $0x3c] sm:$0xf]
        %v1136 = vunpack.c.l.b16 %v1039
        %v1137 = vunpack.c.l.b16 %v1049
        %v1138 = vunpack.c.l.b16 %v1062
        %v1139 = vunpack.c.l.b16 %v1072
        %v1140 = vunpack.c.l.b16 %v1085
        %v1141 = vunpack.c.l.b16 %v1095
        %v1142 = vunpack.c.l.b16 %v1108
        %v1143 = vunpack.c.l.b16 %v1118
        %v1144 = vpack.c.b16 %v1137, %v1136
        %v1145 = vpack.c.b16 %v1139, %v1138
        %v1146 = vpack.c.b16 %v1141, %v1140
        %v1147 = vpack.c.b16 %v1143, %v1142
        %v1168 = vunpack.c.l.b16 %v1120
        %v1169 = vunpack.c.l.b16 %v1121
        %v1170 = vunpack.c.l.b16 %v1122
        %v1171 = vunpack.c.l.b16 %v1123
        %v1172 = vunpack.c.l.b16 %v1124
        %v1173 = vunpack.c.l.b16 %v1125
        %v1174 = vunpack.c.l.b16 %v1126
        %v1175 = vunpack.c.l.b16 %v1127
        %v1176 = vunpack.c.l.b16 %v1128
        %v1177 = vunpack.c.l.b16 %v1129
        %v1178 = vunpack.c.l.b16 %v1130
        %v1179 = vunpack.c.l.b16 %v1131
        %v1180 = vunpack.c.l.b16 %v1132
        %v1181 = vunpack.c.l.b16 %v1133
        %v1182 = vunpack.c.l.b16 %v1134
        %v1183 = vunpack.c.l.b16 %v1135
        %v1184 = vpack.c.b16 %v1169, %v1168
        %v1185 = vpack.c.b16 %v1171, %v1170
        %v1186 = vpack.c.b16 %v1173, %v1172
        %v1187 = vpack.c.b16 %v1175, %v1174
        %v1188 = vpack.c.b16 %v1177, %v1176
        %v1189 = vpack.c.b16 %v1179, %v1178
        %v1190 = vpack.c.b16 %v1181, %v1180
        %v1191 = vpack.c.b16 %v1183, %v1182
        %1200 = vmatprep.subr.bf16.mxu0 0
        %1201 = vmatpush1.bf16.msra.mxu0 %v1184
        %1202 = vmatprep.subr.bf16.mxu0 0
        %1203 = vmatpush1.bf16.msra.mxu0 %v1185
        %1204 = vmatprep.subr.bf16.mxu0 0
        %1205 = vmatpush1.bf16.msra.mxu0 %v1186
        %1206 = vmatprep.subr.bf16.mxu0 0
        %1207 = vmatpush1.bf16.msra.mxu0 %v1187
        %1208 = vmatprep.subr.bf16.mxu0 0
        %1209 = vmatpush1.bf16.msra.mxu0 %v1188
        %1210 = vmatprep.subr.bf16.mxu0 0
        %1211 = vmatpush1.bf16.msra.mxu0 %v1189
        %1212 = vmatprep.subr.bf16.mxu0 0
        %1213 = vmatpush1.bf16.msra.mxu0 %v1190
        %1214 = vmatprep.subr.bf16.mxu0 0
        %1215 = vmatpush1.bf16.msra.mxu0 %v1191
        %1216 = vmatprep.subr.bf16.mxu0 0
        %1217 = vmatpush1.bf16.msra.mxu0 0
        %1218 = vmatprep.subr.bf16.mxu0 0
        %1219 = vmatpush1.bf16.msra.mxu0 0
        %1220 = vmatprep.subr.bf16.mxu0 0
        %1221 = vmatpush1.bf16.msra.mxu0 0
        %1222 = vmatprep.subr.bf16.mxu0 0
        %1223 = vmatpush1.bf16.msra.mxu0 0
        %1224 = vmatprep.subr.bf16.mxu0 0
        %1225 = vmatpush1.bf16.msra.mxu0 0
        %1226 = vmatprep.subr.bf16.mxu0 0
        %1227 = vmatpush1.bf16.msra.mxu0 0
        %1228 = vmatprep.subr.bf16.mxu0 0
        %1229 = vmatpush1.bf16.msra.mxu0 0
        %1230 = vmatprep.subr.bf16.mxu0 0
        %1231 = vmatpush1.bf16.msra.mxu0 0
        %1232 = vmatprep.mubr.bf16.mxu0 0
        %1233 = vmatmul.mubr.bf16.gmra.mrb[0].mxu0 %v1144
        %v1234 = vpop.f32.mrb[0].mxu0
        %v1235 = vadd.f32 0.0, %v1234
        %v1236 = vpop.f32.mrb[0].mxu0
        %v1237 = vpop.f32.mrb[0].mxu0
        %v1238 = vadd.f32 0.0, %v1237
        %v1239 = vpop.f32.mrb[0].mxu0
        %1240 = vmatprep.mubr.bf16.mxu0 0
        %1241 = vmatmul.mubr.bf16.gmra.mrb[0].mxu0 %v1145
        %v1242 = vpop.f32.mrb[0].mxu0
        %v1243 = vadd.f32 0.0, %v1242
        %v1244 = vpop.f32.mrb[0].mxu0
        %v1245 = vpop.f32.mrb[0].mxu0
        %v1246 = vadd.f32 0.0, %v1245
        %v1247 = vpop.f32.mrb[0].mxu0
        %1248 = vmatprep.mubr.bf16.mxu0 0
        %1249 = vmatmul.mubr.bf16.gmra.mrb[0].mxu0 %v1146
        %v1250 = vpop.f32.mrb[0].mxu0
        %v1251 = vadd.f32 0.0, %v1250
        %v1252 = vpop.f32.mrb[0].mxu0
        %v1253 = vpop.f32.mrb[0].mxu0
        %v1254 = vadd.f32 0.0, %v1253
        %v1255 = vpop.f32.mrb[0].mxu0
        %1256 = vmatprep.mubr.bf16.mxu0 0
        %1257 = vmatmul.mubr.bf16.gmra.mrb[0].mxu0 %v1147
        %v1258 = vpop.f32.mrb[0].mxu0
        %v1259 = vadd.f32 0.0, %v1258
        %v1260 = vpop.f32.mrb[0].mxu0
        %v1261 = vpop.f32.mrb[0].mxu0
        %v1262 = vadd.f32 0.0, %v1261
        %v1263 = vpop.f32.mrb[0].mxu0
        %1264 = vdwg.mxu0
        %v1265 = vadd.f32 %v1012, %v1235
        %v1266 = vadd.f32 %v1013, %v1238
        %v1267 = vadd.f32 %v1014, %v1243
        %v1268 = vadd.f32 %v1015, %v1246
        %v1269 = vadd.f32 %v1016, %v1251
        %v1270 = vadd.f32 %v1017, %v1254
        %v1271 = vadd.f32 %v1018, %v1259
        %v1272 = vadd.f32 %v1019, %v1262
        %v1273 = vld [vmem:[#allocation2] sm:$0xc]
        %v1274 = vld [vmem:[#allocation2 + $0xc] sm:$0xc]
        %v1275 = vld [vmem:[#allocation2 + $0x18] sm:$0xc]
        %v1276 = vld [vmem:[#allocation2 + $0x24] sm:$0xc]
        %v1285 = vrot.slane %v1273, 6
        %v1286 = vrot.slane %v1285, 4
        %v1287 = vrot.slane %v426, 6
        %v1288 = vsel %vm348, %v1286, %v1287
        %v1289 = vrot.slane %v1287, 4
        %v1290 = vrot.slane %v1020, 6
        %v1291 = vsel %vm348, %v1289, %v1290
        %v1292 = vrot.slane %v1274, 6
        %v1293 = vrot.slane %v1292, 4
        %v1294 = vrot.slane %v429, 6
        %v1295 = vsel %vm348, %v1293, %v1294
        %v1296 = vrot.slane %v1294, 4
        %v1297 = vrot.slane %v1021, 6
        %v1298 = vsel %vm348, %v1296, %v1297
        %v1299 = vrot.slane %v1275, 6
        %v1300 = vrot.slane %v1299, 4
        %v1301 = vrot.slane %v432, 6
        %v1302 = vsel %vm348, %v1300, %v1301
        %v1303 = vrot.slane %v1301, 4
        %v1304 = vrot.slane %v1022, 6
        %v1305 = vsel %vm348, %v1303, %v1304
        %v1306 = vrot.slane %v1276, 6
        %v1307 = vrot.slane %v1306, 4
        %v1308 = vrot.slane %v435, 6
        %v1309 = vsel %vm348, %v1307, %v1308
        %v1310 = vrot.slane %v1308, 4
        %v1311 = vrot.slane %v1023, 6
        %v1312 = vsel %vm348, %v1310, %v1311
        %s1313 = scalar_lea.vmem [#allocation7], 256
        %v1314 = vld [vmem:[%s1313] sm:$0xf]
        %v1315 = vld [vmem:[%s1313 + $0x4] sm:$0xf]
        %v1316 = vld [vmem:[%s1313 + $0x8] sm:$0xf]
        %v1317 = vld [vmem:[%s1313 + $0xc] sm:$0xf]
        %v1318 = vld [vmem:[%s1313 + $0x10] sm:$0xf]
        %v1319 = vld [vmem:[%s1313 + $0x14] sm:$0xf]
        %v1320 = vld [vmem:[%s1313 + $0x18] sm:$0xf]
        %v1321 = vld [vmem:[%s1313 + $0x1c] sm:$0xf]
        %v1322 = vld [vmem:[%s1313 + $0x20] sm:$0xf]
        %v1323 = vld [vmem:[%s1313 + $0x24] sm:$0xf]
        %v1324 = vld [vmem:[%s1313 + $0x28] sm:$0xf]
        %v1325 = vld [vmem:[%s1313 + $0x2c] sm:$0xf]
        %v1326 = vld [vmem:[%s1313 + $0x30] sm:$0xf]
        %v1327 = vld [vmem:[%s1313 + $0x34] sm:$0xf]
        %v1328 = vld [vmem:[%s1313 + $0x38] sm:$0xf]
        %v1329 = vld [vmem:[%s1313 + $0x3c] sm:$0xf]
        %v1330 = vunpack.c.l.b16 %v1288
        %v1331 = vunpack.c.l.b16 %v1291
        %v1332 = vunpack.c.l.b16 %v1295
        %v1333 = vunpack.c.l.b16 %v1298
        %v1334 = vunpack.c.l.b16 %v1302
        %v1335 = vunpack.c.l.b16 %v1305
        %v1336 = vunpack.c.l.b16 %v1309
        %v1337 = vunpack.c.l.b16 %v1312
        %v1338 = vpack.c.b16 %v1331, %v1330
        %v1339 = vpack.c.b16 %v1333, %v1332
        %v1340 = vpack.c.b16 %v1335, %v1334
        %v1341 = vpack.c.b16 %v1337, %v1336
        %v1362 = vunpack.c.l.b16 %v1314
        %v1363 = vunpack.c.l.b16 %v1315
        %v1364 = vunpack.c.l.b16 %v1316
        %v1365 = vunpack.c.l.b16 %v1317
        %v1366 = vunpack.c.l.b16 %v1318
        %v1367 = vunpack.c.l.b16 %v1319
        %v1368 = vunpack.c.l.b16 %v1320
        %v1369 = vunpack.c.l.b16 %v1321
        %v1370 = vunpack.c.l.b16 %v1322
        %v1371 = vunpack.c.l.b16 %v1323
        %v1372 = vunpack.c.l.b16 %v1324
        %v1373 = vunpack.c.l.b16 %v1325
        %v1374 = vunpack.c.l.b16 %v1326
        %v1375 = vunpack.c.l.b16 %v1327
        %v1376 = vunpack.c.l.b16 %v1328
        %v1377 = vunpack.c.l.b16 %v1329
        %v1378 = vpack.c.b16 %v1363, %v1362
        %v1379 = vpack.c.b16 %v1365, %v1364
        %v1380 = vpack.c.b16 %v1367, %v1366
        %v1381 = vpack.c.b16 %v1369, %v1368
        %v1382 = vpack.c.b16 %v1371, %v1370
        %v1383 = vpack.c.b16 %v1373, %v1372
        %v1384 = vpack.c.b16 %v1375, %v1374
        %v1385 = vpack.c.b16 %v1377, %v1376
        %1394 = vmatprep.subr.bf16.mxu0 0
        %1395 = vmatpush1.bf16.msra.mxu0 %v1378
        %1396 = vmatprep.subr.bf16.mxu0 0
        %1397 = vmatpush1.bf16.msra.mxu0 %v1379
        %1398 = vmatprep.subr.bf16.mxu0 0
        %1399 = vmatpush1.bf16.msra.mxu0 %v1380
        %1400 = vmatprep.subr.bf16.mxu0 0
        %1401 = vmatpush1.bf16.msra.mxu0 %v1381
        %1402 = vmatprep.subr.bf16.mxu0 0
        %1403 = vmatpush1.bf16.msra.mxu0 %v1382
        %1404 = vmatprep.subr.bf16.mxu0 0
        %1405 = vmatpush1.bf16.msra.mxu0 %v1383
        %1406 = vmatprep.subr.bf16.mxu0 0
        %1407 = vmatpush1.bf16.msra.mxu0 %v1384
        %1408 = vmatprep.subr.bf16.mxu0 0
        %1409 = vmatpush1.bf16.msra.mxu0 %v1385
        %1410 = vmatprep.subr.bf16.mxu0 0
        %1411 = vmatpush1.bf16.msra.mxu0 0
        %1412 = vmatprep.subr.bf16.mxu0 0
        %1413 = vmatpush1.bf16.msra.mxu0 0
        %1414 = vmatprep.subr.bf16.mxu0 0
        %1415 = vmatpush1.bf16.msra.mxu0 0
        %1416 = vmatprep.subr.bf16.mxu0 0
        %1417 = vmatpush1.bf16.msra.mxu0 0
        %1418 = vmatprep.subr.bf16.mxu0 0
        %1419 = vmatpush1.bf16.msra.mxu0 0
        %1420 = vmatprep.subr.bf16.mxu0 0
        %1421 = vmatpush1.bf16.msra.mxu0 0
        %1422 = vmatprep.subr.bf16.mxu0 0
        %1423 = vmatpush1.bf16.msra.mxu0 0
        %1424 = vmatprep.subr.bf16.mxu0 0
        %1425 = vmatpush1.bf16.msra.mxu0 0
        %1426 = vmatprep.mubr.bf16.mxu0 0
        %1427 = vmatmul.mubr.bf16.gmra.mrb[0].mxu0 %v1338
        %v1428 = vpop.f32.mrb[0].mxu0
        %v1429 = vadd.f32 0.0, %v1428
        %v1430 = vpop.f32.mrb[0].mxu0
        %v1431 = vpop.f32.mrb[0].mxu0
        %v1432 = vadd.f32 0.0, %v1431
        %v1433 = vpop.f32.mrb[0].mxu0
        %1434 = vmatprep.mubr.bf16.mxu0 0
        %1435 = vmatmul.mubr.bf16.gmra.mrb[0].mxu0 %v1339
        %v1436 = vpop.f32.mrb[0].mxu0
        %v1437 = vadd.f32 0.0, %v1436
        %v1438 = vpop.f32.mrb[0].mxu0
        %v1439 = vpop.f32.mrb[0].mxu0
        %v1440 = vadd.f32 0.0, %v1439
        %v1441 = vpop.f32.mrb[0].mxu0
        %1442 = vmatprep.mubr.bf16.mxu0 0
        %1443 = vmatmul.mubr.bf16.gmra.mrb[0].mxu0 %v1340
        %v1444 = vpop.f32.mrb[0].mxu0
        %v1445 = vadd.f32 0.0, %v1444
        %v1446 = vpop.f32.mrb[0].mxu0
        %v1447 = vpop.f32.mrb[0].mxu0
        %v1448 = vadd.f32 0.0, %v1447
        %v1449 = vpop.f32.mrb[0].mxu0
        %1450 = vmatprep.mubr.bf16.mxu0 0
        %1451 = vmatmul.mubr.bf16.gmra.mrb[0].mxu0 %v1341
        %v1452 = vpop.f32.mrb[0].mxu0
        %v1453 = vadd.f32 0.0, %v1452
        %v1454 = vpop.f32.mrb[0].mxu0
        %v1455 = vpop.f32.mrb[0].mxu0
        %v1456 = vadd.f32 0.0, %v1455
        %v1457 = vpop.f32.mrb[0].mxu0
        %1458 = vdwg.mxu0
        %v1459 = vadd.f32 %v1265, %v1429
        %v1460 = vadd.f32 %v1266, %v1432
        %v1461 = vadd.f32 %v1267, %v1437
        %v1462 = vadd.f32 %v1268, %v1440
        %v1463 = vadd.f32 %v1269, %v1445
        %v1464 = vadd.f32 %v1270, %v1448
        %v1465 = vadd.f32 %v1271, %v1453
        %v1466 = vadd.f32 %v1272, %v1456
        %v1467 = vld [vmem:[#allocation2 + $0x8] sm:$0x7]
        %v1468 = vld [vmem:[#allocation2 + $0x14] sm:$0x7]
        %v1469 = vld [vmem:[#allocation2 + $0x20] sm:$0x7]
        %v1470 = vld [vmem:[#allocation2 + $0x2c] sm:$0x7]
        %vm1471 = vsmask.f32 1280
        %vm1472 = vsmask.f32 5392
        %vm1473 = vmor %vm1471, %vm1472
        %v1475 = vshrl.u32 %v1273, 16
        %v1477 = vrot.slane %v1475, 6
        %v1478 = vshll.u32 %v1273, 16
        %v1480 = vrot.slane %v1478, 7
        %v1481 = vor.u32 %v1477, %v1480
        %v1482 = vrot.slane %v1481, 4
        %v1483 = vrot.slane %v454, 6
        %v1484 = vrot.slane %v450, 7
        %v1485 = vor.u32 %v1483, %v1484
        %v1486 = vsel %vm1473, %v1482, %v1485
        %v1487 = vrot.slane %v1485, 4
        %v1489 = vshrl.u32 %v1467, 16
        %v1491 = vrot.slane %v1489, 6
        %v1492 = vshll.u32 %v1467, 16
        %v1494 = vrot.slane %v1492, 7
        %v1495 = vor.u32 %v1491, %v1494
        %v1496 = vsel %vm1473, %v1487, %v1495
        %v1498 = vshrl.u32 %v1274, 16
        %v1500 = vrot.slane %v1498, 6
        %v1501 = vshll.u32 %v1274, 16
        %v1503 = vrot.slane %v1501, 7
        %v1504 = vor.u32 %v1500, %v1503
        %v1505 = vrot.slane %v1504, 4
        %v1506 = vrot.slane %v478, 6
        %v1507 = vrot.slane %v474, 7
        %v1508 = vor.u32 %v1506, %v1507
        %v1509 = vsel %vm1473, %v1505, %v1508
        %v1510 = vrot.slane %v1508, 4
        %v1512 = vshrl.u32 %v1468, 16
        %v1514 = vrot.slane %v1512, 6
        %v1515 = vshll.u32 %v1468, 16
        %v1517 = vrot.slane %v1515, 7
        %v1518 = vor.u32 %v1514, %v1517
        %v1519 = vsel %vm1473, %v1510, %v1518
        %v1521 = vshrl.u32 %v1275, 16
        %v1523 = vrot.slane %v1521, 6
        %v1524 = vshll.u32 %v1275, 16
        %v1526 = vrot.slane %v1524, 7
        %v1527 = vor.u32 %v1523, %v1526
        %v1528 = vrot.slane %v1527, 4
        %v1529 = vrot.slane %v502, 6
        %v1530 = vrot.slane %v498, 7
        %v1531 = vor.u32 %v1529, %v1530
        %v1532 = vsel %vm1473, %v1528, %v1531
        %v1533 = vrot.slane %v1531, 4
        %v1535 = vshrl.u32 %v1469, 16
        %v1537 = vrot.slane %v1535, 6
        %v1538 = vshll.u32 %v1469, 16
        %v1540 = vrot.slane %v1538, 7
        %v1541 = vor.u32 %v1537, %v1540
        %v1542 = vsel %vm1473, %v1533, %v1541
        %v1544 = vshrl.u32 %v1276, 16
        %v1546 = vrot.slane %v1544, 6
        %v1547 = vshll.u32 %v1276, 16
        %v1549 = vrot.slane %v1547, 7
        %v1550 = vor.u32 %v1546, %v1549
        %v1551 = vrot.slane %v1550, 4
        %v1552 = vrot.slane %v526, 6
        %v1553 = vrot.slane %v522, 7
        %v1554 = vor.u32 %v1552, %v1553
        %v1555 = vsel %vm1473, %v1551, %v1554
        %v1556 = vrot.slane %v1554, 4
        %v1558 = vshrl.u32 %v1470, 16
        %v1560 = vrot.slane %v1558, 6
        %v1561 = vshll.u32 %v1470, 16
        %v1563 = vrot.slane %v1561, 7
        %v1564 = vor.u32 %v1560, %v1563
        %v1565 = vsel %vm1473, %v1556, %v1564
        %s1566 = scalar_lea.vmem [#allocation7], 320
        %v1567 = vld [vmem:[%s1566] sm:$0xf]
        %v1568 = vld [vmem:[%s1566 + $0x4] sm:$0xf]
        %v1569 = vld [vmem:[%s1566 + $0x8] sm:$0xf]
        %v1570 = vld [vmem:[%s1566 + $0xc] sm:$0xf]
        %v1571 = vld [vmem:[%s1566 + $0x10] sm:$0xf]
        %v1572 = vld [vmem:[%s1566 + $0x14] sm:$0xf]
        %v1573 = vld [vmem:[%s1566 + $0x18] sm:$0xf]
        %v1574 = vld [vmem:[%s1566 + $0x1c] sm:$0xf]
        %v1575 = vld [vmem:[%s1566 + $0x20] sm:$0xf]
        %v1576 = vld [vmem:[%s1566 + $0x24] sm:$0xf]
        %v1577 = vld [vmem:[%s1566 + $0x28] sm:$0xf]
        %v1578 = vld [vmem:[%s1566 + $0x2c] sm:$0xf]
        %v1579 = vld [vmem:[%s1566 + $0x30] sm:$0xf]
        %v1580 = vld [vmem:[%s1566 + $0x34] sm:$0xf]
        %v1581 = vld [vmem:[%s1566 + $0x38] sm:$0xf]
        %v1582 = vld [vmem:[%s1566 + $0x3c] sm:$0xf]
        %v1583 = vunpack.c.l.b16 %v1486
        %v1584 = vunpack.c.l.b16 %v1496
        %v1585 = vunpack.c.l.b16 %v1509
        %v1586 = vunpack.c.l.b16 %v1519
        %v1587 = vunpack.c.l.b16 %v1532
        %v1588 = vunpack.c.l.b16 %v1542
        %v1589 = vunpack.c.l.b16 %v1555
        %v1590 = vunpack.c.l.b16 %v1565
        %v1591 = vpack.c.b16 %v1584, %v1583
        %v1592 = vpack.c.b16 %v1586, %v1585
        %v1593 = vpack.c.b16 %v1588, %v1587
        %v1594 = vpack.c.b16 %v1590, %v1589
        %v1615 = vunpack.c.l.b16 %v1567
        %v1616 = vunpack.c.l.b16 %v1568
        %v1617 = vunpack.c.l.b16 %v1569
        %v1618 = vunpack.c.l.b16 %v1570
        %v1619 = vunpack.c.l.b16 %v1571
        %v1620 = vunpack.c.l.b16 %v1572
        %v1621 = vunpack.c.l.b16 %v1573
        %v1622 = vunpack.c.l.b16 %v1574
        %v1623 = vunpack.c.l.b16 %v1575
        %v1624 = vunpack.c.l.b16 %v1576
        %v1625 = vunpack.c.l.b16 %v1577
        %v1626 = vunpack.c.l.b16 %v1578
        %v1627 = vunpack.c.l.b16 %v1579
        %v1628 = vunpack.c.l.b16 %v1580
        %v1629 = vunpack.c.l.b16 %v1581
        %v1630 = vunpack.c.l.b16 %v1582
        %v1631 = vpack.c.b16 %v1616, %v1615
        %v1632 = vpack.c.b16 %v1618, %v1617
        %v1633 = vpack.c.b16 %v1620, %v1619
        %v1634 = vpack.c.b16 %v1622, %v1621
        %v1635 = vpack.c.b16 %v1624, %v1623
        %v1636 = vpack.c.b16 %v1626, %v1625
        %v1637 = vpack.c.b16 %v1628, %v1627
        %v1638 = vpack.c.b16 %v1630, %v1629
        %1647 = vmatprep.subr.bf16.mxu0 0
        %1648 = vmatpush1.bf16.msra.mxu0 %v1631
        %1649 = vmatprep.subr.bf16.mxu0 0
        %1650 = vmatpush1.bf16.msra.mxu0 %v1632
        %1651 = vmatprep.subr.bf16.mxu0 0
        %1652 = vmatpush1.bf16.msra.mxu0 %v1633
        %1653 = vmatprep.subr.bf16.mxu0 0
        %1654 = vmatpush1.bf16.msra.mxu0 %v1634
        %1655 = vmatprep.subr.bf16.mxu0 0
        %1656 = vmatpush1.bf16.msra.mxu0 %v1635
        %1657 = vmatprep.subr.bf16.mxu0 0
        %1658 = vmatpush1.bf16.msra.mxu0 %v1636
        %1659 = vmatprep.subr.bf16.mxu0 0
        %1660 = vmatpush1.bf16.msra.mxu0 %v1637
        %1661 = vmatprep.subr.bf16.mxu0 0
        %1662 = vmatpush1.bf16.msra.mxu0 %v1638
        %1663 = vmatprep.subr.bf16.mxu0 0
        %1664 = vmatpush1.bf16.msra.mxu0 0
        %1665 = vmatprep.subr.bf16.mxu0 0
        %1666 = vmatpush1.bf16.msra.mxu0 0
        %1667 = vmatprep.subr.bf16.mxu0 0
        %1668 = vmatpush1.bf16.msra.mxu0 0
        %1669 = vmatprep.subr.bf16.mxu0 0
        %1670 = vmatpush1.bf16.msra.mxu0 0
        %1671 = vmatprep.subr.bf16.mxu0 0
        %1672 = vmatpush1.bf16.msra.mxu0 0
        %1673 = vmatprep.subr.bf16.mxu0 0
        %1674 = vmatpush1.bf16.msra.mxu0 0
        %1675 = vmatprep.subr.bf16.mxu0 0
        %1676 = vmatpush1.bf16.msra.mxu0 0
        %1677 = vmatprep.subr.bf16.mxu0 0
        %1678 = vmatpush1.bf16.msra.mxu0 0
        %1679 = vmatprep.mubr.bf16.mxu0 0
        %1680 = vmatmul.mubr.bf16.gmra.mrb[0].mxu0 %v1591
        %v1681 = vpop.f32.mrb[0].mxu0
        %v1682 = vadd.f32 0.0, %v1681
        %v1683 = vpop.f32.mrb[0].mxu0
        %v1684 = vpop.f32.mrb[0].mxu0
        %v1685 = vadd.f32 0.0, %v1684
        %v1686 = vpop.f32.mrb[0].mxu0
        %1687 = vmatprep.mubr.bf16.mxu0 0
        %1688 = vmatmul.mubr.bf16.gmra.mrb[0].mxu0 %v1592
        %v1689 = vpop.f32.mrb[0].mxu0
        %v1690 = vadd.f32 0.0, %v1689
        %v1691 = vpop.f32.mrb[0].mxu0
        %v1692 = vpop.f32.mrb[0].mxu0
        %v1693 = vadd.f32 0.0, %v1692
        %v1694 = vpop.f32.mrb[0].mxu0
        %1695 = vmatprep.mubr.bf16.mxu0 0
        %1696 = vmatmul.mubr.bf16.gmra.mrb[0].mxu0 %v1593
        %v1697 = vpop.f32.mrb[0].mxu0
        %v1698 = vadd.f32 0.0, %v1697
        %v1699 = vpop.f32.mrb[0].mxu0
        %v1700 = vpop.f32.mrb[0].mxu0
        %v1701 = vadd.f32 0.0, %v1700
        %v1702 = vpop.f32.mrb[0].mxu0
        %1703 = vmatprep.mubr.bf16.mxu0 0
        %1704 = vmatmul.mubr.bf16.gmra.mrb[0].mxu0 %v1594
        %v1705 = vpop.f32.mrb[0].mxu0
        %v1706 = vadd.f32 0.0, %v1705
        %v1707 = vpop.f32.mrb[0].mxu0
        %v1708 = vpop.f32.mrb[0].mxu0
        %v1709 = vadd.f32 0.0, %v1708
        %v1710 = vpop.f32.mrb[0].mxu0
        %1711 = vdwg.mxu0
        %v1712 = vadd.f32 %v1459, %v1682
        %v1713 = vadd.f32 %v1460, %v1685
        %v1714 = vadd.f32 %v1461, %v1690
        %v1715 = vadd.f32 %v1462, %v1693
        %v1716 = vadd.f32 %v1463, %v1698
        %v1717 = vadd.f32 %v1464, %v1701
        %v1718 = vadd.f32 %v1465, %v1706
        %v1719 = vadd.f32 %v1466, %v1709
        %v1720 = vld [vmem:[#allocation2] sm:$0x8]
        %v1721 = vld [vmem:[#allocation2 + $0xc] sm:$0x8]
        %v1722 = vld [vmem:[#allocation2 + $0x18] sm:$0x8]
        %v1723 = vld [vmem:[#allocation2 + $0x24] sm:$0x8]
        %vm1732 = vcmask 1040384
        %vm1733 = vcmask 1044484
        %vm1734 = vmor %vm1732, %vm1733
        %v1735 = vrot.slane %v1720, 7
        %v1736 = vrot.slane %v1735, 4
        %v1737 = vrot.slane %v426, 7
        %v1738 = vsel %vm1734, %v1736, %v1737
        %v1739 = vrot.slane %v1737, 4
        %v1740 = vrot.slane %v1467, 7
        %v1741 = vsel %vm1734, %v1739, %v1740
        %v1742 = vrot.slane %v1721, 7
        %v1743 = vrot.slane %v1742, 4
        %v1744 = vrot.slane %v429, 7
        %v1745 = vsel %vm1734, %v1743, %v1744
        %v1746 = vrot.slane %v1744, 4
        %v1747 = vrot.slane %v1468, 7
        %v1748 = vsel %vm1734, %v1746, %v1747
        %v1749 = vrot.slane %v1722, 7
        %v1750 = vrot.slane %v1749, 4
        %v1751 = vrot.slane %v432, 7
        %v1752 = vsel %vm1734, %v1750, %v1751
        %v1753 = vrot.slane %v1751, 4
        %v1754 = vrot.slane %v1469, 7
        %v1755 = vsel %vm1734, %v1753, %v1754
        %v1756 = vrot.slane %v1723, 7
        %v1757 = vrot.slane %v1756, 4
        %v1758 = vrot.slane %v435, 7
        %v1759 = vsel %vm1734, %v1757, %v1758
        %v1760 = vrot.slane %v1758, 4
        %v1761 = vrot.slane %v1470, 7
        %v1762 = vsel %vm1734, %v1760, %v1761
        %s1763 = scalar_lea.vmem [#allocation7], 384
        %v1764 = vld [vmem:[%s1763] sm:$0xf]
        %v1765 = vld [vmem:[%s1763 + $0x4] sm:$0xf]
        %v1766 = vld [vmem:[%s1763 + $0x8] sm:$0xf]
        %v1767 = vld [vmem:[%s1763 + $0xc] sm:$0xf]
        %v1768 = vld [vmem:[%s1763 + $0x10] sm:$0xf]
        %v1769 = vld [vmem:[%s1763 + $0x14] sm:$0xf]
        %v1770 = vld [vmem:[%s1763 + $0x18] sm:$0xf]
        %v1771 = vld [vmem:[%s1763 + $0x1c] sm:$0xf]
        %v1772 = vld [vmem:[%s1763 + $0x20] sm:$0xf]
        %v1773 = vld [vmem:[%s1763 + $0x24] sm:$0xf]
        %v1774 = vld [vmem:[%s1763 + $0x28] sm:$0xf]
        %v1775 = vld [vmem:[%s1763 + $0x2c] sm:$0xf]
        %v1776 = vld [vmem:[%s1763 + $0x30] sm:$0xf]
        %v1777 = vld [vmem:[%s1763 + $0x34] sm:$0xf]
        %v1778 = vld [vmem:[%s1763 + $0x38] sm:$0xf]
        %v1779 = vld [vmem:[%s1763 + $0x3c] sm:$0xf]
        %v1780 = vunpack.c.l.b16 %v1738
        %v1781 = vunpack.c.l.b16 %v1741
        %v1782 = vunpack.c.l.b16 %v1745
        %v1783 = vunpack.c.l.b16 %v1748
        %v1784 = vunpack.c.l.b16 %v1752
        %v1785 = vunpack.c.l.b16 %v1755
        %v1786 = vunpack.c.l.b16 %v1759
        %v1787 = vunpack.c.l.b16 %v1762
        %v1788 = vpack.c.b16 %v1781, %v1780
        %v1789 = vpack.c.b16 %v1783, %v1782
        %v1790 = vpack.c.b16 %v1785, %v1784
        %v1791 = vpack.c.b16 %v1787, %v1786
        %v1812 = vunpack.c.l.b16 %v1764
        %v1813 = vunpack.c.l.b16 %v1765
        %v1814 = vunpack.c.l.b16 %v1766
        %v1815 = vunpack.c.l.b16 %v1767
        %v1816 = vunpack.c.l.b16 %v1768
        %v1817 = vunpack.c.l.b16 %v1769
        %v1818 = vunpack.c.l.b16 %v1770
        %v1819 = vunpack.c.l.b16 %v1771
        %v1820 = vunpack.c.l.b16 %v1772
        %v1821 = vunpack.c.l.b16 %v1773
        %v1822 = vunpack.c.l.b16 %v1774
        %v1823 = vunpack.c.l.b16 %v1775
        %v1824 = vunpack.c.l.b16 %v1776
        %v1825 = vunpack.c.l.b16 %v1777
        %v1826 = vunpack.c.l.b16 %v1778
        %v1827 = vunpack.c.l.b16 %v1779
        %v1828 = vpack.c.b16 %v1813, %v1812
        %v1829 = vpack.c.b16 %v1815, %v1814
        %v1830 = vpack.c.b16 %v1817, %v1816
        %v1831 = vpack.c.b16 %v1819, %v1818
        %v1832 = vpack.c.b16 %v1821, %v1820
        %v1833 = vpack.c.b16 %v1823, %v1822
        %v1834 = vpack.c.b16 %v1825, %v1824
        %v1835 = vpack.c.b16 %v1827, %v1826
        %1844 = vmatprep.subr.bf16.mxu0 0
        %1845 = vmatpush1.bf16.msra.mxu0 %v1828
        %1846 = vmatprep.subr.bf16.mxu0 0
        %1847 = vmatpush1.bf16.msra.mxu0 %v1829
        %1848 = vmatprep.subr.bf16.mxu0 0
        %1849 = vmatpush1.bf16.msra.mxu0 %v1830
        %1850 = vmatprep.subr.bf16.mxu0 0
        %1851 = vmatpush1.bf16.msra.mxu0 %v1831
        %1852 = vmatprep.subr.bf16.mxu0 0
        %1853 = vmatpush1.bf16.msra.mxu0 %v1832
        %1854 = vmatprep.subr.bf16.mxu0 0
        %1855 = vmatpush1.bf16.msra.mxu0 %v1833
        %1856 = vmatprep.subr.bf16.mxu0 0
        %1857 = vmatpush1.bf16.msra.mxu0 %v1834
        %1858 = vmatprep.subr.bf16.mxu0 0
        %1859 = vmatpush1.bf16.msra.mxu0 %v1835
        %1860 = vmatprep.subr.bf16.mxu0 0
        %1861 = vmatpush1.bf16.msra.mxu0 0
        %1862 = vmatprep.subr.bf16.mxu0 0
        %1863 = vmatpush1.bf16.msra.mxu0 0
        %1864 = vmatprep.subr.bf16.mxu0 0
        %1865 = vmatpush1.bf16.msra.mxu0 0
        %1866 = vmatprep.subr.bf16.mxu0 0
        %1867 = vmatpush1.bf16.msra.mxu0 0
        %1868 = vmatprep.subr.bf16.mxu0 0
        %1869 = vmatpush1.bf16.msra.mxu0 0
        %1870 = vmatprep.subr.bf16.mxu0 0
        %1871 = vmatpush1.bf16.msra.mxu0 0
        %1872 = vmatprep.subr.bf16.mxu0 0
        %1873 = vmatpush1.bf16.msra.mxu0 0
        %1874 = vmatprep.subr.bf16.mxu0 0
        %1875 = vmatpush1.bf16.msra.mxu0 0
        %1876 = vmatprep.mubr.bf16.mxu0 0
        %1877 = vmatmul.mubr.bf16.gmra.mrb[0].mxu0 %v1788
        %v1878 = vpop.f32.mrb[0].mxu0
        %v1879 = vadd.f32 0.0, %v1878
        %v1880 = vpop.f32.mrb[0].mxu0
        %v1881 = vpop.f32.mrb[0].mxu0
        %v1882 = vadd.f32 0.0, %v1881
        %v1883 = vpop.f32.mrb[0].mxu0
        %1884 = vmatprep.mubr.bf16.mxu0 0
        %1885 = vmatmul.mubr.bf16.gmra.mrb[0].mxu0 %v1789
        %v1886 = vpop.f32.mrb[0].mxu0
        %v1887 = vadd.f32 0.0, %v1886
        %v1888 = vpop.f32.mrb[0].mxu0
        %v1889 = vpop.f32.mrb[0].mxu0
        %v1890 = vadd.f32 0.0, %v1889
        %v1891 = vpop.f32.mrb[0].mxu0
        %1892 = vmatprep.mubr.bf16.mxu0 0
        %1893 = vmatmul.mubr.bf16.gmra.mrb[0].mxu0 %v1790
        %v1894 = vpop.f32.mrb[0].mxu0
        %v1895 = vadd.f32 0.0, %v1894
        %v1896 = vpop.f32.mrb[0].mxu0
        %v1897 = vpop.f32.mrb[0].mxu0
        %v1898 = vadd.f32 0.0, %v1897
        %v1899 = vpop.f32.mrb[0].mxu0
        %1900 = vmatprep.mubr.bf16.mxu0 0
        %1901 = vmatmul.mubr.bf16.gmra.mrb[0].mxu0 %v1791
        %v1902 = vpop.f32.mrb[0].mxu0
        %v1903 = vadd.f32 0.0, %v1902
        %v1904 = vpop.f32.mrb[0].mxu0
        %v1905 = vpop.f32.mrb[0].mxu0
        %v1906 = vadd.f32 0.0, %v1905
        %v1907 = vpop.f32.mrb[0].mxu0
        %1908 = vdwg.mxu0
        %v1909 = vadd.f32 %v1712, %v1879
        %v1910 = vadd.f32 %v1713, %v1882
        %v1911 = vadd.f32 %v1714, %v1887
        %v1912 = vadd.f32 %v1715, %v1890
        %v1913 = vadd.f32 %v1716, %v1895
        %v1914 = vadd.f32 %v1717, %v1898
        %v1915 = vadd.f32 %v1718, %v1903
        %v1916 = vadd.f32 %v1719, %v1906
        %v1917 = vld [vmem:[#allocation2 + $0x8] sm:$0xf]
        %v1918 = vld [vmem:[#allocation2 + $0x14] sm:$0xf]
        %v1919 = vld [vmem:[#allocation2 + $0x20] sm:$0xf]
        %v1920 = vld [vmem:[#allocation2 + $0x2c] sm:$0xf]
        %vm1921 = vsmask.f32 256
        %vm1922 = vsmask.f32 4368
        %vm1923 = vmor %vm1921, %vm1922
        %v1925 = vshrl.u32 %v1720, 16
        %v1927 = vrot.slane %v1925, 7
        %v1928 = vrot.slane %v1927, 4
        %v1929 = vrot.slane %v454, 7
        %v1930 = vor.u32 %v1929, %v450
        %v1931 = vsel %vm1923, %v1928, %v1930
        %v1932 = vrot.slane %v1929, 4
        %v1934 = vshrl.u32 %v1917, 16
        %v1936 = vrot.slane %v1934, 7
        %v1937 = vshll.u32 %v1917, 16
        %v1939 = vor.u32 %v1936, %v1937
        %v1940 = vsel %vm1923, %v1932, %v1939
        %v1942 = vshrl.u32 %v1721, 16
        %v1944 = vrot.slane %v1942, 7
        %v1945 = vrot.slane %v1944, 4
        %v1946 = vrot.slane %v478, 7
        %v1947 = vor.u32 %v1946, %v474
        %v1948 = vsel %vm1923, %v1945, %v1947
        %v1949 = vrot.slane %v1946, 4
        %v1951 = vshrl.u32 %v1918, 16
        %v1953 = vrot.slane %v1951, 7
        %v1954 = vshll.u32 %v1918, 16
        %v1956 = vor.u32 %v1953, %v1954
        %v1957 = vsel %vm1923, %v1949, %v1956
        %v1959 = vshrl.u32 %v1722, 16
        %v1961 = vrot.slane %v1959, 7
        %v1962 = vrot.slane %v1961, 4
        %v1963 = vrot.slane %v502, 7
        %v1964 = vor.u32 %v1963, %v498
        %v1965 = vsel %vm1923, %v1962, %v1964
        %v1966 = vrot.slane %v1963, 4
        %v1968 = vshrl.u32 %v1919, 16
        %v1970 = vrot.slane %v1968, 7
        %v1971 = vshll.u32 %v1919, 16
        %v1973 = vor.u32 %v1970, %v1971
        %v1974 = vsel %vm1923, %v1966, %v1973
        %v1976 = vshrl.u32 %v1723, 16
        %v1978 = vrot.slane %v1976, 7
        %v1979 = vrot.slane %v1978, 4
        %v1980 = vrot.slane %v526, 7
        %v1981 = vor.u32 %v1980, %v522
        %v1982 = vsel %vm1923, %v1979, %v1981
        %v1983 = vrot.slane %v1980, 4
        %v1985 = vshrl.u32 %v1920, 16
        %v1987 = vrot.slane %v1985, 7
        %v1988 = vshll.u32 %v1920, 16
        %v1990 = vor.u32 %v1987, %v1988
        %v1991 = vsel %vm1923, %v1983, %v1990
        %s1992 = scalar_lea.vmem [#allocation7], 448
        %v1993 = vld [vmem:[%s1992] sm:$0xf]
        %v1994 = vld [vmem:[%s1992 + $0x4] sm:$0xf]
        %v1995 = vld [vmem:[%s1992 + $0x8] sm:$0xf]
        %v1996 = vld [vmem:[%s1992 + $0xc] sm:$0xf]
        %v1997 = vld [vmem:[%s1992 + $0x10] sm:$0xf]
        %v1998 = vld [vmem:[%s1992 + $0x14] sm:$0xf]
        %v1999 = vld [vmem:[%s1992 + $0x18] sm:$0xf]
        %v2000 = vld [vmem:[%s1992 + $0x1c] sm:$0xf]
        %v2001 = vld [vmem:[%s1992 + $0x20] sm:$0xf]
        %v2002 = vld [vmem:[%s1992 + $0x24] sm:$0xf]
        %v2003 = vld [vmem:[%s1992 + $0x28] sm:$0xf]
        %v2004 = vld [vmem:[%s1992 + $0x2c] sm:$0xf]
        %v2005 = vld [vmem:[%s1992 + $0x30] sm:$0xf]
        %v2006 = vld [vmem:[%s1992 + $0x34] sm:$0xf]
        %v2007 = vld [vmem:[%s1992 + $0x38] sm:$0xf]
        %v2008 = vld [vmem:[%s1992 + $0x3c] sm:$0xf]
        %v2009 = vunpack.c.l.b16 %v1931
        %v2010 = vunpack.c.l.b16 %v1940
        %v2011 = vunpack.c.l.b16 %v1948
        %v2012 = vunpack.c.l.b16 %v1957
        %v2013 = vunpack.c.l.b16 %v1965
        %v2014 = vunpack.c.l.b16 %v1974
        %v2015 = vunpack.c.l.b16 %v1982
        %v2016 = vunpack.c.l.b16 %v1991
        %v2017 = vpack.c.b16 %v2010, %v2009
        %v2018 = vpack.c.b16 %v2012, %v2011
        %v2019 = vpack.c.b16 %v2014, %v2013
        %v2020 = vpack.c.b16 %v2016, %v2015
        %v2041 = vunpack.c.l.b16 %v1993
        %v2042 = vunpack.c.l.b16 %v1994
        %v2043 = vunpack.c.l.b16 %v1995
        %v2044 = vunpack.c.l.b16 %v1996
        %v2045 = vunpack.c.l.b16 %v1997
        %v2046 = vunpack.c.l.b16 %v1998
        %v2047 = vunpack.c.l.b16 %v1999
        %v2048 = vunpack.c.l.b16 %v2000
        %v2049 = vunpack.c.l.b16 %v2001
        %v2050 = vunpack.c.l.b16 %v2002
        %v2051 = vunpack.c.l.b16 %v2003
        %v2052 = vunpack.c.l.b16 %v2004
        %v2053 = vunpack.c.l.b16 %v2005
        %v2054 = vunpack.c.l.b16 %v2006
        %v2055 = vunpack.c.l.b16 %v2007
        %v2056 = vunpack.c.l.b16 %v2008
        %v2057 = vpack.c.b16 %v2042, %v2041
        %v2058 = vpack.c.b16 %v2044, %v2043
        %v2059 = vpack.c.b16 %v2046, %v2045
        %v2060 = vpack.c.b16 %v2048, %v2047
        %v2061 = vpack.c.b16 %v2050, %v2049
        %v2062 = vpack.c.b16 %v2052, %v2051
        %v2063 = vpack.c.b16 %v2054, %v2053
        %v2064 = vpack.c.b16 %v2056, %v2055
        %2073 = vmatprep.subr.bf16.mxu0 0
        %2074 = vmatpush1.bf16.msra.mxu0 %v2057
        %2075 = vmatprep.subr.bf16.mxu0 0
        %2076 = vmatpush1.bf16.msra.mxu0 %v2058
        %2077 = vmatprep.subr.bf16.mxu0 0
        %2078 = vmatpush1.bf16.msra.mxu0 %v2059
        %2079 = vmatprep.subr.bf16.mxu0 0
        %2080 = vmatpush1.bf16.msra.mxu0 %v2060
        %2081 = vmatprep.subr.bf16.mxu0 0
        %2082 = vmatpush1.bf16.msra.mxu0 %v2061
        %2083 = vmatprep.subr.bf16.mxu0 0
        %2084 = vmatpush1.bf16.msra.mxu0 %v2062
        %2085 = vmatprep.subr.bf16.mxu0 0
        %2086 = vmatpush1.bf16.msra.mxu0 %v2063
        %2087 = vmatprep.subr.bf16.mxu0 0
        %2088 = vmatpush1.bf16.msra.mxu0 %v2064
        %2089 = vmatprep.subr.bf16.mxu0 0
        %2090 = vmatpush1.bf16.msra.mxu0 0
        %2091 = vmatprep.subr.bf16.mxu0 0
        %2092 = vmatpush1.bf16.msra.mxu0 0
        %2093 = vmatprep.subr.bf16.mxu0 0
        %2094 = vmatpush1.bf16.msra.mxu0 0
        %2095 = vmatprep.subr.bf16.mxu0 0
        %2096 = vmatpush1.bf16.msra.mxu0 0
        %2097 = vmatprep.subr.bf16.mxu0 0
        %2098 = vmatpush1.bf16.msra.mxu0 0
        %2099 = vmatprep.subr.bf16.mxu0 0
        %2100 = vmatpush1.bf16.msra.mxu0 0
        %2101 = vmatprep.subr.bf16.mxu0 0
        %2102 = vmatpush1.bf16.msra.mxu0 0
        %2103 = vmatprep.subr.bf16.mxu0 0
        %2104 = vmatpush1.bf16.msra.mxu0 0
        %2105 = vmatprep.mubr.bf16.mxu0 0
        %2106 = vmatmul.mubr.bf16.gmra.mrb[0].mxu0 %v2017
        %v2107 = vpop.f32.mrb[0].mxu0
        %v2108 = vadd.f32 0.0, %v2107
        %v2109 = vpop.f32.mrb[0].mxu0
        %v2110 = vpop.f32.mrb[0].mxu0
        %v2111 = vadd.f32 0.0, %v2110
        %v2112 = vpop.f32.mrb[0].mxu0
        %2113 = vmatprep.mubr.bf16.mxu0 0
        %2114 = vmatmul.mubr.bf16.gmra.mrb[0].mxu0 %v2018
        %v2115 = vpop.f32.mrb[0].mxu0
        %v2116 = vadd.f32 0.0, %v2115
        %v2117 = vpop.f32.mrb[0].mxu0
        %v2118 = vpop.f32.mrb[0].mxu0
        %v2119 = vadd.f32 0.0, %v2118
        %v2120 = vpop.f32.mrb[0].mxu0
        %2121 = vmatprep.mubr.bf16.mxu0 0
        %2122 = vmatmul.mubr.bf16.gmra.mrb[0].mxu0 %v2019
        %v2123 = vpop.f32.mrb[0].mxu0
        %v2124 = vadd.f32 0.0, %v2123
        %v2125 = vpop.f32.mrb[0].mxu0
        %v2126 = vpop.f32.mrb[0].mxu0
        %v2127 = vadd.f32 0.0, %v2126
        %v2128 = vpop.f32.mrb[0].mxu0
        %2129 = vmatprep.mubr.bf16.mxu0 0
        %2130 = vmatmul.mubr.bf16.gmra.mrb[0].mxu0 %v2020
        %v2131 = vpop.f32.mrb[0].mxu0
        %v2132 = vadd.f32 0.0, %v2131
        %v2133 = vpop.f32.mrb[0].mxu0
        %v2134 = vpop.f32.mrb[0].mxu0
        %v2135 = vadd.f32 0.0, %v2134
        %v2136 = vpop.f32.mrb[0].mxu0
        %2137 = vdwg.mxu0
        %v2138 = vadd.f32 %v1909, %v2108
        %v2139 = vadd.f32 %v1910, %v2111
        %v2140 = vadd.f32 %v1911, %v2116
        %v2141 = vadd.f32 %v1912, %v2119
        %v2142 = vadd.f32 %v1913, %v2124
        %v2143 = vadd.f32 %v1914, %v2127
        %v2144 = vadd.f32 %v1915, %v2132
        %v2145 = vadd.f32 %v1916, %v2135
        %s2146 = scalar_lea.vmem [#allocation7], 512
        %v2147 = vld [vmem:[%s2146] sm:$0xf]
        %v2148 = vld [vmem:[%s2146 + $0x4] sm:$0xf]
        %v2149 = vld [vmem:[%s2146 + $0x8] sm:$0xf]
        %v2150 = vld [vmem:[%s2146 + $0xc] sm:$0xf]
        %v2151 = vld [vmem:[%s2146 + $0x10] sm:$0xf]
        %v2152 = vld [vmem:[%s2146 + $0x14] sm:$0xf]
        %v2153 = vld [vmem:[%s2146 + $0x18] sm:$0xf]
        %v2154 = vld [vmem:[%s2146 + $0x1c] sm:$0xf]
        %v2155 = vld [vmem:[%s2146 + $0x20] sm:$0xf]
        %v2156 = vld [vmem:[%s2146 + $0x24] sm:$0xf]
        %v2157 = vld [vmem:[%s2146 + $0x28] sm:$0xf]
        %v2158 = vld [vmem:[%s2146 + $0x2c] sm:$0xf]
        %v2159 = vld [vmem:[%s2146 + $0x30] sm:$0xf]
        %v2160 = vld [vmem:[%s2146 + $0x34] sm:$0xf]
        %v2161 = vld [vmem:[%s2146 + $0x38] sm:$0xf]
        %v2162 = vld [vmem:[%s2146 + $0x3c] sm:$0xf]
        %v2167 = vunpack.c.l.b16 %v426
        %v2168 = vunpack.c.l.b16 %v1917
        %v2169 = vunpack.c.l.b16 %v429
        %v2170 = vunpack.c.l.b16 %v1918
        %v2171 = vunpack.c.l.b16 %v432
        %v2172 = vunpack.c.l.b16 %v1919
        %v2173 = vunpack.c.l.b16 %v435
        %v2174 = vunpack.c.l.b16 %v1920
        %v2175 = vpack.c.b16 %v2168, %v2167
        %v2176 = vpack.c.b16 %v2170, %v2169
        %v2177 = vpack.c.b16 %v2172, %v2171
        %v2178 = vpack.c.b16 %v2174, %v2173
        %v2199 = vunpack.c.l.b16 %v2147
        %v2200 = vunpack.c.l.b16 %v2148
        %v2201 = vunpack.c.l.b16 %v2149
        %v2202 = vunpack.c.l.b16 %v2150
        %v2203 = vunpack.c.l.b16 %v2151
        %v2204 = vunpack.c.l.b16 %v2152
        %v2205 = vunpack.c.l.b16 %v2153
        %v2206 = vunpack.c.l.b16 %v2154
        %v2207 = vunpack.c.l.b16 %v2155
        %v2208 = vunpack.c.l.b16 %v2156
        %v2209 = vunpack.c.l.b16 %v2157
        %v2210 = vunpack.c.l.b16 %v2158
        %v2211 = vunpack.c.l.b16 %v2159
        %v2212 = vunpack.c.l.b16 %v2160
        %v2213 = vunpack.c.l.b16 %v2161
        %v2214 = vunpack.c.l.b16 %v2162
        %v2215 = vpack.c.b16 %v2200, %v2199
        %v2216 = vpack.c.b16 %v2202, %v2201
        %v2217 = vpack.c.b16 %v2204, %v2203
        %v2218 = vpack.c.b16 %v2206, %v2205
        %v2219 = vpack.c.b16 %v2208, %v2207
        %v2220 = vpack.c.b16 %v2210, %v2209
        %v2221 = vpack.c.b16 %v2212, %v2211
        %v2222 = vpack.c.b16 %v2214, %v2213
        %2231 = vmatprep.subr.bf16.mxu0 0
        %2232 = vmatpush1.bf16.msra.mxu0 %v2215
        %2233 = vmatprep.subr.bf16.mxu0 0
        %2234 = vmatpush1.bf16.msra.mxu0 %v2216
        %2235 = vmatprep.subr.bf16.mxu0 0
        %2236 = vmatpush1.bf16.msra.mxu0 %v2217
        %2237 = vmatprep.subr.bf16.mxu0 0
        %2238 = vmatpush1.bf16.msra.mxu0 %v2218
        %2239 = vmatprep.subr.bf16.mxu0 0
        %2240 = vmatpush1.bf16.msra.mxu0 %v2219
        %2241 = vmatprep.subr.bf16.mxu0 0
        %2242 = vmatpush1.bf16.msra.mxu0 %v2220
        %2243 = vmatprep.subr.bf16.mxu0 0
        %2244 = vmatpush1.bf16.msra.mxu0 %v2221
        %2245 = vmatprep.subr.bf16.mxu0 0
        %2246 = vmatpush1.bf16.msra.mxu0 %v2222
        %2247 = vmatprep.subr.bf16.mxu0 0
        %2248 = vmatpush1.bf16.msra.mxu0 0
        %2249 = vmatprep.subr.bf16.mxu0 0
        %2250 = vmatpush1.bf16.msra.mxu0 0
        %2251 = vmatprep.subr.bf16.mxu0 0
        %2252 = vmatpush1.bf16.msra.mxu0 0
        %2253 = vmatprep.subr.bf16.mxu0 0
        %2254 = vmatpush1.bf16.msra.mxu0 0
        %2255 = vmatprep.subr.bf16.mxu0 0
        %2256 = vmatpush1.bf16.msra.mxu0 0
        %2257 = vmatprep.subr.bf16.mxu0 0
        %2258 = vmatpush1.bf16.msra.mxu0 0
        %2259 = vmatprep.subr.bf16.mxu0 0
        %2260 = vmatpush1.bf16.msra.mxu0 0
        %2261 = vmatprep.subr.bf16.mxu0 0
        %2262 = vmatpush1.bf16.msra.mxu0 0
        %2263 = vmatprep.mubr.bf16.mxu0 0
        %2264 = vmatmul.mubr.bf16.gmra.mrb[0].mxu0 %v2175
        %v2265 = vpop.f32.mrb[0].mxu0
        %v2266 = vadd.f32 0.0, %v2265
        %v2267 = vpop.f32.mrb[0].mxu0
        %v2268 = vpop.f32.mrb[0].mxu0
        %v2269 = vadd.f32 0.0, %v2268
        %v2270 = vpop.f32.mrb[0].mxu0
        %2271 = vmatprep.mubr.bf16.mxu0 0
        %2272 = vmatmul.mubr.bf16.gmra.mrb[0].mxu0 %v2176
        %v2273 = vpop.f32.mrb[0].mxu0
        %v2274 = vadd.f32 0.0, %v2273
        %v2275 = vpop.f32.mrb[0].mxu0
        %v2276 = vpop.f32.mrb[0].mxu0
        %v2277 = vadd.f32 0.0, %v2276
        %v2278 = vpop.f32.mrb[0].mxu0
        %2279 = vmatprep.mubr.bf16.mxu0 0
        %2280 = vmatmul.mubr.bf16.gmra.mrb[0].mxu0 %v2177
        %v2281 = vpop.f32.mrb[0].mxu0
        %v2282 = vadd.f32 0.0, %v2281
        %v2283 = vpop.f32.mrb[0].mxu0
        %v2284 = vpop.f32.mrb[0].mxu0
        %v2285 = vadd.f32 0.0, %v2284
        %v2286 = vpop.f32.mrb[0].mxu0
        %2287 = vmatprep.mubr.bf16.mxu0 0
        %2288 = vmatmul.mubr.bf16.gmra.mrb[0].mxu0 %v2178
        %v2289 = vpop.f32.mrb[0].mxu0
        %v2290 = vadd.f32 0.0, %v2289
        %v2291 = vpop.f32.mrb[0].mxu0
        %v2292 = vpop.f32.mrb[0].mxu0
        %v2293 = vadd.f32 0.0, %v2292
        %v2294 = vpop.f32.mrb[0].mxu0
        %2295 = vdwg.mxu0
        %v2296 = vadd.f32 %v2138, %v2266
        %v2297 = vadd.f32 %v2139, %v2269
        %v2298 = vadd.f32 %v2140, %v2274
        %v2299 = vadd.f32 %v2141, %v2277
        %v2300 = vadd.f32 %v2142, %v2282
        %v2301 = vadd.f32 %v2143, %v2285
        %v2302 = vadd.f32 %v2144, %v2290
        %v2303 = vadd.f32 %v2145, %v2293
        %v2304 = vld [vmem:[%s3] sm:$0x1]
        %v2306 = vlaneseq
        %v2307 = vshrl.u32 %v2306, 7
        %v2308 = vsub.s32 0, %v2307
        %v2309 = vrot.slane %v2304, %v2308
        %v2311 = vmul.f32 %v2296, %v2309
        %v2312 = vmul.f32 %v2297, %v2309
        %v2313 = vmul.f32 %v2298, %v2309
        %v2314 = vmul.f32 %v2299, %v2309
        %v2315 = vmul.f32 %v2300, %v2309
        %v2316 = vmul.f32 %v2301, %v2309
        %v2317 = vmul.f32 %v2302, %v2309
        %v2318 = vmul.f32 %v2303, %v2309
        %v2319 = vld [vmem:[%s4] sm:$0x1]
        %v2321 = vlaneseq
        %v2322 = vshrl.u32 %v2321, 7
        %v2323 = vsub.s32 0, %v2322
        %v2324 = vrot.slane %v2319, %v2323
        %v2326 = vadd.f32 %v2311, %v2324
        %v2327 = vadd.f32 %v2312, %v2324
        %v2328 = vadd.f32 %v2313, %v2324
        %v2329 = vadd.f32 %v2314, %v2324
        %v2330 = vadd.f32 %v2315, %v2324
        %v2331 = vadd.f32 %v2316, %v2324
        %v2332 = vadd.f32 %v2317, %v2324
        %v2333 = vadd.f32 %v2318, %v2324
        %v2334 = vmax.f32 %v2326, 0.0
        %v2335 = vmax.f32 %v2327, 0.0
        %v2336 = vmax.f32 %v2328, 0.0
        %v2337 = vmax.f32 %v2329, 0.0
        %v2338 = vmax.f32 %v2330, 0.0
        %v2339 = vmax.f32 %v2331, 0.0
        %v2340 = vmax.f32 %v2332, 0.0
        %v2341 = vmax.f32 %v2333, 0.0
        %v2342 = vpack.c.bf16 %v2335, %v2334
        %v2343 = vpack.c.bf16 %v2337, %v2336
        %v2344 = vpack.c.bf16 %v2339, %v2338
        %v2345 = vpack.c.bf16 %v2341, %v2340
        %v2350 = vunpack.c.l.b16 %v2342
        %v2351 = vunpack.c.h.b16 %v2342
        %v2352 = vunpack.c.l.b16 %v2343
        %v2353 = vunpack.c.h.b16 %v2343
        %v2354 = vunpack.c.l.b16 %v2344
        %v2355 = vunpack.c.h.b16 %v2344
        %v2356 = vunpack.c.l.b16 %v2345
        %v2357 = vunpack.c.h.b16 %v2345
        %v2358 = vpack.c.b16 %v2350, %v2350
        %v2359 = vpack.c.b16 %v2351, %v2351
        %v2360 = vpack.c.b16 %v2352, %v2352
        %v2361 = vpack.c.b16 %v2353, %v2353
        %v2362 = vpack.c.b16 %v2354, %v2354
        %v2363 = vpack.c.b16 %v2355, %v2355
        %v2364 = vpack.c.b16 %v2356, %v2356
        %v2365 = vpack.c.b16 %v2357, %v2357
        %v2366 = vrot.slane %v2358, 6
        %v2367 = vrot.slane %v2366, 4
        %v2368 = vrot.slane %v2359, 6
        %v2369 = vsel %vm348, %v2367, %v2368
        %v2370 = vrot.slane %v2368, 4
        %v2371 = vrot.slane %v2360, 6
        %v2372 = vrot.slane %v2371, 4
        %v2373 = vrot.slane %v2361, 6
        %v2374 = vsel %vm348, %v2372, %v2373
        %v2375 = vrot.slane %v2373, 4
        %v2376 = vrot.slane %v2362, 6
        %v2377 = vrot.slane %v2376, 4
        %v2378 = vrot.slane %v2363, 6
        %v2379 = vsel %vm348, %v2377, %v2378
        %v2380 = vrot.slane %v2378, 4
        %v2381 = vrot.slane %v2364, 6
        %v2382 = vrot.slane %v2381, 4
        %v2383 = vrot.slane %v2365, 6
        %v2384 = vsel %vm348, %v2382, %v2383
        %v2385 = vrot.slane %v2383, 4
        %2398 = vst [vmem:[#allocation3] sm:$0xc] %v2366
        %2399 = vst [vmem:[#allocation3 + $0x4] sm:$0xf] %v2369
        %2400 = vst [vmem:[#allocation3 + $0x8] sm:$0x3] %v2370
        %2401 = vst [vmem:[#allocation3 + $0xc] sm:$0xc] %v2371
        %2402 = vst [vmem:[#allocation3 + $0x10] sm:$0xf] %v2374
        %2403 = vst [vmem:[#allocation3 + $0x14] sm:$0x3] %v2375
        %2404 = vst [vmem:[#allocation3 + $0x18] sm:$0xc] %v2376
        %2405 = vst [vmem:[#allocation3 + $0x1c] sm:$0xf] %v2379
        %2406 = vst [vmem:[#allocation3 + $0x20] sm:$0x3] %v2380
        %2407 = vst [vmem:[#allocation3 + $0x24] sm:$0xc] %v2381
        %2408 = vst [vmem:[#allocation3 + $0x28] sm:$0xf] %v2384
        %2409 = vst [vmem:[#allocation3 + $0x2c] sm:$0x3] %v2385
        %2410 = vst [vmem:[#allocation3] sm:$0x3] 0
        %2411 = vst [vmem:[#allocation3 + $0xc] sm:$0x3] 0
        %2412 = vst [vmem:[#allocation3 + $0x18] sm:$0x3] 0
        %2413 = vst [vmem:[#allocation3 + $0x24] sm:$0x3] 0
        %2414 = vst [vmem:[#allocation3 + $0x8] sm:$0xc] 0
        %2415 = vst [vmem:[#allocation3 + $0x14] sm:$0xc] 0
        %2416 = vst [vmem:[#allocation3 + $0x20] sm:$0xc] 0
        %2417 = vst [vmem:[#allocation3 + $0x2c] sm:$0xc] 0
        %v2418 = vld [vmem:[#allocation3] sm:$0xf]
        %v2419 = vld [vmem:[#allocation3 + $0x4] sm:$0xf]
        %v2420 = vld [vmem:[#allocation3 + $0xc] sm:$0xf]
        %v2421 = vld [vmem:[#allocation3 + $0x10] sm:$0xf]
        %v2422 = vld [vmem:[#allocation3 + $0x18] sm:$0xf]
        %v2423 = vld [vmem:[#allocation3 + $0x1c] sm:$0xf]
        %v2424 = vld [vmem:[#allocation3 + $0x24] sm:$0xf]
        %v2425 = vld [vmem:[#allocation3 + $0x28] sm:$0xf]
        %v2426 = vld [vmem:[#allocation9] sm:$0xf]
        %v2427 = vld [vmem:[#allocation9 + $0x4] sm:$0xf]
        %v2428 = vld [vmem:[#allocation9 + $0x8] sm:$0xf]
        %v2429 = vld [vmem:[#allocation9 + $0xc] sm:$0xf]
        %v2430 = vld [vmem:[#allocation9 + $0x10] sm:$0xf]
        %v2431 = vld [vmem:[#allocation9 + $0x14] sm:$0xf]
        %v2432 = vld [vmem:[#allocation9 + $0x18] sm:$0xf]
        %v2433 = vld [vmem:[#allocation9 + $0x1c] sm:$0xf]
        %v2434 = vld [vmem:[#allocation9 + $0x20] sm:$0xf]
        %v2435 = vld [vmem:[#allocation9 + $0x24] sm:$0xf]
        %v2436 = vld [vmem:[#allocation9 + $0x28] sm:$0xf]
        %v2437 = vld [vmem:[#allocation9 + $0x2c] sm:$0xf]
        %v2438 = vld [vmem:[#allocation9 + $0x30] sm:$0xf]
        %v2439 = vld [vmem:[#allocation9 + $0x34] sm:$0xf]
        %v2440 = vld [vmem:[#allocation9 + $0x38] sm:$0xf]
        %v2441 = vld [vmem:[#allocation9 + $0x3c] sm:$0xf]
        %v2442 = vld [vmem:[#allocation3] sm:$0xf]
        %v2443 = vld [vmem:[#allocation3 + $0x4] sm:$0xf]
        %v2444 = vld [vmem:[#allocation3 + $0x8] sm:$0x1]
        %v2445 = vld [vmem:[#allocation3 + $0xc] sm:$0xf]
        %v2446 = vld [vmem:[#allocation3 + $0x10] sm:$0xf]
        %v2447 = vld [vmem:[#allocation3 + $0x14] sm:$0x1]
        %v2448 = vld [vmem:[#allocation3 + $0x18] sm:$0xf]
        %v2449 = vld [vmem:[#allocation3 + $0x1c] sm:$0xf]
        %v2450 = vld [vmem:[#allocation3 + $0x20] sm:$0x1]
        %v2451 = vld [vmem:[#allocation3 + $0x24] sm:$0xf]
        %v2452 = vld [vmem:[#allocation3 + $0x28] sm:$0xf]
        %v2453 = vld [vmem:[#allocation3 + $0x2c] sm:$0x1]
        %v2455 = vshrl.u32 %v2442, 16
        %v2457 = vrot.slane %v2455, 4
        %v2458 = vshll.u32 %v2442, 16
        %v2460 = vrot.slane %v2458, 5
        %v2461 = vor.u32 %v2457, %v2460
        %v2462 = vrot.slane %v2461, 4
        %v2464 = vshll.u32 %v2443, 16
        %v2466 = vrot.slane %v2464, 5
        %v2467 = vsel %vm439, %v2462, %v2466
        %v2468 = vshrl.u32 %v2443, 16
        %v2470 = vrot.slane %v2468, 4
        %v2471 = vor.u32 %v2470, %v2466
        %v2472 = vrot.slane %v2471, 4
        %v2474 = vshll.u32 %v2444, 16
        %v2476 = vrot.slane %v2474, 5
        %v2477 = vsel %vm439, %v2472, %v2476
        %v2479 = vshrl.u32 %v2445, 16
        %v2481 = vrot.slane %v2479, 4
        %v2482 = vshll.u32 %v2445, 16
        %v2484 = vrot.slane %v2482, 5
        %v2485 = vor.u32 %v2481, %v2484
        %v2486 = vrot.slane %v2485, 4
        %v2488 = vshll.u32 %v2446, 16
        %v2490 = vrot.slane %v2488, 5
        %v2491 = vsel %vm439, %v2486, %v2490
        %v2492 = vshrl.u32 %v2446, 16
        %v2494 = vrot.slane %v2492, 4
        %v2495 = vor.u32 %v2494, %v2490
        %v2496 = vrot.slane %v2495, 4
        %v2498 = vshll.u32 %v2447, 16
        %v2500 = vrot.slane %v2498, 5
        %v2501 = vsel %vm439, %v2496, %v2500
        %v2503 = vshrl.u32 %v2448, 16
        %v2505 = vrot.slane %v2503, 4
        %v2506 = vshll.u32 %v2448, 16
        %v2508 = vrot.slane %v2506, 5
        %v2509 = vor.u32 %v2505, %v2508
        %v2510 = vrot.slane %v2509, 4
        %v2512 = vshll.u32 %v2449, 16
        %v2514 = vrot.slane %v2512, 5
        %v2515 = vsel %vm439, %v2510, %v2514
        %v2516 = vshrl.u32 %v2449, 16
        %v2518 = vrot.slane %v2516, 4
        %v2519 = vor.u32 %v2518, %v2514
        %v2520 = vrot.slane %v2519, 4
        %v2522 = vshll.u32 %v2450, 16
        %v2524 = vrot.slane %v2522, 5
        %v2525 = vsel %vm439, %v2520, %v2524
        %v2527 = vshrl.u32 %v2451, 16
        %v2529 = vrot.slane %v2527, 4
        %v2530 = vshll.u32 %v2451, 16
        %v2532 = vrot.slane %v2530, 5
        %v2533 = vor.u32 %v2529, %v2532
        %v2534 = vrot.slane %v2533, 4
        %v2536 = vshll.u32 %v2452, 16
        %v2538 = vrot.slane %v2536, 5
        %v2539 = vsel %vm439, %v2534, %v2538
        %v2540 = vshrl.u32 %v2452, 16
        %v2542 = vrot.slane %v2540, 4
        %v2543 = vor.u32 %v2542, %v2538
        %v2544 = vrot.slane %v2543, 4
        %v2546 = vshll.u32 %v2453, 16
        %v2548 = vrot.slane %v2546, 5
        %v2549 = vsel %vm439, %v2544, %v2548
        %s2550 = scalar_lea.vmem [#allocation9], 64
        %v2551 = vld [vmem:[%s2550] sm:$0xf]
        %v2552 = vld [vmem:[%s2550 + $0x4] sm:$0xf]
        %v2553 = vld [vmem:[%s2550 + $0x8] sm:$0xf]
        %v2554 = vld [vmem:[%s2550 + $0xc] sm:$0xf]
        %v2555 = vld [vmem:[%s2550 + $0x10] sm:$0xf]
        %v2556 = vld [vmem:[%s2550 + $0x14] sm:$0xf]
        %v2557 = vld [vmem:[%s2550 + $0x18] sm:$0xf]
        %v2558 = vld [vmem:[%s2550 + $0x1c] sm:$0xf]
        %v2559 = vld [vmem:[%s2550 + $0x20] sm:$0xf]
        %v2560 = vld [vmem:[%s2550 + $0x24] sm:$0xf]
        %v2561 = vld [vmem:[%s2550 + $0x28] sm:$0xf]
        %v2562 = vld [vmem:[%s2550 + $0x2c] sm:$0xf]
        %v2563 = vld [vmem:[%s2550 + $0x30] sm:$0xf]
        %v2564 = vld [vmem:[%s2550 + $0x34] sm:$0xf]
        %v2565 = vld [vmem:[%s2550 + $0x38] sm:$0xf]
        %v2566 = vld [vmem:[%s2550 + $0x3c] sm:$0xf]
        %v2567 = vunpack.c.l.b16 %v2467
        %v2568 = vunpack.c.l.b16 %v2477
        %v2569 = vunpack.c.l.b16 %v2491
        %v2570 = vunpack.c.l.b16 %v2501
        %v2571 = vunpack.c.l.b16 %v2515
        %v2572 = vunpack.c.l.b16 %v2525
        %v2573 = vunpack.c.l.b16 %v2539
        %v2574 = vunpack.c.l.b16 %v2549
        %v2575 = vpack.c.b16 %v2568, %v2567
        %v2576 = vpack.c.b16 %v2570, %v2569
        %v2577 = vpack.c.b16 %v2572, %v2571
        %v2578 = vpack.c.b16 %v2574, %v2573
        %v2599 = vunpack.c.l.b16 %v2551
        %v2600 = vunpack.c.l.b16 %v2552
        %v2601 = vunpack.c.l.b16 %v2553
        %v2602 = vunpack.c.l.b16 %v2554
        %v2603 = vunpack.c.l.b16 %v2555
        %v2604 = vunpack.c.l.b16 %v2556
        %v2605 = vunpack.c.l.b16 %v2557
        %v2606 = vunpack.c.l.b16 %v2558
        %v2607 = vunpack.c.l.b16 %v2559
        %v2608 = vunpack.c.l.b16 %v2560
        %v2609 = vunpack.c.l.b16 %v2561
        %v2610 = vunpack.c.l.b16 %v2562
        %v2611 = vunpack.c.l.b16 %v2563
        %v2612 = vunpack.c.l.b16 %v2564
        %v2613 = vunpack.c.l.b16 %v2565
        %v2614 = vunpack.c.l.b16 %v2566
        %v2615 = vpack.c.b16 %v2600, %v2599
        %v2616 = vpack.c.b16 %v2602, %v2601
        %v2617 = vpack.c.b16 %v2604, %v2603
        %v2618 = vpack.c.b16 %v2606, %v2605
        %v2619 = vpack.c.b16 %v2608, %v2607
        %v2620 = vpack.c.b16 %v2610, %v2609
        %v2621 = vpack.c.b16 %v2612, %v2611
        %v2622 = vpack.c.b16 %v2614, %v2613
        %2631 = vmatprep.subr.bf16.mxu0 0
        %2632 = vmatpush1.bf16.msra.mxu0 %v2615
        %2633 = vmatprep.subr.bf16.mxu0 0
        %2634 = vmatpush1.bf16.msra.mxu0 %v2616
        %2635 = vmatprep.subr.bf16.mxu0 0
        %2636 = vmatpush1.bf16.msra.mxu0 %v2617
        %2637 = vmatprep.subr.bf16.mxu0 0
        %2638 = vmatpush1.bf16.msra.mxu0 %v2618
        %2639 = vmatprep.subr.bf16.mxu0 0
        %2640 = vmatpush1.bf16.msra.mxu0 %v2619
        %2641 = vmatprep.subr.bf16.mxu0 0
        %2642 = vmatpush1.bf16.msra.mxu0 %v2620
        %2643 = vmatprep.subr.bf16.mxu0 0
        %2644 = vmatpush1.bf16.msra.mxu0 %v2621
        %2645 = vmatprep.subr.bf16.mxu0 0
        %2646 = vmatpush1.bf16.msra.mxu0 %v2622
        %2647 = vmatprep.subr.bf16.mxu0 0
        %2648 = vmatpush1.bf16.msra.mxu0 0
        %2649 = vmatprep.subr.bf16.mxu0 0
        %2650 = vmatpush1.bf16.msra.mxu0 0
        %2651 = vmatprep.subr.bf16.mxu0 0
        %2652 = vmatpush1.bf16.msra.mxu0 0
        %2653 = vmatprep.subr.bf16.mxu0 0
        %2654 = vmatpush1.bf16.msra.mxu0 0
        %2655 = vmatprep.subr.bf16.mxu0 0
        %2656 = vmatpush1.bf16.msra.mxu0 0
        %2657 = vmatprep.subr.bf16.mxu0 0
        %2658 = vmatpush1.bf16.msra.mxu0 0
        %2659 = vmatprep.subr.bf16.mxu0 0
        %2660 = vmatpush1.bf16.msra.mxu0 0
        %2661 = vmatprep.subr.bf16.mxu0 0
        %2662 = vmatpush1.bf16.msra.mxu0 0
        %2663 = vmatprep.mubr.bf16.mxu0 0
        %2664 = vmatmul.mubr.bf16.gmra.mrb[0].mxu0 %v2575
        %v2665 = vpop.f32.mrb[0].mxu0
        %v2666 = vadd.f32 0.0, %v2665
        %v2667 = vpop.f32.mrb[0].mxu0
        %v2668 = vpop.f32.mrb[0].mxu0
        %v2669 = vadd.f32 0.0, %v2668
        %v2670 = vpop.f32.mrb[0].mxu0
        %2671 = vmatprep.mubr.bf16.mxu0 0
        %2672 = vmatmul.mubr.bf16.gmra.mrb[0].mxu0 %v2576
        %v2673 = vpop.f32.mrb[0].mxu0
        %v2674 = vadd.f32 0.0, %v2673
        %v2675 = vpop.f32.mrb[0].mxu0
        %v2676 = vpop.f32.mrb[0].mxu0
        %v2677 = vadd.f32 0.0, %v2676
        %v2678 = vpop.f32.mrb[0].mxu0
        %2679 = vmatprep.mubr.bf16.mxu0 0
        %2680 = vmatmul.mubr.bf16.gmra.mrb[0].mxu0 %v2577
        %v2681 = vpop.f32.mrb[0].mxu0
        %v2682 = vadd.f32 0.0, %v2681
        %v2683 = vpop.f32.mrb[0].mxu0
        %v2684 = vpop.f32.mrb[0].mxu0
        %v2685 = vadd.f32 0.0, %v2684
        %v2686 = vpop.f32.mrb[0].mxu0
        %2687 = vmatprep.mubr.bf16.mxu0 0
        %2688 = vmatmul.mubr.bf16.gmra.mrb[0].mxu0 %v2578
        %v2689 = vpop.f32.mrb[0].mxu0
        %v2690 = vadd.f32 0.0, %v2689
        %v2691 = vpop.f32.mrb[0].mxu0
        %v2692 = vpop.f32.mrb[0].mxu0
        %v2693 = vadd.f32 0.0, %v2692
        %v2694 = vpop.f32.mrb[0].mxu0
        %2695 = vdwg.mxu0
        %v2704 = vunpack.c.l.b16 %v2418
        %v2705 = vunpack.c.l.b16 %v2419
        %v2706 = vunpack.c.l.b16 %v2420
        %v2707 = vunpack.c.l.b16 %v2421
        %v2708 = vunpack.c.l.b16 %v2422
        %v2709 = vunpack.c.l.b16 %v2423
        %v2710 = vunpack.c.l.b16 %v2424
        %v2711 = vunpack.c.l.b16 %v2425
        %v2712 = vpack.c.b16 %v2705, %v2704
        %v2713 = vpack.c.b16 %v2707, %v2706
        %v2714 = vpack.c.b16 %v2709, %v2708
        %v2715 = vpack.c.b16 %v2711, %v2710
        %v2736 = vunpack.c.l.b16 %v2426
        %v2737 = vunpack.c.l.b16 %v2427
        %v2738 = vunpack.c.l.b16 %v2428
        %v2739 = vunpack.c.l.b16 %v2429
        %v2740 = vunpack.c.l.b16 %v2430
        %v2741 = vunpack.c.l.b16 %v2431
        %v2742 = vunpack.c.l.b16 %v2432
        %v2743 = vunpack.c.l.b16 %v2433
        %v2744 = vunpack.c.l.b16 %v2434
        %v2745 = vunpack.c.l.b16 %v2435
        %v2746 = vunpack.c.l.b16 %v2436
        %v2747 = vunpack.c.l.b16 %v2437
        %v2748 = vunpack.c.l.b16 %v2438
        %v2749 = vunpack.c.l.b16 %v2439
        %v2750 = vunpack.c.l.b16 %v2440
        %v2751 = vunpack.c.l.b16 %v2441
        %v2752 = vpack.c.b16 %v2737, %v2736
        %v2753 = vpack.c.b16 %v2739, %v2738
        %v2754 = vpack.c.b16 %v2741, %v2740
        %v2755 = vpack.c.b16 %v2743, %v2742
        %v2756 = vpack.c.b16 %v2745, %v2744
        %v2757 = vpack.c.b16 %v2747, %v2746
        %v2758 = vpack.c.b16 %v2749, %v2748
        %v2759 = vpack.c.b16 %v2751, %v2750
        %2768 = vmatprep.subr.bf16.mxu0 0
        %2769 = vmatpush1.bf16.msra.mxu0 %v2752
        %2770 = vmatprep.subr.bf16.mxu0 0
        %2771 = vmatpush1.bf16.msra.mxu0 %v2753
        %2772 = vmatprep.subr.bf16.mxu0 0
        %2773 = vmatpush1.bf16.msra.mxu0 %v2754
        %2774 = vmatprep.subr.bf16.mxu0 0
        %2775 = vmatpush1.bf16.msra.mxu0 %v2755
        %2776 = vmatprep.subr.bf16.mxu0 0
        %2777 = vmatpush1.bf16.msra.mxu0 %v2756
        %2778 = vmatprep.subr.bf16.mxu0 0
        %2779 = vmatpush1.bf16.msra.mxu0 %v2757
        %2780 = vmatprep.subr.bf16.mxu0 0
        %2781 = vmatpush1.bf16.msra.mxu0 %v2758
        %2782 = vmatprep.subr.bf16.mxu0 0
        %2783 = vmatpush1.bf16.msra.mxu0 %v2759
        %2784 = vmatprep.subr.bf16.mxu0 0
        %2785 = vmatpush1.bf16.msra.mxu0 0
        %2786 = vmatprep.subr.bf16.mxu0 0
        %2787 = vmatpush1.bf16.msra.mxu0 0
        %2788 = vmatprep.subr.bf16.mxu0 0
        %2789 = vmatpush1.bf16.msra.mxu0 0
        %2790 = vmatprep.subr.bf16.mxu0 0
        %2791 = vmatpush1.bf16.msra.mxu0 0
        %2792 = vmatprep.subr.bf16.mxu0 0
        %2793 = vmatpush1.bf16.msra.mxu0 0
        %2794 = vmatprep.subr.bf16.mxu0 0
        %2795 = vmatpush1.bf16.msra.mxu0 0
        %2796 = vmatprep.subr.bf16.mxu0 0
        %2797 = vmatpush1.bf16.msra.mxu0 0
        %2798 = vmatprep.subr.bf16.mxu0 0
        %2799 = vmatpush1.bf16.msra.mxu0 0
        %2800 = vmatprep.mubr.bf16.mxu0 0
        %2801 = vmatmul.mubr.bf16.gmra.mrb[0].mxu0 %v2712
        %v2802 = vpop.f32.mrb[0].mxu0
        %v2803 = vadd.f32 %v2666, %v2802
        %v2804 = vpop.f32.mrb[0].mxu0
        %v2805 = vpop.f32.mrb[0].mxu0
        %v2806 = vadd.f32 %v2669, %v2805
        %v2807 = vpop.f32.mrb[0].mxu0
        %2808 = vmatprep.mubr.bf16.mxu0 0
        %2809 = vmatmul.mubr.bf16.gmra.mrb[0].mxu0 %v2713
        %v2810 = vpop.f32.mrb[0].mxu0
        %v2811 = vadd.f32 %v2674, %v2810
        %v2812 = vpop.f32.mrb[0].mxu0
        %v2813 = vpop.f32.mrb[0].mxu0
        %v2814 = vadd.f32 %v2677, %v2813
        %v2815 = vpop.f32.mrb[0].mxu0
        %2816 = vmatprep.mubr.bf16.mxu0 0
        %2817 = vmatmul.mubr.bf16.gmra.mrb[0].mxu0 %v2714
        %v2818 = vpop.f32.mrb[0].mxu0
        %v2819 = vadd.f32 %v2682, %v2818
        %v2820 = vpop.f32.mrb[0].mxu0
        %v2821 = vpop.f32.mrb[0].mxu0
        %v2822 = vadd.f32 %v2685, %v2821
        %v2823 = vpop.f32.mrb[0].mxu0
        %2824 = vmatprep.mubr.bf16.mxu0 0
        %2825 = vmatmul.mubr.bf16.gmra.mrb[0].mxu0 %v2715
        %v2826 = vpop.f32.mrb[0].mxu0
        %v2827 = vadd.f32 %v2690, %v2826
        %v2828 = vpop.f32.mrb[0].mxu0
        %v2829 = vpop.f32.mrb[0].mxu0
        %v2830 = vadd.f32 %v2693, %v2829
        %v2831 = vpop.f32.mrb[0].mxu0
        %2832 = vdwg.mxu0
        %v2833 = vld [vmem:[#allocation3] sm:$0xe]
        %v2834 = vld [vmem:[#allocation3 + $0xc] sm:$0xe]
        %v2835 = vld [vmem:[#allocation3 + $0x18] sm:$0xe]
        %v2836 = vld [vmem:[#allocation3 + $0x24] sm:$0xe]
        %v2849 = vrot.slane %v2833, 5
        %v2850 = vrot.slane %v2849, 4
        %v2851 = vrot.slane %v2443, 5
        %v2852 = vsel %vm837, %v2850, %v2851
        %v2853 = vrot.slane %v2851, 4
        %v2854 = vrot.slane %v2444, 5
        %v2855 = vsel %vm837, %v2853, %v2854
        %v2856 = vrot.slane %v2834, 5
        %v2857 = vrot.slane %v2856, 4
        %v2858 = vrot.slane %v2446, 5
        %v2859 = vsel %vm837, %v2857, %v2858
        %v2860 = vrot.slane %v2858, 4
        %v2861 = vrot.slane %v2447, 5
        %v2862 = vsel %vm837, %v2860, %v2861
        %v2863 = vrot.slane %v2835, 5
        %v2864 = vrot.slane %v2863, 4
        %v2865 = vrot.slane %v2449, 5
        %v2866 = vsel %vm837, %v2864, %v2865
        %v2867 = vrot.slane %v2865, 4
        %v2868 = vrot.slane %v2450, 5
        %v2869 = vsel %vm837, %v2867, %v2868
        %v2870 = vrot.slane %v2836, 5
        %v2871 = vrot.slane %v2870, 4
        %v2872 = vrot.slane %v2452, 5
        %v2873 = vsel %vm837, %v2871, %v2872
        %v2874 = vrot.slane %v2872, 4
        %v2875 = vrot.slane %v2453, 5
        %v2876 = vsel %vm837, %v2874, %v2875
        %s2877 = scalar_lea.vmem [#allocation9], 128
        %v2878 = vld [vmem:[%s2877] sm:$0xf]
        %v2879 = vld [vmem:[%s2877 + $0x4] sm:$0xf]
        %v2880 = vld [vmem:[%s2877 + $0x8] sm:$0xf]
        %v2881 = vld [vmem:[%s2877 + $0xc] sm:$0xf]
        %v2882 = vld [vmem:[%s2877 + $0x10] sm:$0xf]
        %v2883 = vld [vmem:[%s2877 + $0x14] sm:$0xf]
        %v2884 = vld [vmem:[%s2877 + $0x18] sm:$0xf]
        %v2885 = vld [vmem:[%s2877 + $0x1c] sm:$0xf]
        %v2886 = vld [vmem:[%s2877 + $0x20] sm:$0xf]
        %v2887 = vld [vmem:[%s2877 + $0x24] sm:$0xf]
        %v2888 = vld [vmem:[%s2877 + $0x28] sm:$0xf]
        %v2889 = vld [vmem:[%s2877 + $0x2c] sm:$0xf]
        %v2890 = vld [vmem:[%s2877 + $0x30] sm:$0xf]
        %v2891 = vld [vmem:[%s2877 + $0x34] sm:$0xf]
        %v2892 = vld [vmem:[%s2877 + $0x38] sm:$0xf]
        %v2893 = vld [vmem:[%s2877 + $0x3c] sm:$0xf]
        %v2894 = vunpack.c.l.b16 %v2852
        %v2895 = vunpack.c.l.b16 %v2855
        %v2896 = vunpack.c.l.b16 %v2859
        %v2897 = vunpack.c.l.b16 %v2862
        %v2898 = vunpack.c.l.b16 %v2866
        %v2899 = vunpack.c.l.b16 %v2869
        %v2900 = vunpack.c.l.b16 %v2873
        %v2901 = vunpack.c.l.b16 %v2876
        %v2902 = vpack.c.b16 %v2895, %v2894
        %v2903 = vpack.c.b16 %v2897, %v2896
        %v2904 = vpack.c.b16 %v2899, %v2898
        %v2905 = vpack.c.b16 %v2901, %v2900
        %v2926 = vunpack.c.l.b16 %v2878
        %v2927 = vunpack.c.l.b16 %v2879
        %v2928 = vunpack.c.l.b16 %v2880
        %v2929 = vunpack.c.l.b16 %v2881
        %v2930 = vunpack.c.l.b16 %v2882
        %v2931 = vunpack.c.l.b16 %v2883
        %v2932 = vunpack.c.l.b16 %v2884
        %v2933 = vunpack.c.l.b16 %v2885
        %v2934 = vunpack.c.l.b16 %v2886
        %v2935 = vunpack.c.l.b16 %v2887
        %v2936 = vunpack.c.l.b16 %v2888
        %v2937 = vunpack.c.l.b16 %v2889
        %v2938 = vunpack.c.l.b16 %v2890
        %v2939 = vunpack.c.l.b16 %v2891
        %v2940 = vunpack.c.l.b16 %v2892
        %v2941 = vunpack.c.l.b16 %v2893
        %v2942 = vpack.c.b16 %v2927, %v2926
        %v2943 = vpack.c.b16 %v2929, %v2928
        %v2944 = vpack.c.b16 %v2931, %v2930
        %v2945 = vpack.c.b16 %v2933, %v2932
        %v2946 = vpack.c.b16 %v2935, %v2934
        %v2947 = vpack.c.b16 %v2937, %v2936
        %v2948 = vpack.c.b16 %v2939, %v2938
        %v2949 = vpack.c.b16 %v2941, %v2940
        %2958 = vmatprep.subr.bf16.mxu0 0
        %2959 = vmatpush1.bf16.msra.mxu0 %v2942
        %2960 = vmatprep.subr.bf16.mxu0 0
        %2961 = vmatpush1.bf16.msra.mxu0 %v2943
        %2962 = vmatprep.subr.bf16.mxu0 0
        %2963 = vmatpush1.bf16.msra.mxu0 %v2944
        %2964 = vmatprep.subr.bf16.mxu0 0
        %2965 = vmatpush1.bf16.msra.mxu0 %v2945
        %2966 = vmatprep.subr.bf16.mxu0 0
        %2967 = vmatpush1.bf16.msra.mxu0 %v2946
        %2968 = vmatprep.subr.bf16.mxu0 0
        %2969 = vmatpush1.bf16.msra.mxu0 %v2947
        %2970 = vmatprep.subr.bf16.mxu0 0
        %2971 = vmatpush1.bf16.msra.mxu0 %v2948
        %2972 = vmatprep.subr.bf16.mxu0 0
        %2973 = vmatpush1.bf16.msra.mxu0 %v2949
        %2974 = vmatprep.subr.bf16.mxu0 0
        %2975 = vmatpush1.bf16.msra.mxu0 0
        %2976 = vmatprep.subr.bf16.mxu0 0
        %2977 = vmatpush1.bf16.msra.mxu0 0
        %2978 = vmatprep.subr.bf16.mxu0 0
        %2979 = vmatpush1.bf16.msra.mxu0 0
        %2980 = vmatprep.subr.bf16.mxu0 0
        %2981 = vmatpush1.bf16.msra.mxu0 0
        %2982 = vmatprep.subr.bf16.mxu0 0
        %2983 = vmatpush1.bf16.msra.mxu0 0
        %2984 = vmatprep.subr.bf16.mxu0 0
        %2985 = vmatpush1.bf16.msra.mxu0 0
        %2986 = vmatprep.subr.bf16.mxu0 0
        %2987 = vmatpush1.bf16.msra.mxu0 0
        %2988 = vmatprep.subr.bf16.mxu0 0
        %2989 = vmatpush1.bf16.msra.mxu0 0
        %2990 = vmatprep.mubr.bf16.mxu0 0
        %2991 = vmatmul.mubr.bf16.gmra.mrb[0].mxu0 %v2902
        %v2992 = vpop.f32.mrb[0].mxu0
        %v2993 = vadd.f32 0.0, %v2992
        %v2994 = vpop.f32.mrb[0].mxu0
        %v2995 = vpop.f32.mrb[0].mxu0
        %v2996 = vadd.f32 0.0, %v2995
        %v2997 = vpop.f32.mrb[0].mxu0
        %2998 = vmatprep.mubr.bf16.mxu0 0
        %2999 = vmatmul.mubr.bf16.gmra.mrb[0].mxu0 %v2903
        %v3000 = vpop.f32.mrb[0].mxu0
        %v3001 = vadd.f32 0.0, %v3000
        %v3002 = vpop.f32.mrb[0].mxu0
        %v3003 = vpop.f32.mrb[0].mxu0
        %v3004 = vadd.f32 0.0, %v3003
        %v3005 = vpop.f32.mrb[0].mxu0
        %3006 = vmatprep.mubr.bf16.mxu0 0
        %3007 = vmatmul.mubr.bf16.gmra.mrb[0].mxu0 %v2904
        %v3008 = vpop.f32.mrb[0].mxu0
        %v3009 = vadd.f32 0.0, %v3008
        %v3010 = vpop.f32.mrb[0].mxu0
        %v3011 = vpop.f32.mrb[0].mxu0
        %v3012 = vadd.f32 0.0, %v3011
        %v3013 = vpop.f32.mrb[0].mxu0
        %3014 = vmatprep.mubr.bf16.mxu0 0
        %3015 = vmatmul.mubr.bf16.gmra.mrb[0].mxu0 %v2905
        %v3016 = vpop.f32.mrb[0].mxu0
        %v3017 = vadd.f32 0.0, %v3016
        %v3018 = vpop.f32.mrb[0].mxu0
        %v3019 = vpop.f32.mrb[0].mxu0
        %v3020 = vadd.f32 0.0, %v3019
        %v3021 = vpop.f32.mrb[0].mxu0
        %3022 = vdwg.mxu0
        %v3023 = vadd.f32 %v2803, %v2993
        %v3024 = vadd.f32 %v2806, %v2996
        %v3025 = vadd.f32 %v2811, %v3001
        %v3026 = vadd.f32 %v2814, %v3004
        %v3027 = vadd.f32 %v2819, %v3009
        %v3028 = vadd.f32 %v2822, %v3012
        %v3029 = vadd.f32 %v2827, %v3017
        %v3030 = vadd.f32 %v2830, %v3020
        %v3031 = vld [vmem:[#allocation3 + $0x8] sm:$0x3]
        %v3032 = vld [vmem:[#allocation3 + $0x14] sm:$0x3]
        %v3033 = vld [vmem:[#allocation3 + $0x20] sm:$0x3]
        %v3034 = vld [vmem:[#allocation3 + $0x2c] sm:$0x3]
        %v3036 = vshrl.u32 %v2833, 16
        %v3038 = vrot.slane %v3036, 5
        %v3039 = vshll.u32 %v2833, 16
        %v3041 = vrot.slane %v3039, 6
        %v3042 = vor.u32 %v3038, %v3041
        %v3043 = vrot.slane %v3042, 4
        %v3044 = vrot.slane %v2468, 5
        %v3045 = vrot.slane %v2464, 6
        %v3046 = vor.u32 %v3044, %v3045
        %v3047 = vsel %vm1026, %v3043, %v3046
        %v3048 = vrot.slane %v3046, 4
        %v3050 = vshrl.u32 %v3031, 16
        %v3052 = vrot.slane %v3050, 5
        %v3053 = vshll.u32 %v3031, 16
        %v3055 = vrot.slane %v3053, 6
        %v3056 = vor.u32 %v3052, %v3055
        %v3057 = vsel %vm1026, %v3048, %v3056
        %v3059 = vshrl.u32 %v2834, 16
        %v3061 = vrot.slane %v3059, 5
        %v3062 = vshll.u32 %v2834, 16
        %v3064 = vrot.slane %v3062, 6
        %v3065 = vor.u32 %v3061, %v3064
        %v3066 = vrot.slane %v3065, 4
        %v3067 = vrot.slane %v2492, 5
        %v3068 = vrot.slane %v2488, 6
        %v3069 = vor.u32 %v3067, %v3068
        %v3070 = vsel %vm1026, %v3066, %v3069
        %v3071 = vrot.slane %v3069, 4
        %v3073 = vshrl.u32 %v3032, 16
        %v3075 = vrot.slane %v3073, 5
        %v3076 = vshll.u32 %v3032, 16
        %v3078 = vrot.slane %v3076, 6
        %v3079 = vor.u32 %v3075, %v3078
        %v3080 = vsel %vm1026, %v3071, %v3079
        %v3082 = vshrl.u32 %v2835, 16
        %v3084 = vrot.slane %v3082, 5
        %v3085 = vshll.u32 %v2835, 16
        %v3087 = vrot.slane %v3085, 6
        %v3088 = vor.u32 %v3084, %v3087
        %v3089 = vrot.slane %v3088, 4
        %v3090 = vrot.slane %v2516, 5
        %v3091 = vrot.slane %v2512, 6
        %v3092 = vor.u32 %v3090, %v3091
        %v3093 = vsel %vm1026, %v3089, %v3092
        %v3094 = vrot.slane %v3092, 4
        %v3096 = vshrl.u32 %v3033, 16
        %v3098 = vrot.slane %v3096, 5
        %v3099 = vshll.u32 %v3033, 16
        %v3101 = vrot.slane %v3099, 6
        %v3102 = vor.u32 %v3098, %v3101
        %v3103 = vsel %vm1026, %v3094, %v3102
        %v3105 = vshrl.u32 %v2836, 16
        %v3107 = vrot.slane %v3105, 5
        %v3108 = vshll.u32 %v2836, 16
        %v3110 = vrot.slane %v3108, 6
        %v3111 = vor.u32 %v3107, %v3110
        %v3112 = vrot.slane %v3111, 4
        %v3113 = vrot.slane %v2540, 5
        %v3114 = vrot.slane %v2536, 6
        %v3115 = vor.u32 %v3113, %v3114
        %v3116 = vsel %vm1026, %v3112, %v3115
        %v3117 = vrot.slane %v3115, 4
        %v3119 = vshrl.u32 %v3034, 16
        %v3121 = vrot.slane %v3119, 5
        %v3122 = vshll.u32 %v3034, 16
        %v3124 = vrot.slane %v3122, 6
        %v3125 = vor.u32 %v3121, %v3124
        %v3126 = vsel %vm1026, %v3117, %v3125
        %s3127 = scalar_lea.vmem [#allocation9], 192
        %v3128 = vld [vmem:[%s3127] sm:$0xf]
        %v3129 = vld [vmem:[%s3127 + $0x4] sm:$0xf]
        %v3130 = vld [vmem:[%s3127 + $0x8] sm:$0xf]
        %v3131 = vld [vmem:[%s3127 + $0xc] sm:$0xf]
        %v3132 = vld [vmem:[%s3127 + $0x10] sm:$0xf]
        %v3133 = vld [vmem:[%s3127 + $0x14] sm:$0xf]
        %v3134 = vld [vmem:[%s3127 + $0x18] sm:$0xf]
        %v3135 = vld [vmem:[%s3127 + $0x1c] sm:$0xf]
        %v3136 = vld [vmem:[%s3127 + $0x20] sm:$0xf]
        %v3137 = vld [vmem:[%s3127 + $0x24] sm:$0xf]
        %v3138 = vld [vmem:[%s3127 + $0x28] sm:$0xf]
        %v3139 = vld [vmem:[%s3127 + $0x2c] sm:$0xf]
        %v3140 = vld [vmem:[%s3127 + $0x30] sm:$0xf]
        %v3141 = vld [vmem:[%s3127 + $0x34] sm:$0xf]
        %v3142 = vld [vmem:[%s3127 + $0x38] sm:$0xf]
        %v3143 = vld [vmem:[%s3127 + $0x3c] sm:$0xf]
        %v3144 = vunpack.c.l.b16 %v3047
        %v3145 = vunpack.c.l.b16 %v3057
        %v3146 = vunpack.c.l.b16 %v3070
        %v3147 = vunpack.c.l.b16 %v3080
        %v3148 = vunpack.c.l.b16 %v3093
        %v3149 = vunpack.c.l.b16 %v3103
        %v3150 = vunpack.c.l.b16 %v3116
        %v3151 = vunpack.c.l.b16 %v3126
        %v3152 = vpack.c.b16 %v3145, %v3144
        %v3153 = vpack.c.b16 %v3147, %v3146
        %v3154 = vpack.c.b16 %v3149, %v3148
        %v3155 = vpack.c.b16 %v3151, %v3150
        %v3176 = vunpack.c.l.b16 %v3128
        %v3177 = vunpack.c.l.b16 %v3129
        %v3178 = vunpack.c.l.b16 %v3130
        %v3179 = vunpack.c.l.b16 %v3131
        %v3180 = vunpack.c.l.b16 %v3132
        %v3181 = vunpack.c.l.b16 %v3133
        %v3182 = vunpack.c.l.b16 %v3134
        %v3183 = vunpack.c.l.b16 %v3135
        %v3184 = vunpack.c.l.b16 %v3136
        %v3185 = vunpack.c.l.b16 %v3137
        %v3186 = vunpack.c.l.b16 %v3138
        %v3187 = vunpack.c.l.b16 %v3139
        %v3188 = vunpack.c.l.b16 %v3140
        %v3189 = vunpack.c.l.b16 %v3141
        %v3190 = vunpack.c.l.b16 %v3142
        %v3191 = vunpack.c.l.b16 %v3143
        %v3192 = vpack.c.b16 %v3177, %v3176
        %v3193 = vpack.c.b16 %v3179, %v3178
        %v3194 = vpack.c.b16 %v3181, %v3180
        %v3195 = vpack.c.b16 %v3183, %v3182
        %v3196 = vpack.c.b16 %v3185, %v3184
        %v3197 = vpack.c.b16 %v3187, %v3186
        %v3198 = vpack.c.b16 %v3189, %v3188
        %v3199 = vpack.c.b16 %v3191, %v3190
        %3208 = vmatprep.subr.bf16.mxu0 0
        %3209 = vmatpush1.bf16.msra.mxu0 %v3192
        %3210 = vmatprep.subr.bf16.mxu0 0
        %3211 = vmatpush1.bf16.msra.mxu0 %v3193
        %3212 = vmatprep.subr.bf16.mxu0 0
        %3213 = vmatpush1.bf16.msra.mxu0 %v3194
        %3214 = vmatprep.subr.bf16.mxu0 0
        %3215 = vmatpush1.bf16.msra.mxu0 %v3195
        %3216 = vmatprep.subr.bf16.mxu0 0
        %3217 = vmatpush1.bf16.msra.mxu0 %v3196
        %3218 = vmatprep.subr.bf16.mxu0 0
        %3219 = vmatpush1.bf16.msra.mxu0 %v3197
        %3220 = vmatprep.subr.bf16.mxu0 0
        %3221 = vmatpush1.bf16.msra.mxu0 %v3198
        %3222 = vmatprep.subr.bf16.mxu0 0
        %3223 = vmatpush1.bf16.msra.mxu0 %v3199
        %3224 = vmatprep.subr.bf16.mxu0 0
        %3225 = vmatpush1.bf16.msra.mxu0 0
        %3226 = vmatprep.subr.bf16.mxu0 0
        %3227 = vmatpush1.bf16.msra.mxu0 0
        %3228 = vmatprep.subr.bf16.mxu0 0
        %3229 = vmatpush1.bf16.msra.mxu0 0
        %3230 = vmatprep.subr.bf16.mxu0 0
        %3231 = vmatpush1.bf16.msra.mxu0 0
        %3232 = vmatprep.subr.bf16.mxu0 0
        %3233 = vmatpush1.bf16.msra.mxu0 0
        %3234 = vmatprep.subr.bf16.mxu0 0
        %3235 = vmatpush1.bf16.msra.mxu0 0
        %3236 = vmatprep.subr.bf16.mxu0 0
        %3237 = vmatpush1.bf16.msra.mxu0 0
        %3238 = vmatprep.subr.bf16.mxu0 0
        %3239 = vmatpush1.bf16.msra.mxu0 0
        %3240 = vmatprep.mubr.bf16.mxu0 0
        %3241 = vmatmul.mubr.bf16.gmra.mrb[0].mxu0 %v3152
        %v3242 = vpop.f32.mrb[0].mxu0
        %v3243 = vadd.f32 0.0, %v3242
        %v3244 = vpop.f32.mrb[0].mxu0
        %v3245 = vpop.f32.mrb[0].mxu0
        %v3246 = vadd.f32 0.0, %v3245
        %v3247 = vpop.f32.mrb[0].mxu0
        %3248 = vmatprep.mubr.bf16.mxu0 0
        %3249 = vmatmul.mubr.bf16.gmra.mrb[0].mxu0 %v3153
        %v3250 = vpop.f32.mrb[0].mxu0
        %v3251 = vadd.f32 0.0, %v3250
        %v3252 = vpop.f32.mrb[0].mxu0
        %v3253 = vpop.f32.mrb[0].mxu0
        %v3254 = vadd.f32 0.0, %v3253
        %v3255 = vpop.f32.mrb[0].mxu0
        %3256 = vmatprep.mubr.bf16.mxu0 0
        %3257 = vmatmul.mubr.bf16.gmra.mrb[0].mxu0 %v3154
        %v3258 = vpop.f32.mrb[0].mxu0
        %v3259 = vadd.f32 0.0, %v3258
        %v3260 = vpop.f32.mrb[0].mxu0
        %v3261 = vpop.f32.mrb[0].mxu0
        %v3262 = vadd.f32 0.0, %v3261
        %v3263 = vpop.f32.mrb[0].mxu0
        %3264 = vmatprep.mubr.bf16.mxu0 0
        %3265 = vmatmul.mubr.bf16.gmra.mrb[0].mxu0 %v3155
        %v3266 = vpop.f32.mrb[0].mxu0
        %v3267 = vadd.f32 0.0, %v3266
        %v3268 = vpop.f32.mrb[0].mxu0
        %v3269 = vpop.f32.mrb[0].mxu0
        %v3270 = vadd.f32 0.0, %v3269
        %v3271 = vpop.f32.mrb[0].mxu0
        %3272 = vdwg.mxu0
        %v3273 = vadd.f32 %v3023, %v3243
        %v3274 = vadd.f32 %v3024, %v3246
        %v3275 = vadd.f32 %v3025, %v3251
        %v3276 = vadd.f32 %v3026, %v3254
        %v3277 = vadd.f32 %v3027, %v3259
        %v3278 = vadd.f32 %v3028, %v3262
        %v3279 = vadd.f32 %v3029, %v3267
        %v3280 = vadd.f32 %v3030, %v3270
        %v3281 = vld [vmem:[#allocation3] sm:$0xc]
        %v3282 = vld [vmem:[#allocation3 + $0xc] sm:$0xc]
        %v3283 = vld [vmem:[#allocation3 + $0x18] sm:$0xc]
        %v3284 = vld [vmem:[#allocation3 + $0x24] sm:$0xc]
        %v3293 = vrot.slane %v3281, 6
        %v3294 = vrot.slane %v3293, 4
        %v3295 = vrot.slane %v2443, 6
        %v3296 = vsel %vm348, %v3294, %v3295
        %v3297 = vrot.slane %v3295, 4
        %v3298 = vrot.slane %v3031, 6
        %v3299 = vsel %vm348, %v3297, %v3298
        %v3300 = vrot.slane %v3282, 6
        %v3301 = vrot.slane %v3300, 4
        %v3302 = vrot.slane %v2446, 6
        %v3303 = vsel %vm348, %v3301, %v3302
        %v3304 = vrot.slane %v3302, 4
        %v3305 = vrot.slane %v3032, 6
        %v3306 = vsel %vm348, %v3304, %v3305
        %v3307 = vrot.slane %v3283, 6
        %v3308 = vrot.slane %v3307, 4
        %v3309 = vrot.slane %v2449, 6
        %v3310 = vsel %vm348, %v3308, %v3309
        %v3311 = vrot.slane %v3309, 4
        %v3312 = vrot.slane %v3033, 6
        %v3313 = vsel %vm348, %v3311, %v3312
        %v3314 = vrot.slane %v3284, 6
        %v3315 = vrot.slane %v3314, 4
        %v3316 = vrot.slane %v2452, 6
        %v3317 = vsel %vm348, %v3315, %v3316
        %v3318 = vrot.slane %v3316, 4
        %v3319 = vrot.slane %v3034, 6
        %v3320 = vsel %vm348, %v3318, %v3319
        %s3321 = scalar_lea.vmem [#allocation9], 256
        %v3322 = vld [vmem:[%s3321] sm:$0xf]
        %v3323 = vld [vmem:[%s3321 + $0x4] sm:$0xf]
        %v3324 = vld [vmem:[%s3321 + $0x8] sm:$0xf]
        %v3325 = vld [vmem:[%s3321 + $0xc] sm:$0xf]
        %v3326 = vld [vmem:[%s3321 + $0x10] sm:$0xf]
        %v3327 = vld [vmem:[%s3321 + $0x14] sm:$0xf]
        %v3328 = vld [vmem:[%s3321 + $0x18] sm:$0xf]
        %v3329 = vld [vmem:[%s3321 + $0x1c] sm:$0xf]
        %v3330 = vld [vmem:[%s3321 + $0x20] sm:$0xf]
        %v3331 = vld [vmem:[%s3321 + $0x24] sm:$0xf]
        %v3332 = vld [vmem:[%s3321 + $0x28] sm:$0xf]
        %v3333 = vld [vmem:[%s3321 + $0x2c] sm:$0xf]
        %v3334 = vld [vmem:[%s3321 + $0x30] sm:$0xf]
        %v3335 = vld [vmem:[%s3321 + $0x34] sm:$0xf]
        %v3336 = vld [vmem:[%s3321 + $0x38] sm:$0xf]
        %v3337 = vld [vmem:[%s3321 + $0x3c] sm:$0xf]
        %v3338 = vunpack.c.l.b16 %v3296
        %v3339 = vunpack.c.l.b16 %v3299
        %v3340 = vunpack.c.l.b16 %v3303
        %v3341 = vunpack.c.l.b16 %v3306
        %v3342 = vunpack.c.l.b16 %v3310
        %v3343 = vunpack.c.l.b16 %v3313
        %v3344 = vunpack.c.l.b16 %v3317
        %v3345 = vunpack.c.l.b16 %v3320
        %v3346 = vpack.c.b16 %v3339, %v3338
        %v3347 = vpack.c.b16 %v3341, %v3340
        %v3348 = vpack.c.b16 %v3343, %v3342
        %v3349 = vpack.c.b16 %v3345, %v3344
        %v3370 = vunpack.c.l.b16 %v3322
        %v3371 = vunpack.c.l.b16 %v3323
        %v3372 = vunpack.c.l.b16 %v3324
        %v3373 = vunpack.c.l.b16 %v3325
        %v3374 = vunpack.c.l.b16 %v3326
        %v3375 = vunpack.c.l.b16 %v3327
        %v3376 = vunpack.c.l.b16 %v3328
        %v3377 = vunpack.c.l.b16 %v3329
        %v3378 = vunpack.c.l.b16 %v3330
        %v3379 = vunpack.c.l.b16 %v3331
        %v3380 = vunpack.c.l.b16 %v3332
        %v3381 = vunpack.c.l.b16 %v3333
        %v3382 = vunpack.c.l.b16 %v3334
        %v3383 = vunpack.c.l.b16 %v3335
        %v3384 = vunpack.c.l.b16 %v3336
        %v3385 = vunpack.c.l.b16 %v3337
        %v3386 = vpack.c.b16 %v3371, %v3370
        %v3387 = vpack.c.b16 %v3373, %v3372
        %v3388 = vpack.c.b16 %v3375, %v3374
        %v3389 = vpack.c.b16 %v3377, %v3376
        %v3390 = vpack.c.b16 %v3379, %v3378
        %v3391 = vpack.c.b16 %v3381, %v3380
        %v3392 = vpack.c.b16 %v3383, %v3382
        %v3393 = vpack.c.b16 %v3385, %v3384
        %3402 = vmatprep.subr.bf16.mxu0 0
        %3403 = vmatpush1.bf16.msra.mxu0 %v3386
        %3404 = vmatprep.subr.bf16.mxu0 0
        %3405 = vmatpush1.bf16.msra.mxu0 %v3387
        %3406 = vmatprep.subr.bf16.mxu0 0
        %3407 = vmatpush1.bf16.msra.mxu0 %v3388
        %3408 = vmatprep.subr.bf16.mxu0 0
        %3409 = vmatpush1.bf16.msra.mxu0 %v3389
        %3410 = vmatprep.subr.bf16.mxu0 0
        %3411 = vmatpush1.bf16.msra.mxu0 %v3390
        %3412 = vmatprep.subr.bf16.mxu0 0
        %3413 = vmatpush1.bf16.msra.mxu0 %v3391
        %3414 = vmatprep.subr.bf16.mxu0 0
        %3415 = vmatpush1.bf16.msra.mxu0 %v3392
        %3416 = vmatprep.subr.bf16.mxu0 0
        %3417 = vmatpush1.bf16.msra.mxu0 %v3393
        %3418 = vmatprep.subr.bf16.mxu0 0
        %3419 = vmatpush1.bf16.msra.mxu0 0
        %3420 = vmatprep.subr.bf16.mxu0 0
        %3421 = vmatpush1.bf16.msra.mxu0 0
        %3422 = vmatprep.subr.bf16.mxu0 0
        %3423 = vmatpush1.bf16.msra.mxu0 0
        %3424 = vmatprep.subr.bf16.mxu0 0
        %3425 = vmatpush1.bf16.msra.mxu0 0
        %3426 = vmatprep.subr.bf16.mxu0 0
        %3427 = vmatpush1.bf16.msra.mxu0 0
        %3428 = vmatprep.subr.bf16.mxu0 0
        %3429 = vmatpush1.bf16.msra.mxu0 0
        %3430 = vmatprep.subr.bf16.mxu0 0
        %3431 = vmatpush1.bf16.msra.mxu0 0
        %3432 = vmatprep.subr.bf16.mxu0 0
        %3433 = vmatpush1.bf16.msra.mxu0 0
        %3434 = vmatprep.mubr.bf16.mxu0 0
        %3435 = vmatmul.mubr.bf16.gmra.mrb[0].mxu0 %v3346
        %v3436 = vpop.f32.mrb[0].mxu0
        %v3437 = vadd.f32 0.0, %v3436
        %v3438 = vpop.f32.mrb[0].mxu0
        %v3439 = vpop.f32.mrb[0].mxu0
        %v3440 = vadd.f32 0.0, %v3439
        %v3441 = vpop.f32.mrb[0].mxu0
        %3442 = vmatprep.mubr.bf16.mxu0 0
        %3443 = vmatmul.mubr.bf16.gmra.mrb[0].mxu0 %v3347
        %v3444 = vpop.f32.mrb[0].mxu0
        %v3445 = vadd.f32 0.0, %v3444
        %v3446 = vpop.f32.mrb[0].mxu0
        %v3447 = vpop.f32.mrb[0].mxu0
        %v3448 = vadd.f32 0.0, %v3447
        %v3449 = vpop.f32.mrb[0].mxu0
        %3450 = vmatprep.mubr.bf16.mxu0 0
        %3451 = vmatmul.mubr.bf16.gmra.mrb[0].mxu0 %v3348
        %v3452 = vpop.f32.mrb[0].mxu0
        %v3453 = vadd.f32 0.0, %v3452
        %v3454 = vpop.f32.mrb[0].mxu0
        %v3455 = vpop.f32.mrb[0].mxu0
        %v3456 = vadd.f32 0.0, %v3455
        %v3457 = vpop.f32.mrb[0].mxu0
        %3458 = vmatprep.mubr.bf16.mxu0 0
        %3459 = vmatmul.mubr.bf16.gmra.mrb[0].mxu0 %v3349
        %v3460 = vpop.f32.mrb[0].mxu0
        %v3461 = vadd.f32 0.0, %v3460
        %v3462 = vpop.f32.mrb[0].mxu0
        %v3463 = vpop.f32.mrb[0].mxu0
        %v3464 = vadd.f32 0.0, %v3463
        %v3465 = vpop.f32.mrb[0].mxu0
        %3466 = vdwg.mxu0
        %v3467 = vadd.f32 %v3273, %v3437
        %v3468 = vadd.f32 %v3274, %v3440
        %v3469 = vadd.f32 %v3275, %v3445
        %v3470 = vadd.f32 %v3276, %v3448
        %v3471 = vadd.f32 %v3277, %v3453
        %v3472 = vadd.f32 %v3278, %v3456
        %v3473 = vadd.f32 %v3279, %v3461
        %v3474 = vadd.f32 %v3280, %v3464
        %v3475 = vld [vmem:[#allocation3 + $0x8] sm:$0x7]
        %v3476 = vld [vmem:[#allocation3 + $0x14] sm:$0x7]
        %v3477 = vld [vmem:[#allocation3 + $0x20] sm:$0x7]
        %v3478 = vld [vmem:[#allocation3 + $0x2c] sm:$0x7]
        %v3480 = vshrl.u32 %v3281, 16
        %v3482 = vrot.slane %v3480, 6
        %v3483 = vshll.u32 %v3281, 16
        %v3485 = vrot.slane %v3483, 7
        %v3486 = vor.u32 %v3482, %v3485
        %v3487 = vrot.slane %v3486, 4
        %v3488 = vrot.slane %v2468, 6
        %v3489 = vrot.slane %v2464, 7
        %v3490 = vor.u32 %v3488, %v3489
        %v3491 = vsel %vm1473, %v3487, %v3490
        %v3492 = vrot.slane %v3490, 4
        %v3494 = vshrl.u32 %v3475, 16
        %v3496 = vrot.slane %v3494, 6
        %v3497 = vshll.u32 %v3475, 16
        %v3499 = vrot.slane %v3497, 7
        %v3500 = vor.u32 %v3496, %v3499
        %v3501 = vsel %vm1473, %v3492, %v3500
        %v3503 = vshrl.u32 %v3282, 16
        %v3505 = vrot.slane %v3503, 6
        %v3506 = vshll.u32 %v3282, 16
        %v3508 = vrot.slane %v3506, 7
        %v3509 = vor.u32 %v3505, %v3508
        %v3510 = vrot.slane %v3509, 4
        %v3511 = vrot.slane %v2492, 6
        %v3512 = vrot.slane %v2488, 7
        %v3513 = vor.u32 %v3511, %v3512
        %v3514 = vsel %vm1473, %v3510, %v3513
        %v3515 = vrot.slane %v3513, 4
        %v3517 = vshrl.u32 %v3476, 16
        %v3519 = vrot.slane %v3517, 6
        %v3520 = vshll.u32 %v3476, 16
        %v3522 = vrot.slane %v3520, 7
        %v3523 = vor.u32 %v3519, %v3522
        %v3524 = vsel %vm1473, %v3515, %v3523
        %v3526 = vshrl.u32 %v3283, 16
        %v3528 = vrot.slane %v3526, 6
        %v3529 = vshll.u32 %v3283, 16
        %v3531 = vrot.slane %v3529, 7
        %v3532 = vor.u32 %v3528, %v3531
        %v3533 = vrot.slane %v3532, 4
        %v3534 = vrot.slane %v2516, 6
        %v3535 = vrot.slane %v2512, 7
        %v3536 = vor.u32 %v3534, %v3535
        %v3537 = vsel %vm1473, %v3533, %v3536
        %v3538 = vrot.slane %v3536, 4
        %v3540 = vshrl.u32 %v3477, 16
        %v3542 = vrot.slane %v3540, 6
        %v3543 = vshll.u32 %v3477, 16
        %v3545 = vrot.slane %v3543, 7
        %v3546 = vor.u32 %v3542, %v3545
        %v3547 = vsel %vm1473, %v3538, %v3546
        %v3549 = vshrl.u32 %v3284, 16
        %v3551 = vrot.slane %v3549, 6
        %v3552 = vshll.u32 %v3284, 16
        %v3554 = vrot.slane %v3552, 7
        %v3555 = vor.u32 %v3551, %v3554
        %v3556 = vrot.slane %v3555, 4
        %v3557 = vrot.slane %v2540, 6
        %v3558 = vrot.slane %v2536, 7
        %v3559 = vor.u32 %v3557, %v3558
        %v3560 = vsel %vm1473, %v3556, %v3559
        %v3561 = vrot.slane %v3559, 4
        %v3563 = vshrl.u32 %v3478, 16
        %v3565 = vrot.slane %v3563, 6
        %v3566 = vshll.u32 %v3478, 16
        %v3568 = vrot.slane %v3566, 7
        %v3569 = vor.u32 %v3565, %v3568
        %v3570 = vsel %vm1473, %v3561, %v3569
        %s3571 = scalar_lea.vmem [#allocation9], 320
        %v3572 = vld [vmem:[%s3571] sm:$0xf]
        %v3573 = vld [vmem:[%s3571 + $0x4] sm:$0xf]
        %v3574 = vld [vmem:[%s3571 + $0x8] sm:$0xf]
        %v3575 = vld [vmem:[%s3571 + $0xc] sm:$0xf]
        %v3576 = vld [vmem:[%s3571 + $0x10] sm:$0xf]
        %v3577 = vld [vmem:[%s3571 + $0x14] sm:$0xf]
        %v3578 = vld [vmem:[%s3571 + $0x18] sm:$0xf]
        %v3579 = vld [vmem:[%s3571 + $0x1c] sm:$0xf]
        %v3580 = vld [vmem:[%s3571 + $0x20] sm:$0xf]
        %v3581 = vld [vmem:[%s3571 + $0x24] sm:$0xf]
        %v3582 = vld [vmem:[%s3571 + $0x28] sm:$0xf]
        %v3583 = vld [vmem:[%s3571 + $0x2c] sm:$0xf]
        %v3584 = vld [vmem:[%s3571 + $0x30] sm:$0xf]
        %v3585 = vld [vmem:[%s3571 + $0x34] sm:$0xf]
        %v3586 = vld [vmem:[%s3571 + $0x38] sm:$0xf]
        %v3587 = vld [vmem:[%s3571 + $0x3c] sm:$0xf]
        %v3588 = vunpack.c.l.b16 %v3491
        %v3589 = vunpack.c.l.b16 %v3501
        %v3590 = vunpack.c.l.b16 %v3514
        %v3591 = vunpack.c.l.b16 %v3524
        %v3592 = vunpack.c.l.b16 %v3537
        %v3593 = vunpack.c.l.b16 %v3547
        %v3594 = vunpack.c.l.b16 %v3560
        %v3595 = vunpack.c.l.b16 %v3570
        %v3596 = vpack.c.b16 %v3589, %v3588
        %v3597 = vpack.c.b16 %v3591, %v3590
        %v3598 = vpack.c.b16 %v3593, %v3592
        %v3599 = vpack.c.b16 %v3595, %v3594
        %v3620 = vunpack.c.l.b16 %v3572
        %v3621 = vunpack.c.l.b16 %v3573
        %v3622 = vunpack.c.l.b16 %v3574
        %v3623 = vunpack.c.l.b16 %v3575
        %v3624 = vunpack.c.l.b16 %v3576
        %v3625 = vunpack.c.l.b16 %v3577
        %v3626 = vunpack.c.l.b16 %v3578
        %v3627 = vunpack.c.l.b16 %v3579
        %v3628 = vunpack.c.l.b16 %v3580
        %v3629 = vunpack.c.l.b16 %v3581
        %v3630 = vunpack.c.l.b16 %v3582
        %v3631 = vunpack.c.l.b16 %v3583
        %v3632 = vunpack.c.l.b16 %v3584
        %v3633 = vunpack.c.l.b16 %v3585
        %v3634 = vunpack.c.l.b16 %v3586
        %v3635 = vunpack.c.l.b16 %v3587
        %v3636 = vpack.c.b16 %v3621, %v3620
        %v3637 = vpack.c.b16 %v3623, %v3622
        %v3638 = vpack.c.b16 %v3625, %v3624
        %v3639 = vpack.c.b16 %v3627, %v3626
        %v3640 = vpack.c.b16 %v3629, %v3628
        %v3641 = vpack.c.b16 %v3631, %v3630
        %v3642 = vpack.c.b16 %v3633, %v3632
        %v3643 = vpack.c.b16 %v3635, %v3634
        %3652 = vmatprep.subr.bf16.mxu0 0
        %3653 = vmatpush1.bf16.msra.mxu0 %v3636
        %3654 = vmatprep.subr.bf16.mxu0 0
        %3655 = vmatpush1.bf16.msra.mxu0 %v3637
        %3656 = vmatprep.subr.bf16.mxu0 0
        %3657 = vmatpush1.bf16.msra.mxu0 %v3638
        %3658 = vmatprep.subr.bf16.mxu0 0
        %3659 = vmatpush1.bf16.msra.mxu0 %v3639
        %3660 = vmatprep.subr.bf16.mxu0 0
        %3661 = vmatpush1.bf16.msra.mxu0 %v3640
        %3662 = vmatprep.subr.bf16.mxu0 0
        %3663 = vmatpush1.bf16.msra.mxu0 %v3641
        %3664 = vmatprep.subr.bf16.mxu0 0
        %3665 = vmatpush1.bf16.msra.mxu0 %v3642
        %3666 = vmatprep.subr.bf16.mxu0 0
        %3667 = vmatpush1.bf16.msra.mxu0 %v3643
        %3668 = vmatprep.subr.bf16.mxu0 0
        %3669 = vmatpush1.bf16.msra.mxu0 0
        %3670 = vmatprep.subr.bf16.mxu0 0
        %3671 = vmatpush1.bf16.msra.mxu0 0
        %3672 = vmatprep.subr.bf16.mxu0 0
        %3673 = vmatpush1.bf16.msra.mxu0 0
        %3674 = vmatprep.subr.bf16.mxu0 0
        %3675 = vmatpush1.bf16.msra.mxu0 0
        %3676 = vmatprep.subr.bf16.mxu0 0
        %3677 = vmatpush1.bf16.msra.mxu0 0
        %3678 = vmatprep.subr.bf16.mxu0 0
        %3679 = vmatpush1.bf16.msra.mxu0 0
        %3680 = vmatprep.subr.bf16.mxu0 0
        %3681 = vmatpush1.bf16.msra.mxu0 0
        %3682 = vmatprep.subr.bf16.mxu0 0
        %3683 = vmatpush1.bf16.msra.mxu0 0
        %3684 = vmatprep.mubr.bf16.mxu0 0
        %3685 = vmatmul.mubr.bf16.gmra.mrb[0].mxu0 %v3596
        %v3686 = vpop.f32.mrb[0].mxu0
        %v3687 = vadd.f32 0.0, %v3686
        %v3688 = vpop.f32.mrb[0].mxu0
        %v3689 = vpop.f32.mrb[0].mxu0
        %v3690 = vadd.f32 0.0, %v3689
        %v3691 = vpop.f32.mrb[0].mxu0
        %3692 = vmatprep.mubr.bf16.mxu0 0
        %3693 = vmatmul.mubr.bf16.gmra.mrb[0].mxu0 %v3597
        %v3694 = vpop.f32.mrb[0].mxu0
        %v3695 = vadd.f32 0.0, %v3694
        %v3696 = vpop.f32.mrb[0].mxu0
        %v3697 = vpop.f32.mrb[0].mxu0
        %v3698 = vadd.f32 0.0, %v3697
        %v3699 = vpop.f32.mrb[0].mxu0
        %3700 = vmatprep.mubr.bf16.mxu0 0
        %3701 = vmatmul.mubr.bf16.gmra.mrb[0].mxu0 %v3598
        %v3702 = vpop.f32.mrb[0].mxu0
        %v3703 = vadd.f32 0.0, %v3702
        %v3704 = vpop.f32.mrb[0].mxu0
        %v3705 = vpop.f32.mrb[0].mxu0
        %v3706 = vadd.f32 0.0, %v3705
        %v3707 = vpop.f32.mrb[0].mxu0
        %3708 = vmatprep.mubr.bf16.mxu0 0
        %3709 = vmatmul.mubr.bf16.gmra.mrb[0].mxu0 %v3599
        %v3710 = vpop.f32.mrb[0].mxu0
        %v3711 = vadd.f32 0.0, %v3710
        %v3712 = vpop.f32.mrb[0].mxu0
        %v3713 = vpop.f32.mrb[0].mxu0
        %v3714 = vadd.f32 0.0, %v3713
        %v3715 = vpop.f32.mrb[0].mxu0
        %3716 = vdwg.mxu0
        %v3717 = vadd.f32 %v3467, %v3687
        %v3718 = vadd.f32 %v3468, %v3690
        %v3719 = vadd.f32 %v3469, %v3695
        %v3720 = vadd.f32 %v3470, %v3698
        %v3721 = vadd.f32 %v3471, %v3703
        %v3722 = vadd.f32 %v3472, %v3706
        %v3723 = vadd.f32 %v3473, %v3711
        %v3724 = vadd.f32 %v3474, %v3714
        %v3725 = vld [vmem:[#allocation3] sm:$0x8]
        %v3726 = vld [vmem:[#allocation3 + $0xc] sm:$0x8]
        %v3727 = vld [vmem:[#allocation3 + $0x18] sm:$0x8]
        %v3728 = vld [vmem:[#allocation3 + $0x24] sm:$0x8]
        %v3737 = vrot.slane %v3725, 7
        %v3738 = vrot.slane %v3737, 4
        %v3739 = vrot.slane %v2443, 7
        %v3740 = vsel %vm1734, %v3738, %v3739
        %v3741 = vrot.slane %v3739, 4
        %v3742 = vrot.slane %v3475, 7
        %v3743 = vsel %vm1734, %v3741, %v3742
        %v3744 = vrot.slane %v3726, 7
        %v3745 = vrot.slane %v3744, 4
        %v3746 = vrot.slane %v2446, 7
        %v3747 = vsel %vm1734, %v3745, %v3746
        %v3748 = vrot.slane %v3746, 4
        %v3749 = vrot.slane %v3476, 7
        %v3750 = vsel %vm1734, %v3748, %v3749
        %v3751 = vrot.slane %v3727, 7
        %v3752 = vrot.slane %v3751, 4
        %v3753 = vrot.slane %v2449, 7
        %v3754 = vsel %vm1734, %v3752, %v3753
        %v3755 = vrot.slane %v3753, 4
        %v3756 = vrot.slane %v3477, 7
        %v3757 = vsel %vm1734, %v3755, %v3756
        %v3758 = vrot.slane %v3728, 7
        %v3759 = vrot.slane %v3758, 4
        %v3760 = vrot.slane %v2452, 7
        %v3761 = vsel %vm1734, %v3759, %v3760
        %v3762 = vrot.slane %v3760, 4
        %v3763 = vrot.slane %v3478, 7
        %v3764 = vsel %vm1734, %v3762, %v3763
        %s3765 = scalar_lea.vmem [#allocation9], 384
        %v3766 = vld [vmem:[%s3765] sm:$0xf]
        %v3767 = vld [vmem:[%s3765 + $0x4] sm:$0xf]
        %v3768 = vld [vmem:[%s3765 + $0x8] sm:$0xf]
        %v3769 = vld [vmem:[%s3765 + $0xc] sm:$0xf]
        %v3770 = vld [vmem:[%s3765 + $0x10] sm:$0xf]
        %v3771 = vld [vmem:[%s3765 + $0x14] sm:$0xf]
        %v3772 = vld [vmem:[%s3765 + $0x18] sm:$0xf]
        %v3773 = vld [vmem:[%s3765 + $0x1c] sm:$0xf]
        %v3774 = vld [vmem:[%s3765 + $0x20] sm:$0xf]
        %v3775 = vld [vmem:[%s3765 + $0x24] sm:$0xf]
        %v3776 = vld [vmem:[%s3765 + $0x28] sm:$0xf]
        %v3777 = vld [vmem:[%s3765 + $0x2c] sm:$0xf]
        %v3778 = vld [vmem:[%s3765 + $0x30] sm:$0xf]
        %v3779 = vld [vmem:[%s3765 + $0x34] sm:$0xf]
        %v3780 = vld [vmem:[%s3765 + $0x38] sm:$0xf]
        %v3781 = vld [vmem:[%s3765 + $0x3c] sm:$0xf]
        %v3782 = vunpack.c.l.b16 %v3740
        %v3783 = vunpack.c.l.b16 %v3743
        %v3784 = vunpack.c.l.b16 %v3747
        %v3785 = vunpack.c.l.b16 %v3750
        %v3786 = vunpack.c.l.b16 %v3754
        %v3787 = vunpack.c.l.b16 %v3757
        %v3788 = vunpack.c.l.b16 %v3761
        %v3789 = vunpack.c.l.b16 %v3764
        %v3790 = vpack.c.b16 %v3783, %v3782
        %v3791 = vpack.c.b16 %v3785, %v3784
        %v3792 = vpack.c.b16 %v3787, %v3786
        %v3793 = vpack.c.b16 %v3789, %v3788
        %v3814 = vunpack.c.l.b16 %v3766
        %v3815 = vunpack.c.l.b16 %v3767
        %v3816 = vunpack.c.l.b16 %v3768
        %v3817 = vunpack.c.l.b16 %v3769
        %v3818 = vunpack.c.l.b16 %v3770
        %v3819 = vunpack.c.l.b16 %v3771
        %v3820 = vunpack.c.l.b16 %v3772
        %v3821 = vunpack.c.l.b16 %v3773
        %v3822 = vunpack.c.l.b16 %v3774
        %v3823 = vunpack.c.l.b16 %v3775
        %v3824 = vunpack.c.l.b16 %v3776
        %v3825 = vunpack.c.l.b16 %v3777
        %v3826 = vunpack.c.l.b16 %v3778
        %v3827 = vunpack.c.l.b16 %v3779
        %v3828 = vunpack.c.l.b16 %v3780
        %v3829 = vunpack.c.l.b16 %v3781
        %v3830 = vpack.c.b16 %v3815, %v3814
        %v3831 = vpack.c.b16 %v3817, %v3816
        %v3832 = vpack.c.b16 %v3819, %v3818
        %v3833 = vpack.c.b16 %v3821, %v3820
        %v3834 = vpack.c.b16 %v3823, %v3822
        %v3835 = vpack.c.b16 %v3825, %v3824
        %v3836 = vpack.c.b16 %v3827, %v3826
        %v3837 = vpack.c.b16 %v3829, %v3828
        %3846 = vmatprep.subr.bf16.mxu0 0
        %3847 = vmatpush1.bf16.msra.mxu0 %v3830
        %3848 = vmatprep.subr.bf16.mxu0 0
        %3849 = vmatpush1.bf16.msra.mxu0 %v3831
        %3850 = vmatprep.subr.bf16.mxu0 0
        %3851 = vmatpush1.bf16.msra.mxu0 %v3832
        %3852 = vmatprep.subr.bf16.mxu0 0
        %3853 = vmatpush1.bf16.msra.mxu0 %v3833
        %3854 = vmatprep.subr.bf16.mxu0 0
        %3855 = vmatpush1.bf16.msra.mxu0 %v3834
        %3856 = vmatprep.subr.bf16.mxu0 0
        %3857 = vmatpush1.bf16.msra.mxu0 %v3835
        %3858 = vmatprep.subr.bf16.mxu0 0
        %3859 = vmatpush1.bf16.msra.mxu0 %v3836
        %3860 = vmatprep.subr.bf16.mxu0 0
        %3861 = vmatpush1.bf16.msra.mxu0 %v3837
        %3862 = vmatprep.subr.bf16.mxu0 0
        %3863 = vmatpush1.bf16.msra.mxu0 0
        %3864 = vmatprep.subr.bf16.mxu0 0
        %3865 = vmatpush1.bf16.msra.mxu0 0
        %3866 = vmatprep.subr.bf16.mxu0 0
        %3867 = vmatpush1.bf16.msra.mxu0 0
        %3868 = vmatprep.subr.bf16.mxu0 0
        %3869 = vmatpush1.bf16.msra.mxu0 0
        %3870 = vmatprep.subr.bf16.mxu0 0
        %3871 = vmatpush1.bf16.msra.mxu0 0
        %3872 = vmatprep.subr.bf16.mxu0 0
        %3873 = vmatpush1.bf16.msra.mxu0 0
        %3874 = vmatprep.subr.bf16.mxu0 0
        %3875 = vmatpush1.bf16.msra.mxu0 0
        %3876 = vmatprep.subr.bf16.mxu0 0
        %3877 = vmatpush1.bf16.msra.mxu0 0
        %3878 = vmatprep.mubr.bf16.mxu0 0
        %3879 = vmatmul.mubr.bf16.gmra.mrb[0].mxu0 %v3790
        %v3880 = vpop.f32.mrb[0].mxu0
        %v3881 = vadd.f32 0.0, %v3880
        %v3882 = vpop.f32.mrb[0].mxu0
        %v3883 = vpop.f32.mrb[0].mxu0
        %v3884 = vadd.f32 0.0, %v3883
        %v3885 = vpop.f32.mrb[0].mxu0
        %3886 = vmatprep.mubr.bf16.mxu0 0
        %3887 = vmatmul.mubr.bf16.gmra.mrb[0].mxu0 %v3791
        %v3888 = vpop.f32.mrb[0].mxu0
        %v3889 = vadd.f32 0.0, %v3888
        %v3890 = vpop.f32.mrb[0].mxu0
        %v3891 = vpop.f32.mrb[0].mxu0
        %v3892 = vadd.f32 0.0, %v3891
        %v3893 = vpop.f32.mrb[0].mxu0
        %3894 = vmatprep.mubr.bf16.mxu0 0
        %3895 = vmatmul.mubr.bf16.gmra.mrb[0].mxu0 %v3792
        %v3896 = vpop.f32.mrb[0].mxu0
        %v3897 = vadd.f32 0.0, %v3896
        %v3898 = vpop.f32.mrb[0].mxu0
        %v3899 = vpop.f32.mrb[0].mxu0
        %v3900 = vadd.f32 0.0, %v3899
        %v3901 = vpop.f32.mrb[0].mxu0
        %3902 = vmatprep.mubr.bf16.mxu0 0
        %3903 = vmatmul.mubr.bf16.gmra.mrb[0].mxu0 %v3793
        %v3904 = vpop.f32.mrb[0].mxu0
        %v3905 = vadd.f32 0.0, %v3904
        %v3906 = vpop.f32.mrb[0].mxu0
        %v3907 = vpop.f32.mrb[0].mxu0
        %v3908 = vadd.f32 0.0, %v3907
        %v3909 = vpop.f32.mrb[0].mxu0
        %3910 = vdwg.mxu0
        %v3911 = vadd.f32 %v3717, %v3881
        %v3912 = vadd.f32 %v3718, %v3884
        %v3913 = vadd.f32 %v3719, %v3889
        %v3914 = vadd.f32 %v3720, %v3892
        %v3915 = vadd.f32 %v3721, %v3897
        %v3916 = vadd.f32 %v3722, %v3900
        %v3917 = vadd.f32 %v3723, %v3905
        %v3918 = vadd.f32 %v3724, %v3908
        %v3919 = vld [vmem:[#allocation3 + $0x8] sm:$0xf]
        %v3920 = vld [vmem:[#allocation3 + $0x14] sm:$0xf]
        %v3921 = vld [vmem:[#allocation3 + $0x20] sm:$0xf]
        %v3922 = vld [vmem:[#allocation3 + $0x2c] sm:$0xf]
        %v3924 = vshrl.u32 %v3725, 16
        %v3926 = vrot.slane %v3924, 7
        %v3927 = vrot.slane %v3926, 4
        %v3928 = vrot.slane %v2468, 7
        %v3929 = vor.u32 %v3928, %v2464
        %v3930 = vsel %vm1923, %v3927, %v3929
        %v3931 = vrot.slane %v3928, 4
        %v3933 = vshrl.u32 %v3919, 16
        %v3935 = vrot.slane %v3933, 7
        %v3936 = vshll.u32 %v3919, 16
        %v3938 = vor.u32 %v3935, %v3936
        %v3939 = vsel %vm1923, %v3931, %v3938
        %v3941 = vshrl.u32 %v3726, 16
        %v3943 = vrot.slane %v3941, 7
        %v3944 = vrot.slane %v3943, 4
        %v3945 = vrot.slane %v2492, 7
        %v3946 = vor.u32 %v3945, %v2488
        %v3947 = vsel %vm1923, %v3944, %v3946
        %v3948 = vrot.slane %v3945, 4
        %v3950 = vshrl.u32 %v3920, 16
        %v3952 = vrot.slane %v3950, 7
        %v3953 = vshll.u32 %v3920, 16
        %v3955 = vor.u32 %v3952, %v3953
        %v3956 = vsel %vm1923, %v3948, %v3955
        %v3958 = vshrl.u32 %v3727, 16
        %v3960 = vrot.slane %v3958, 7
        %v3961 = vrot.slane %v3960, 4
        %v3962 = vrot.slane %v2516, 7
        %v3963 = vor.u32 %v3962, %v2512
        %v3964 = vsel %vm1923, %v3961, %v3963
        %v3965 = vrot.slane %v3962, 4
        %v3967 = vshrl.u32 %v3921, 16
        %v3969 = vrot.slane %v3967, 7
        %v3970 = vshll.u32 %v3921, 16
        %v3972 = vor.u32 %v3969, %v3970
        %v3973 = vsel %vm1923, %v3965, %v3972
        %v3975 = vshrl.u32 %v3728, 16
        %v3977 = vrot.slane %v3975, 7
        %v3978 = vrot.slane %v3977, 4
        %v3979 = vrot.slane %v2540, 7
        %v3980 = vor.u32 %v3979, %v2536
        %v3981 = vsel %vm1923, %v3978, %v3980
        %v3982 = vrot.slane %v3979, 4
        %v3984 = vshrl.u32 %v3922, 16
        %v3986 = vrot.slane %v3984, 7
        %v3987 = vshll.u32 %v3922, 16
        %v3989 = vor.u32 %v3986, %v3987
        %v3990 = vsel %vm1923, %v3982, %v3989
        %s3991 = scalar_lea.vmem [#allocation9], 448
        %v3992 = vld [vmem:[%s3991] sm:$0xf]
        %v3993 = vld [vmem:[%s3991 + $0x4] sm:$0xf]
        %v3994 = vld [vmem:[%s3991 + $0x8] sm:$0xf]
        %v3995 = vld [vmem:[%s3991 + $0xc] sm:$0xf]
        %v3996 = vld [vmem:[%s3991 + $0x10] sm:$0xf]
        %v3997 = vld [vmem:[%s3991 + $0x14] sm:$0xf]
        %v3998 = vld [vmem:[%s3991 + $0x18] sm:$0xf]
        %v3999 = vld [vmem:[%s3991 + $0x1c] sm:$0xf]
        %v4000 = vld [vmem:[%s3991 + $0x20] sm:$0xf]
        %v4001 = vld [vmem:[%s3991 + $0x24] sm:$0xf]
        %v4002 = vld [vmem:[%s3991 + $0x28] sm:$0xf]
        %v4003 = vld [vmem:[%s3991 + $0x2c] sm:$0xf]
        %v4004 = vld [vmem:[%s3991 + $0x30] sm:$0xf]
        %v4005 = vld [vmem:[%s3991 + $0x34] sm:$0xf]
        %v4006 = vld [vmem:[%s3991 + $0x38] sm:$0xf]
        %v4007 = vld [vmem:[%s3991 + $0x3c] sm:$0xf]
        %v4008 = vunpack.c.l.b16 %v3930
        %v4009 = vunpack.c.l.b16 %v3939
        %v4010 = vunpack.c.l.b16 %v3947
        %v4011 = vunpack.c.l.b16 %v3956
        %v4012 = vunpack.c.l.b16 %v3964
        %v4013 = vunpack.c.l.b16 %v3973
        %v4014 = vunpack.c.l.b16 %v3981
        %v4015 = vunpack.c.l.b16 %v3990
        %v4016 = vpack.c.b16 %v4009, %v4008
        %v4017 = vpack.c.b16 %v4011, %v4010
        %v4018 = vpack.c.b16 %v4013, %v4012
        %v4019 = vpack.c.b16 %v4015, %v4014
        %v4040 = vunpack.c.l.b16 %v3992
        %v4041 = vunpack.c.l.b16 %v3993
        %v4042 = vunpack.c.l.b16 %v3994
        %v4043 = vunpack.c.l.b16 %v3995
        %v4044 = vunpack.c.l.b16 %v3996
        %v4045 = vunpack.c.l.b16 %v3997
        %v4046 = vunpack.c.l.b16 %v3998
        %v4047 = vunpack.c.l.b16 %v3999
        %v4048 = vunpack.c.l.b16 %v4000
        %v4049 = vunpack.c.l.b16 %v4001
        %v4050 = vunpack.c.l.b16 %v4002
        %v4051 = vunpack.c.l.b16 %v4003
        %v4052 = vunpack.c.l.b16 %v4004
        %v4053 = vunpack.c.l.b16 %v4005
        %v4054 = vunpack.c.l.b16 %v4006
        %v4055 = vunpack.c.l.b16 %v4007
        %v4056 = vpack.c.b16 %v4041, %v4040
        %v4057 = vpack.c.b16 %v4043, %v4042
        %v4058 = vpack.c.b16 %v4045, %v4044
        %v4059 = vpack.c.b16 %v4047, %v4046
        %v4060 = vpack.c.b16 %v4049, %v4048
        %v4061 = vpack.c.b16 %v4051, %v4050
        %v4062 = vpack.c.b16 %v4053, %v4052
        %v4063 = vpack.c.b16 %v4055, %v4054
        %4072 = vmatprep.subr.bf16.mxu0 0
        %4073 = vmatpush1.bf16.msra.mxu0 %v4056
        %4074 = vmatprep.subr.bf16.mxu0 0
        %4075 = vmatpush1.bf16.msra.mxu0 %v4057
        %4076 = vmatprep.subr.bf16.mxu0 0
        %4077 = vmatpush1.bf16.msra.mxu0 %v4058
        %4078 = vmatprep.subr.bf16.mxu0 0
        %4079 = vmatpush1.bf16.msra.mxu0 %v4059
        %4080 = vmatprep.subr.bf16.mxu0 0
        %4081 = vmatpush1.bf16.msra.mxu0 %v4060
        %4082 = vmatprep.subr.bf16.mxu0 0
        %4083 = vmatpush1.bf16.msra.mxu0 %v4061
        %4084 = vmatprep.subr.bf16.mxu0 0
        %4085 = vmatpush1.bf16.msra.mxu0 %v4062
        %4086 = vmatprep.subr.bf16.mxu0 0
        %4087 = vmatpush1.bf16.msra.mxu0 %v4063
        %4088 = vmatprep.subr.bf16.mxu0 0
        %4089 = vmatpush1.bf16.msra.mxu0 0
        %4090 = vmatprep.subr.bf16.mxu0 0
        %4091 = vmatpush1.bf16.msra.mxu0 0
        %4092 = vmatprep.subr.bf16.mxu0 0
        %4093 = vmatpush1.bf16.msra.mxu0 0
        %4094 = vmatprep.subr.bf16.mxu0 0
        %4095 = vmatpush1.bf16.msra.mxu0 0
        %4096 = vmatprep.subr.bf16.mxu0 0
        %4097 = vmatpush1.bf16.msra.mxu0 0
        %4098 = vmatprep.subr.bf16.mxu0 0
        %4099 = vmatpush1.bf16.msra.mxu0 0
        %4100 = vmatprep.subr.bf16.mxu0 0
        %4101 = vmatpush1.bf16.msra.mxu0 0
        %4102 = vmatprep.subr.bf16.mxu0 0
        %4103 = vmatpush1.bf16.msra.mxu0 0
        %4104 = vmatprep.mubr.bf16.mxu0 0
        %4105 = vmatmul.mubr.bf16.gmra.mrb[0].mxu0 %v4016
        %v4106 = vpop.f32.mrb[0].mxu0
        %v4107 = vadd.f32 0.0, %v4106
        %v4108 = vpop.f32.mrb[0].mxu0
        %v4109 = vpop.f32.mrb[0].mxu0
        %v4110 = vadd.f32 0.0, %v4109
        %v4111 = vpop.f32.mrb[0].mxu0
        %4112 = vmatprep.mubr.bf16.mxu0 0
        %4113 = vmatmul.mubr.bf16.gmra.mrb[0].mxu0 %v4017
        %v4114 = vpop.f32.mrb[0].mxu0
        %v4115 = vadd.f32 0.0, %v4114
        %v4116 = vpop.f32.mrb[0].mxu0
        %v4117 = vpop.f32.mrb[0].mxu0
        %v4118 = vadd.f32 0.0, %v4117
        %v4119 = vpop.f32.mrb[0].mxu0
        %4120 = vmatprep.mubr.bf16.mxu0 0
        %4121 = vmatmul.mubr.bf16.gmra.mrb[0].mxu0 %v4018
        %v4122 = vpop.f32.mrb[0].mxu0
        %v4123 = vadd.f32 0.0, %v4122
        %v4124 = vpop.f32.mrb[0].mxu0
        %v4125 = vpop.f32.mrb[0].mxu0
        %v4126 = vadd.f32 0.0, %v4125
        %v4127 = vpop.f32.mrb[0].mxu0
        %4128 = vmatprep.mubr.bf16.mxu0 0
        %4129 = vmatmul.mubr.bf16.gmra.mrb[0].mxu0 %v4019
        %v4130 = vpop.f32.mrb[0].mxu0
        %v4131 = vadd.f32 0.0, %v4130
        %v4132 = vpop.f32.mrb[0].mxu0
        %v4133 = vpop.f32.mrb[0].mxu0
        %v4134 = vadd.f32 0.0, %v4133
        %v4135 = vpop.f32.mrb[0].mxu0
        %4136 = vdwg.mxu0
        %v4137 = vadd.f32 %v3911, %v4107
        %v4138 = vadd.f32 %v3912, %v4110
        %v4139 = vadd.f32 %v3913, %v4115
        %v4140 = vadd.f32 %v3914, %v4118
        %v4141 = vadd.f32 %v3915, %v4123
        %v4142 = vadd.f32 %v3916, %v4126
        %v4143 = vadd.f32 %v3917, %v4131
        %v4144 = vadd.f32 %v3918, %v4134
        %s4145 = scalar_lea.vmem [#allocation9], 512
        %v4146 = vld [vmem:[%s4145] sm:$0xf]
        %v4147 = vld [vmem:[%s4145 + $0x4] sm:$0xf]
        %v4148 = vld [vmem:[%s4145 + $0x8] sm:$0xf]
        %v4149 = vld [vmem:[%s4145 + $0xc] sm:$0xf]
        %v4150 = vld [vmem:[%s4145 + $0x10] sm:$0xf]
        %v4151 = vld [vmem:[%s4145 + $0x14] sm:$0xf]
        %v4152 = vld [vmem:[%s4145 + $0x18] sm:$0xf]
        %v4153 = vld [vmem:[%s4145 + $0x1c] sm:$0xf]
        %v4154 = vld [vmem:[%s4145 + $0x20] sm:$0xf]
        %v4155 = vld [vmem:[%s4145 + $0x24] sm:$0xf]
        %v4156 = vld [vmem:[%s4145 + $0x28] sm:$0xf]
        %v4157 = vld [vmem:[%s4145 + $0x2c] sm:$0xf]
        %v4158 = vld [vmem:[%s4145 + $0x30] sm:$0xf]
        %v4159 = vld [vmem:[%s4145 + $0x34] sm:$0xf]
        %v4160 = vld [vmem:[%s4145 + $0x38] sm:$0xf]
        %v4161 = vld [vmem:[%s4145 + $0x3c] sm:$0xf]
        %v4166 = vunpack.c.l.b16 %v2443
        %v4167 = vunpack.c.l.b16 %v3919
        %v4168 = vunpack.c.l.b16 %v2446
        %v4169 = vunpack.c.l.b16 %v3920
        %v4170 = vunpack.c.l.b16 %v2449
        %v4171 = vunpack.c.l.b16 %v3921
        %v4172 = vunpack.c.l.b16 %v2452
        %v4173 = vunpack.c.l.b16 %v3922
        %v4174 = vpack.c.b16 %v4167, %v4166
        %v4175 = vpack.c.b16 %v4169, %v4168
        %v4176 = vpack.c.b16 %v4171, %v4170
        %v4177 = vpack.c.b16 %v4173, %v4172
        %v4198 = vunpack.c.l.b16 %v4146
        %v4199 = vunpack.c.l.b16 %v4147
        %v4200 = vunpack.c.l.b16 %v4148
        %v4201 = vunpack.c.l.b16 %v4149
        %v4202 = vunpack.c.l.b16 %v4150
        %v4203 = vunpack.c.l.b16 %v4151
        %v4204 = vunpack.c.l.b16 %v4152
        %v4205 = vunpack.c.l.b16 %v4153
        %v4206 = vunpack.c.l.b16 %v4154
        %v4207 = vunpack.c.l.b16 %v4155
        %v4208 = vunpack.c.l.b16 %v4156
        %v4209 = vunpack.c.l.b16 %v4157
        %v4210 = vunpack.c.l.b16 %v4158
        %v4211 = vunpack.c.l.b16 %v4159
        %v4212 = vunpack.c.l.b16 %v4160
        %v4213 = vunpack.c.l.b16 %v4161
        %v4214 = vpack.c.b16 %v4199, %v4198
        %v4215 = vpack.c.b16 %v4201, %v4200
        %v4216 = vpack.c.b16 %v4203, %v4202
        %v4217 = vpack.c.b16 %v4205, %v4204
        %v4218 = vpack.c.b16 %v4207, %v4206
        %v4219 = vpack.c.b16 %v4209, %v4208
        %v4220 = vpack.c.b16 %v4211, %v4210
        %v4221 = vpack.c.b16 %v4213, %v4212
        %4230 = vmatprep.subr.bf16.mxu0 0
        %4231 = vmatpush1.bf16.msra.mxu0 %v4214
        %4232 = vmatprep.subr.bf16.mxu0 0
        %4233 = vmatpush1.bf16.msra.mxu0 %v4215
        %4234 = vmatprep.subr.bf16.mxu0 0
        %4235 = vmatpush1.bf16.msra.mxu0 %v4216
        %4236 = vmatprep.subr.bf16.mxu0 0
        %4237 = vmatpush1.bf16.msra.mxu0 %v4217
        %4238 = vmatprep.subr.bf16.mxu0 0
        %4239 = vmatpush1.bf16.msra.mxu0 %v4218
        %4240 = vmatprep.subr.bf16.mxu0 0
        %4241 = vmatpush1.bf16.msra.mxu0 %v4219
        %4242 = vmatprep.subr.bf16.mxu0 0
        %4243 = vmatpush1.bf16.msra.mxu0 %v4220
        %4244 = vmatprep.subr.bf16.mxu0 0
        %4245 = vmatpush1.bf16.msra.mxu0 %v4221
        %4246 = vmatprep.subr.bf16.mxu0 0
        %4247 = vmatpush1.bf16.msra.mxu0 0
        %4248 = vmatprep.subr.bf16.mxu0 0
        %4249 = vmatpush1.bf16.msra.mxu0 0
        %4250 = vmatprep.subr.bf16.mxu0 0
        %4251 = vmatpush1.bf16.msra.mxu0 0
        %4252 = vmatprep.subr.bf16.mxu0 0
        %4253 = vmatpush1.bf16.msra.mxu0 0
        %4254 = vmatprep.subr.bf16.mxu0 0
        %4255 = vmatpush1.bf16.msra.mxu0 0
        %4256 = vmatprep.subr.bf16.mxu0 0
        %4257 = vmatpush1.bf16.msra.mxu0 0
        %4258 = vmatprep.subr.bf16.mxu0 0
        %4259 = vmatpush1.bf16.msra.mxu0 0
        %4260 = vmatprep.subr.bf16.mxu0 0
        %4261 = vmatpush1.bf16.msra.mxu0 0
        %4262 = vmatprep.mubr.bf16.mxu0 0
        %4263 = vmatmul.mubr.bf16.gmra.mrb[0].mxu0 %v4174
        %v4264 = vpop.f32.mrb[0].mxu0
        %v4265 = vadd.f32 0.0, %v4264
        %v4266 = vpop.f32.mrb[0].mxu0
        %v4267 = vpop.f32.mrb[0].mxu0
        %v4268 = vadd.f32 0.0, %v4267
        %v4269 = vpop.f32.mrb[0].mxu0
        %4270 = vmatprep.mubr.bf16.mxu0 0
        %4271 = vmatmul.mubr.bf16.gmra.mrb[0].mxu0 %v4175
        %v4272 = vpop.f32.mrb[0].mxu0
        %v4273 = vadd.f32 0.0, %v4272
        %v4274 = vpop.f32.mrb[0].mxu0
        %v4275 = vpop.f32.mrb[0].mxu0
        %v4276 = vadd.f32 0.0, %v4275
        %v4277 = vpop.f32.mrb[0].mxu0
        %4278 = vmatprep.mubr.bf16.mxu0 0
        %4279 = vmatmul.mubr.bf16.gmra.mrb[0].mxu0 %v4176
        %v4280 = vpop.f32.mrb[0].mxu0
        %v4281 = vadd.f32 0.0, %v4280
        %v4282 = vpop.f32.mrb[0].mxu0
        %v4283 = vpop.f32.mrb[0].mxu0
        %v4284 = vadd.f32 0.0, %v4283
        %v4285 = vpop.f32.mrb[0].mxu0
        %4286 = vmatprep.mubr.bf16.mxu0 0
        %4287 = vmatmul.mubr.bf16.gmra.mrb[0].mxu0 %v4177
        %v4288 = vpop.f32.mrb[0].mxu0
        %v4289 = vadd.f32 0.0, %v4288
        %v4290 = vpop.f32.mrb[0].mxu0
        %v4291 = vpop.f32.mrb[0].mxu0
        %v4292 = vadd.f32 0.0, %v4291
        %v4293 = vpop.f32.mrb[0].mxu0
        %4294 = vdwg.mxu0
        %v4295 = vadd.f32 %v4137, %v4265
        %v4296 = vadd.f32 %v4138, %v4268
        %v4297 = vadd.f32 %v4139, %v4273
        %v4298 = vadd.f32 %v4140, %v4276
        %v4299 = vadd.f32 %v4141, %v4281
        %v4300 = vadd.f32 %v4142, %v4284
        %v4301 = vadd.f32 %v4143, %v4289
        %v4302 = vadd.f32 %v4144, %v4292
        %v4303 = vld [vmem:[%s5] sm:$0x1]
        %v4305 = vlaneseq
        %v4306 = vshrl.u32 %v4305, 7
        %v4307 = vsub.s32 0, %v4306
        %v4308 = vrot.slane %v4303, %v4307
        %v4310 = vmul.f32 %v4295, %v4308
        %v4311 = vmul.f32 %v4296, %v4308
        %v4312 = vmul.f32 %v4297, %v4308
        %v4313 = vmul.f32 %v4298, %v4308
        %v4314 = vmul.f32 %v4299, %v4308
        %v4315 = vmul.f32 %v4300, %v4308
        %v4316 = vmul.f32 %v4301, %v4308
        %v4317 = vmul.f32 %v4302, %v4308
        %v4318 = vld [vmem:[%s6] sm:$0x1]
        %v4320 = vlaneseq
        %v4321 = vshrl.u32 %v4320, 7
        %v4322 = vsub.s32 0, %v4321
        %v4323 = vrot.slane %v4318, %v4322
        %v4325 = vadd.f32 %v4310, %v4323
        %v4326 = vadd.f32 %v4311, %v4323
        %v4327 = vadd.f32 %v4312, %v4323
        %v4328 = vadd.f32 %v4313, %v4323
        %v4329 = vadd.f32 %v4314, %v4323
        %v4330 = vadd.f32 %v4315, %v4323
        %v4331 = vadd.f32 %v4316, %v4323
        %v4332 = vadd.f32 %v4317, %v4323
        %v4333 = vld [vmem:[%s288] sm:$0xf]
        %v4334 = vld [vmem:[%s288 + $0x4] sm:$0xf]
        %v4335 = vld [vmem:[%s288 + $0x8] sm:$0xf]
        %v4336 = vld [vmem:[%s288 + $0xc] sm:$0xf]
        %v4337 = vld [vmem:[%s288 + $0x10] sm:$0xf]
        %v4338 = vld [vmem:[%s288 + $0x14] sm:$0xf]
        %v4339 = vld [vmem:[%s288 + $0x18] sm:$0xf]
        %v4340 = vld [vmem:[%s288 + $0x1c] sm:$0xf]
        %v4341 = vunpack.c.l.bf16 %v4333
        %v4342 = vunpack.c.l.bf16 %v4334
        %v4343 = vunpack.c.l.bf16 %v4335
        %v4344 = vunpack.c.l.bf16 %v4336
        %v4345 = vunpack.c.l.bf16 %v4337
        %v4346 = vunpack.c.l.bf16 %v4338
        %v4347 = vunpack.c.l.bf16 %v4339
        %v4348 = vunpack.c.l.bf16 %v4340
        %v4349 = vadd.f32 %v4325, %v4341
        %v4350 = vadd.f32 %v4326, %v4342
        %v4351 = vadd.f32 %v4327, %v4343
        %v4352 = vadd.f32 %v4328, %v4344
        %v4353 = vadd.f32 %v4329, %v4345
        %v4354 = vadd.f32 %v4330, %v4346
        %v4355 = vadd.f32 %v4331, %v4347
        %v4356 = vadd.f32 %v4332, %v4348
        %4357 = vst [vmem:[%s326] sm:$0xff] %v4349
        %4358 = vst [vmem:[%s326 + $0x8] sm:$0xff] %v4350
        %4359 = vst [vmem:[%s326 + $0x10] sm:$0xff] %v4351
        %4360 = vst [vmem:[%s326 + $0x18] sm:$0xff] %v4352
        %4361 = vst [vmem:[%s326 + $0x20] sm:$0xff] %v4353
        %4362 = vst [vmem:[%s326 + $0x28] sm:$0xff] %v4354
        %4363 = vst [vmem:[%s326 + $0x30] sm:$0xff] %v4355
        %4364 = vst [vmem:[%s326 + $0x38] sm:$0xff] %v4356
        %s4365 = sand.u32 %s185, 1
        %s4366 = scalar_lea.sflag [#allocation6], %s4365
        %s4367 = sand.u32 %s185, 1
        %s4368 = smul.addr %s4367, 64
        %s4369 = scalar_lea.vmem [#allocation10], %s4368
        // Predicated region
        $region61: #{tpu_custom_call.1} parent=47 // pred_check
          %p4370 = pneg %p195
        $region62: #{tpu_custom_call.1} parent=47 // pred_check_branch
          %4372 = sbr.rel (%p4370) target = $region64
        $region63: #{tpu_custom_call.1} parent=47 // pred_region
          %s4373 = smul.u32 4, %s25
          %s4375 = ssub.s32 1024, 1024
          %4376 = vsyncadd %s4366, %s4375
          %s4377 = smul.addr %s4373, 2
          %s4378 = smul.addr %s4377, 128
          %s4379 = scalar_lea.hbm %s7, %s4378
          %s4380 = sshll.u32 %s4369, 4
          %s4381 = int_to_ptr.vmem [resolvable:$true] %s4380
          %4386 = dma.vmem_to_hbm [thread:$0]  %s4381, 1024, %s4379, %s4366, 128, 128, 8
        $region64: #{tpu_custom_call.1} parent=47 // pred_fallthru
          _
      $region48: #{tpu_custom_call.1} parent=5 // pred_fallthru
        _
      %p4387 = scmp.le.s32.totalorder 2, %s20
      // Predicated region
      $region65: #{tpu_custom_call.1} parent=5 // pred_check
        %p4388 = pneg %p4387
      $region66: #{tpu_custom_call.1} parent=5 // pred_check_branch
        %4390 = sbr.rel (%p4388) target = $region68
      $region67: #{tpu_custom_call.1} parent=5 // pred_region
        %s4391 = ssub.s32 %s20, 2
        // Predicated region
        $region69: #{tpu_custom_call.1} parent=67 // pred_check
          %p4392 = pneg %p201
        $region70: #{tpu_custom_call.1} parent=67 // pred_check_branch
          %4394 = sbr.rel (%p4392) target = $region72
        $region71: #{tpu_custom_call.1} parent=67 // pred_region
          %s4395 = sand.u32 %s186, 1
          %s4396 = scalar_lea.sflag [#allocation6], %s4395
          %s4397 = sand.u32 %s186, 1
          %s4398 = smul.addr %s4397, 64
          %s4399 = scalar_lea.vmem [#allocation10], %s4398
          %4400 = dma.done %s4396, 1024
        $region72: #{tpu_custom_call.1} parent=67 // pred_fallthru
          _
      $region68: #{tpu_custom_call.1} parent=5 // pred_fallthru
        _
    $region6: #{tpu_custom_call.1} parent=1 // loop_footer
      %s24 = sadd.s32 1, %s20
    $region7: #{tpu_custom_call.1} parent=1 // loop_footer_branch
      %19 = sbr.rel target = $region3
    $region8: #{tpu_custom_call.1} parent=1 // loop_exit
      _
    %4401 = vsyncpa [#allocation5], 1
    %s4402 = scalar_lea.sflag [#allocation5], 1
    %4403 = vsyncpa %s4402, 1
    %4404 = vsyncpa [#allocation8], 1
    %4405 = vsyncpa [#allocation6], 1
    %s4406 = scalar_lea.sflag [#allocation6], 1
    %4407 = vsyncpa %s4406, 1

</llo_original>
